<compile_context>
chip_gen: v7x
topology: tpu7x:2x2x1
jax: 0.10.0
libtpu: 0.0.40
codegen_flags: <defaults>
</compile_context>

<pallas_src>
import functools

import jax
import jax.numpy as jnp
import numpy as np
from jax import lax
from jax.experimental import pallas as pl
from jax.experimental.pallas import tpu as pltpu

# ---------------- configuration (small synthetic sizes) ----------------
VOCAB = 100          # config.vocab_size
HIDDEN = 32          # config.hidden_size
N_HEADS = 4          # encoder heads
N_LAYERS = 2         # encoder layers
INTERMEDIATE = 64    # encoder FFN dim
MAX_POS = 16
N_GATE = 3           # config.n_gate
PAD_IDX = 0
BATCH = 2
SEQ = 8
MAX_LEN = 4
SLOT_META = [[5, 6], [7, 8, 9], [10]]   # slot_meta token ids (J = 3 slots)

# TPU-friendly padded sizes (lane dim -> multiple of 128, sublane dim -> 8)
VOCAB_PAD = 128      # V 100 -> 128  (lane-dense [*, V] vregs / unmasked stores)
SEQ_PAD = 128        # T 8 -> 128    (aligned split of the fused attention dot)
J_PAD = 8            # J 3 -> 8 rows per batch block (full 8 sublanes)
GATE_PAD = 128       # n_gate 3 -> 128 so the gate store is lane dense
GRU_PAD = 128        # 3*H = 96 -> 128 lanes for the fused (r|z|n) gate GEMMs


# ======================================================================
# SlotGenerator decode loop -- the hot path, all inside ONE Pallas kernel.
# One grid step = one dialogue (batch row b); its J slots are the row axis.
# ======================================================================
def _slot_decoder_kernel(
        enc_ref, ids_ref, pad_ref, h0_ref,                # per-batch
        w0_ref, emb_ref, wih_ref, whh_ref, bias_ref, wgate_ref,   # shared
        point_ref, gate_ref,
        *, max_len, hidden, vocab, vocab_pad, j_pad):
    H, V, Vp, Jp = hidden, vocab, vocab_pad, j_pad

    enc = enc_ref[...]        # [Tp, H]   bf16 (zero rows beyond the real seq len)
    ids = ids_ref[...]        # [Tp, 1]   int32 (PAD_IDX beyond the real seq len)
    pad = pad_ref[...]        # [1, Tp]   f32, 1.0 on padding / beyond-T positions
    emb = emb_ref[...]        # [Vp, H]   bf16 tied embedding (zero rows >= V)
    wih = wih_ref[...]        # [H, 128]  bf16, lanes = [Wir.T | Wiz.T | Win.T | 0]
    whh = whh_ref[...]        # [H, 128]  bf16, lanes = [Whr.T | Whz.T | Whn.T | 0]
    wgate = wgate_ref[...]    # [H, 128]  bf16 gate head (n_gate cols, rest 0)
    bias = bias_ref[...]      # [8, 128]  f32 packed biases / p_gen weights
    Tp = enc.shape[0]
    G = wih.shape[-1]
    GP = wgate.shape[-1]

    # ---- loop-invariant precompute: hoisted ONCE per grid step ----
    iota_v = lax.broadcasted_iota(jnp.int32, (1, Vp), 1)
    iota_vf_b = jnp.broadcast_to(iota_v.astype(jnp.float32), (Jp, Vp))
    vbias_b = jnp.broadcast_to(
        jnp.where(iota_v < V, 0.0, -1e9).astype(jnp.float32), (Jp, Vp))
    pad_mask = jnp.broadcast_to(pad > 0.5, (Jp, Tp))                 # [Jp, Tp]

    onehot_ids = (ids == iota_v).astype(jnp.bfloat16)                # [Tp, Vp] exact

    # fused attention RHS (contract over hidden): rows = [vocab | history]
    qk_rhs = jnp.concatenate([emb, enc], axis=0)                     # [Vp+Tp, H] bf16
    # fused pointer-scatter + context RHS: cols = [vocab | hidden]
    ctx_rhs = jnp.concatenate([onehot_ids, enc], axis=-1)            # [Tp, Vp+H] bf16

    bih_b = jnp.broadcast_to(bias[0:1, :G], (Jp, G))                 # GRU input bias
    bhh_b = jnp.broadcast_to(bias[1:2, :G], (Jp, G))                 # GRU hidden bias
    gw_b = jnp.broadcast_to(bias[2:3, :H], (Jp, H))                  # w_gen[., :H]
    gh_b = jnp.broadcast_to(bias[3:4, :H], (Jp, H))                  # w_gen[., H:2H]
    gc_b = jnp.broadcast_to(bias[4:5, :H], (Jp, H))                  # w_gen[., 2H:3H]
    bgate_b = jnp.broadcast_to(bias[5:6, :GP], (Jp, GP))             # gate bias
    bgen_b = jnp.broadcast_to(bias[6:7, 0:1], (Jp, 1))               # w_gen bias

    def softmax(x):
        m = jnp.max(x, axis=-1, keepdims=True)
        e = jnp.exp(x - m)
        return e * pl.reciprocal(jnp.sum(e, axis=-1, keepdims=True), approx=True)

    def decode_step(k, w, h):
        # nn.Dropout -> identity (eval).  GRU cell with fused (r|z|n) GEMMs.
        wb = w.astype(jnp.bfloat16)
        hb = h.astype(jnp.bfloat16)
        gi = jnp.dot(wb, wih, preferred_element_type=jnp.float32) + bih_b   # [Jp,128]
        gh_ = jnp.dot(hb, whh, preferred_element_type=jnp.float32) + bhh_b  # [Jp,128]
        r = jax.nn.sigmoid(gi[:, 0:H] + gh_[:, 0:H])
        z = jax.nn.sigmoid(gi[:, H:2 * H] + gh_[:, H:2 * H])
        n = jnp.tanh(gi[:, 2 * H:3 * H] + r * gh_[:, 2 * H:3 * H])
        h_new = (1.0 - z) * n + z * h                                       # [Jp, H]
        hb2 = h_new.astype(jnp.bfloat16)

        # fused attention: one MXU push for vocab scores AND history scores
        qk = lax.dot_general(hb2, qk_rhs, (((1,), (1,)), ((), ())),
                             preferred_element_type=jnp.float32)            # [Jp,Vp+Tp]
        attn_vocab = softmax(qk[:, :Vp] + vbias_b)                          # [Jp, Vp]
        attn_hist = softmax(jnp.where(pad_mask, -10000.0, qk[:, Vp:]))      # [Jp, Tp]

        # fused pointer scatter-add + context vector: one bf16 MXU push
        pc = jnp.dot(attn_hist.astype(jnp.bfloat16), ctx_rhs,
                     preferred_element_type=jnp.float32)                    # [Jp,Vp+H]
        p_ctx = pc[:, :Vp]
        context = pc[:, Vp:Vp + H]

        # p_gen = sigmoid(w_gen([w, hidden, context])): VPU reduce
        p_gen = jax.nn.sigmoid(
            jnp.sum(w * gw_b + h_new * gh_b + context * gc_b,
                    axis=-1, keepdims=True) + bgen_b)                       # [Jp, 1]

        p_final = p_gen * attn_vocab + (1.0 - p_gen) * p_ctx                # [Jp, Vp]
        point_ref[k] = p_final                                              # lane-dense

        # greedy next token (first-occurrence argmax, f32) + tied embedding
        maxv = jnp.max(p_final, axis=-1, keepdims=True)
        cand = jnp.where(p_final >= maxv, iota_vf_b, float(Vp))
        w_idx = jnp.min(cand, axis=-1, keepdims=True)                       # [Jp, 1]
        onehot_w = (w_idx == iota_vf_b).astype(jnp.bfloat16)                # [Jp, Vp]
        w_next = jnp.dot(onehot_w, emb, preferred_element_type=jnp.float32) # [Jp, H]
        return w_next, h_new, context

    w0 = w0_ref[...]                                  # [Jp, H] slot-embedding sums
    h0 = jnp.broadcast_to(h0_ref[...], (Jp, H))       # [Jp, H] pooled encoder state

    # step 0 peeled: the gate head is computed exactly once (no pl.when in loop)
    w1, h1, ctx0 = decode_step(0, w0, h0)
    gate_ref[...] = (jnp.dot(ctx0.astype(jnp.bfloat16), wgate,
                             preferred_element_type=jnp.float32) + bgate_b)

    def body(k, carry):
        w, h = carry
        w, h, _ = decode_step(k, w, h)
        return (w, h)

    _ = lax.fori_loop(1, max_len, body, (w1, h1), unroll=True)


def slot_generator_decode(params, enc_out, pooled, input_ids, attention_mask,
                          max_len):
    B, T = input_ids.shape
    H, V, Vp, Jp, Tp = HIDDEN, VOCAB, VOCAB_PAD, J_PAD, SEQ_PAD
    slot_idx = params['slot_embed_idx']              # [J, L] int32
    J = slot_idx.shape[0]
    emb = params['word_emb']                         # tied embedding [V, H] f32

    # slot_e = sum over tokens of embed(slot); pad row 0 of emb is zero.
    slot_e = jnp.sum(emb[slot_idx], axis=1)                                # [J, H]
    w0 = jnp.zeros((Jp, H), jnp.float32).at[:J].set(slot_e)                # row pad

    # single copy of the tied embedding (padded to 128 vocab rows, zeros >= V)
    emb_bf = jnp.zeros((Vp, H), jnp.float32).at[:V].set(emb).astype(jnp.bfloat16)

    # Per-dialogue inputs (padded T -> Tp; padded positions are masked).
    # NO jnp.repeat over J: the kernel decodes the J slots of one dialogue as
    # the row (sublane) axis of a single grid step; enc is indexed by b through
    # the BlockSpec index_map.
    enc_pad = (jnp.zeros((B, Tp, H), jnp.float32).at[:, :T, :].set(enc_out)
               .astype(jnp.bfloat16))                                       # [B,Tp,H]
    ids_pad = (jnp.full((B, Tp, 1), PAD_IDX, jnp.int32)
               .at[:, :T, 0].set(input_ids.astype(jnp.int32)))              # [B,Tp,1]
    padm = (jnp.ones((B, 1, Tp), jnp.float32)
            .at[:, 0, :T].set((attention_mask != 1).astype(jnp.float32)))   # [B,1,Tp]
    h03 = pooled.astype(jnp.float32)[:, None, :]                            # [B,1,H]

    dec = params['decoder']
    Wih, Whh = dec['gru_w_ih'], dec['gru_w_hh']      # [3H, H], gate order r, z, n

    # fused GRU gate weights: [H, 3H] padded 96 -> 128 lanes, bf16
    wih_f = (jnp.zeros((H, GRU_PAD), jnp.float32).at[:, :3 * H].set(Wih.T)
             .astype(jnp.bfloat16))
    whh_f = (jnp.zeros((H, GRU_PAD), jnp.float32).at[:, :3 * H].set(Whh.T)
             .astype(jnp.bfloat16))

    # packed biases / small weight rows: one [8, 128] f32 operand
    Wg = dec['w_gen_w']                              # [1, 3H], cat order [w, h, ctx]
    bias_mat = jnp.zeros((8, 128), jnp.float32)
    bias_mat = bias_mat.at[0, :3 * H].set(dec['gru_b_ih'])
    bias_mat = bias_mat.at[1, :3 * H].set(dec['gru_b_hh'])
    bias_mat = bias_mat.at[2, :H].set(Wg[0, 0:H])
    bias_mat = bias_mat.at[3, :H].set(Wg[0, H:2 * H])
    bias_mat = bias_mat.at[4, :H].set(Wg[0, 2 * H:3 * H])
    bias_mat = bias_mat.at[5, :N_GATE].set(dec['w_gate_b'])
    bias_mat = bias_mat.at[6, 0].set(dec['w_gen_b'][0])

    wgate = (jnp.zeros((H, GATE_PAD), jnp.float32).at[:, :N_GATE]
             .set(dec['w_gate_w'].T).astype(jnp.bfloat16))

    kernel = functools.partial(_slot_decoder_kernel, max_len=max_len,
                               hidden=H, vocab=V, vocab_pad=Vp, j_pad=Jp)

    def batch_spec(shape):       # leading batch dim indexed by b and squeezed away
        nd = len(shape)
        return pl.BlockSpec((None,) + tuple(shape[1:]),
                            lambda b, _nd=nd: (b,) + (0,) * (_nd - 1))

    def shared_spec(shape):      # full-array block, same for every grid step
        nd = len(shape)
        return pl.BlockSpec(tuple(shape), lambda b, _nd=nd: (0,) * _nd)

    batched = (enc_pad, ids_pad, padm, h03)
    shared = (w0, emb_bf, wih_f, whh_f, bias_mat, wgate)

    in_specs = ([batch_spec(x.shape) for x in batched]
                + [shared_spec(x.shape) for x in shared])

    point, gate = pl.pallas_call(
        kernel,
        grid=(B,),
        out_shape=(jax.ShapeDtypeStruct((B, max_len, Jp, Vp), jnp.float32),
                   jax.ShapeDtypeStruct((B, Jp, GATE_PAD), jnp.float32)),
        in_specs=in_specs,
        out_specs=(batch_spec((B, max_len, Jp, Vp)),
                   batch_spec((B, Jp, GATE_PAD))),
        compiler_params=pltpu.CompilerParams(
            dimension_semantics=("parallel",)),      # dialogues shard across TCs
    )(*batched, *shared)

    # [B, max_len, J_pad, V_pad] -> [B, J, max_len, V]
    # TODO(synk): at real sizes fold this reorder into per-(k, vocab-chunk) HBM
    # writes instead of a full transpose of the largest output tensor.
    all_point = jnp.transpose(point[:, :, :J, :V], (0, 2, 1, 3))
    all_gate = gate[:, :J, :N_GATE]
    return all_point, all_gate


# ======================================================================
# Minimal deterministic BERT-style encoder (glue, plain JAX — the tiny
# GEMMs are left to XLA; per-projection Pallas launches were pure overhead).
# ======================================================================
def layer_norm(x, g, b, eps=1e-12):
    m = jnp.mean(x, axis=-1, keepdims=True)
    v = jnp.mean((x - m) ** 2, axis=-1, keepdims=True)
    return (x - m) / jnp.sqrt(v + eps) * g + b


def bert_layer(p, x):
    B, T, H = x.shape
    dH = H // N_HEADS
    x2 = x.reshape(B * T, H)
    # fused QKV projection: one [H, 3H] GEMM instead of three
    wqkv = jnp.concatenate([p['wq'], p['wk'], p['wv']], axis=1)
    bqkv = jnp.concatenate([p['bq'], p['bk'], p['bv']])
    qkv = jnp.dot(x2, wqkv) + bqkv[None, :]
    q = qkv[:, 0:H].reshape(B, T, N_HEADS, dH)
    k = qkv[:, H:2 * H].reshape(B, T, N_HEADS, dH)
    v = qkv[:, 2 * H:3 * H].reshape(B, T, N_HEADS, dH)
    scores = jnp.einsum('bthd,bshd->bhts', q, k) / jnp.sqrt(jnp.float32(dH))
    attn = jax.nn.softmax(scores, axis=-1)
    ctx = jnp.einsum('bhts,bshd->bthd', attn, v).reshape(B * T, H)
    attn_out = jnp.dot(ctx, p['wo']) + p['bo'][None, :]
    x1 = layer_norm(x2 + attn_out, p['ln1_g'], p['ln1_b'])
    ff = jnp.dot(jax.nn.gelu(jnp.dot(x1, p['w1']) + p['b1'][None, :]),
                 p['w2']) + p['b2'][None, :]
    x_out = layer_norm(x1 + ff, p['ln2_g'], p['ln2_b'])
    return x_out.reshape(B, T, H)


def bert_encoder(params, input_ids, token_type_ids):
    B, T = input_ids.shape
    x = (params['word_emb'][input_ids]
         + params['pos_emb'][:T][None, :, :]
         + params['tok_emb'][token_type_ids])
    x = layer_norm(x, params['emb_ln'][0], params['emb_ln'][1])
    for lp in params['layers']:
        x = bert_layer(lp, x)
    pooled = jnp.tanh(jnp.dot(x[:, 0, :], params['pool_w'])
                      + params['pool_b'][None, :])
    return x, pooled


# ======================================================================
# TRADE forward
# ======================================================================
@functools.partial(jax.jit, static_argnames=('max_len',))
def trade_forward(params, input_ids, token_type_ids, attention_mask, max_len):
    encoder_outputs, pooled_output = bert_encoder(params, input_ids,
                                                  token_type_ids)
    return slot_generator_decode(params, encoder_outputs, pooled_output,
                                 input_ids, attention_mask, max_len)


# ======================================================================
# Deterministic parameter init
# ======================================================================
def init_params(key):
    def nrm(k, shape, std=0.02):
        return (std * jax.random.normal(k, shape)).astype(jnp.float32)

    keys = iter(jax.random.split(key, 64))
    p = {}
    we = nrm(next(keys), (VOCAB, HIDDEN))
    we = we.at[PAD_IDX, :].set(0.0)   # padding_idx=0 -> zero row (weight is tied)
    p['word_emb'] = we
    p['pos_emb'] = nrm(next(keys), (MAX_POS, HIDDEN))
    p['tok_emb'] = nrm(next(keys), (2, HIDDEN))
    p['emb_ln'] = (jnp.ones((HIDDEN,), jnp.float32),
                   jnp.zeros((HIDDEN,), jnp.float32))

    layers = []
    for _ in range(N_LAYERS):
        lp = {
            'wq': nrm(next(keys), (HIDDEN, HIDDEN)), 'bq': jnp.zeros((HIDDEN,), jnp.float32),
            'wk': nrm(next(keys), (HIDDEN, HIDDEN)), 'bk': jnp.zeros((HIDDEN,), jnp.float32),
            'wv': nrm(next(keys), (HIDDEN, HIDDEN)), 'bv': jnp.zeros((HIDDEN,), jnp.float32),
            'wo': nrm(next(keys), (HIDDEN, HIDDEN)), 'bo': jnp.zeros((HIDDEN,), jnp.float32),
            'ln1_g': jnp.ones((HIDDEN,), jnp.float32), 'ln1_b': jnp.zeros((HIDDEN,), jnp.float32),
            'w1': nrm(next(keys), (HIDDEN, INTERMEDIATE)), 'b1': jnp.zeros((INTERMEDIATE,), jnp.float32),
            'w2': nrm(next(keys), (INTERMEDIATE, HIDDEN)), 'b2': jnp.zeros((HIDDEN,), jnp.float32),
            'ln2_g': jnp.ones((HIDDEN,), jnp.float32), 'ln2_b': jnp.zeros((HIDDEN,), jnp.float32),
        }
        layers.append(lp)
    p['layers'] = layers
    p['pool_w'] = nrm(next(keys), (HIDDEN, HIDDEN))
    p['pool_b'] = jnp.zeros((HIDDEN,), jnp.float32)

    # SlotGenerator params (PyTorch weight layouts; embed tied to word_emb)
    p['decoder'] = {
        'gru_w_ih': nrm(next(keys), (3 * HIDDEN, HIDDEN)),   # gate order r, z, n
        'gru_w_hh': nrm(next(keys), (3 * HIDDEN, HIDDEN)),
        'gru_b_ih': nrm(next(keys), (3 * HIDDEN,)),
        'gru_b_hh': nrm(next(keys), (3 * HIDDEN,)),
        'w_gen_w': nrm(next(keys), (1, 3 * HIDDEN)),         # nn.Linear(3H, 1)
        'w_gen_b': jnp.zeros((1,), jnp.float32),
        'w_gate_w': nrm(next(keys), (N_GATE, HIDDEN)),       # nn.Linear(H, n_gate)
        'w_gate_b': jnp.zeros((N_GATE,), jnp.float32),
    }

    # set_slot_idx: pad every slot-token list with pad_idx to the max length
    max_l = max(len(s) for s in SLOT_META)
    p['slot_embed_idx'] = jnp.array(
        [s + [PAD_IDX] * (max_l - len(s)) for s in SLOT_META], jnp.int32)
    return p


# ======================================================================
if __name__ == "__main__":
    key = jax.random.PRNGKey(0)
    pkey, ikey = jax.random.split(key)
    params = init_params(pkey)

    # deterministic example inputs (batch=2, seq=8), with tail padding on row 1
    raw_ids = jax.random.randint(ikey, (BATCH, SEQ), 1, VOCAB)
    lens = jnp.array([SEQ, SEQ - 3])
    pos = jnp.arange(SEQ)[None, :]
    attention_mask = (pos < lens[:, None]).astype(jnp.int32)
    input_ids = jnp.where(attention_mask == 1, raw_ids, PAD_IDX).astype(jnp.int32)
    token_type_ids = jnp.zeros((BATCH, SEQ), jnp.int32)

    all_point, all_gate = trade_forward(params, input_ids, token_type_ids,
                                        attention_mask, max_len=MAX_LEN)
    jax.block_until_ready((all_point, all_gate))

    J = len(SLOT_META)
    assert all_point.shape == (BATCH, J, MAX_LEN, VOCAB)
    assert all_gate.shape == (BATCH, J, N_GATE)
    # p_final is a convex combination of two distributions -> each row sums to 1
    # (5e-3 tolerance: approximate EUP reciprocal in both softmaxes plus the
    #  bf16 rounding of attn_hist before the fused pointer-scatter matmul)
    row_sums = np.asarray(jnp.sum(all_point, axis=-1))
    assert np.all(np.abs(row_sums - 1.0) < 5e-3)
    assert np.all(np.isfinite(np.asarray(all_point)))
    assert np.all(np.isfinite(np.asarray(all_gate)))
    print("KERNEL_OK")
</pallas_src>

<mosaic_0001>
module attributes {stable_mosaic.version = 11 : i64} {
  func.func @_slot_decoder_kernel(%arg0: i32, %arg1: memref<1x128x32xbf16, #tpu.memory_space<vmem>>, %arg2: memref<1x128x1xi32, #tpu.memory_space<vmem>>, %arg3: memref<1x1x128xf32, #tpu.memory_space<vmem>>, %arg4: memref<1x1x32xf32, #tpu.memory_space<vmem>>, %arg5: memref<8x32xf32, #tpu.memory_space<vmem>>, %arg6: memref<128x32xbf16, #tpu.memory_space<vmem>>, %arg7: memref<32x128xbf16, #tpu.memory_space<vmem>>, %arg8: memref<32x128xbf16, #tpu.memory_space<vmem>>, %arg9: memref<8x128xf32, #tpu.memory_space<vmem>>, %arg10: memref<32x128xbf16, #tpu.memory_space<vmem>>, %arg11: memref<1x4x8x128xf32, #tpu.memory_space<vmem>>, %arg12: memref<1x8x128xf32, #tpu.memory_space<vmem>>) attributes {dimension_semantics = [#tpu.dimension_semantics<parallel>], iteration_bounds = array<i64: 2>, scalar_prefetch = 0 : i64, scratch_operands = 0 : i64, tpu.core_type = #tpu.core_type<tc>, window_params = [{transform_indices = @transform_0, window_bounds = array<i64: 1, 128, 32>}, {transform_indices = @transform_1, window_bounds = array<i64: 1, 128, 1>}, {transform_indices = @transform_2, window_bounds = array<i64: 1, 1, 128>}, {transform_indices = @transform_3, window_bounds = array<i64: 1, 1, 32>}, {pipeline_mode = #tpu.pipeline_mode<synchronous>, transform_indices = @transform_4, window_bounds = array<i64: 8, 32>}, {pipeline_mode = #tpu.pipeline_mode<synchronous>, transform_indices = @transform_5, window_bounds = array<i64: 128, 32>}, {pipeline_mode = #tpu.pipeline_mode<synchronous>, transform_indices = @transform_6, window_bounds = array<i64: 32, 128>}, {pipeline_mode = #tpu.pipeline_mode<synchronous>, transform_indices = @transform_7, window_bounds = array<i64: 32, 128>}, {pipeline_mode = #tpu.pipeline_mode<synchronous>, transform_indices = @transform_8, window_bounds = array<i64: 8, 128>}, {pipeline_mode = #tpu.pipeline_mode<synchronous>, transform_indices = @transform_9, window_bounds = array<i64: 32, 128>}, {transform_indices = @transform_10, window_bounds = array<i64: 1, 4, 8, 128>}, {transform_indices = @transform_11, window_bounds = array<i64: 1, 8, 128>}]} {
    %c0 = arith.constant 0 : index
    %c0_0 = arith.constant 0 : index
    %c0_1 = arith.constant 0 : index
    %0 = vector.load %arg1[%c0, %c0_0, %c0_1] : memref<1x128x32xbf16, #tpu.memory_space<vmem>>, vector<1x128x32xbf16>
    %1 = vector.shape_cast %0 : vector<1x128x32xbf16> to vector<128x32xbf16>
    %c0_2 = arith.constant 0 : index
    %c0_3 = arith.constant 0 : index
    %c0_4 = arith.constant 0 : index
    %2 = vector.load %arg2[%c0_2, %c0_3, %c0_4] : memref<1x128x1xi32, #tpu.memory_space<vmem>>, vector<1x128x1xi32>
    %3 = vector.shape_cast %2 : vector<1x128x1xi32> to vector<128x1xi32>
    %c0_5 = arith.constant 0 : index
    %c0_6 = arith.constant 0 : index
    %c0_7 = arith.constant 0 : index
    %4 = vector.load %arg3[%c0_5, %c0_6, %c0_7] : memref<1x1x128xf32, #tpu.memory_space<vmem>>, vector<1x1x128xf32>
    %5 = vector.shape_cast %4 : vector<1x1x128xf32> to vector<1x128xf32>
    %c0_8 = arith.constant 0 : index
    %c0_9 = arith.constant 0 : index
    %6 = vector.load %arg6[%c0_8, %c0_9] : memref<128x32xbf16, #tpu.memory_space<vmem>>, vector<128x32xbf16>
    %c0_10 = arith.constant 0 : index
    %c0_11 = arith.constant 0 : index
    %7 = vector.load %arg7[%c0_10, %c0_11] : memref<32x128xbf16, #tpu.memory_space<vmem>>, vector<32x128xbf16>
    %c0_12 = arith.constant 0 : index
    %c0_13 = arith.constant 0 : index
    %8 = vector.load %arg8[%c0_12, %c0_13] : memref<32x128xbf16, #tpu.memory_space<vmem>>, vector<32x128xbf16>
    %c0_14 = arith.constant 0 : index
    %c0_15 = arith.constant 0 : index
    %9 = vector.load %arg10[%c0_14, %c0_15] : memref<32x128xbf16, #tpu.memory_space<vmem>>, vector<32x128xbf16>
    %c0_16 = arith.constant 0 : index
    %c0_17 = arith.constant 0 : index
    %10 = vector.load %arg9[%c0_16, %c0_17] : memref<8x128xf32, #tpu.memory_space<vmem>>, vector<8x128xf32>
    %11 = tpu.iota {dimensions = array<i32: 1>} : vector<1x128xi32>
    %12 = arith.sitofp %11 : vector<1x128xi32> to vector<1x128xf32>
    %13 = vector.shape_cast %12 : vector<1x128xf32> to vector<1x128xf32>
    %14 = vector.broadcast %13 : vector<1x128xf32> to vector<8x128xf32>
    %c100_i32 = arith.constant 100 : i32
    %15 = vector.broadcast %c100_i32 : i32 to vector<1x128xi32>
    %16 = arith.cmpi slt, %11, %15 : vector<1x128xi32>
    %cst = arith.constant 0.000000e+00 : f32
    %cst_18 = arith.constant -1.000000e+09 : f32
    %17 = vector.broadcast %cst : f32 to vector<1x128xf32>
    %18 = vector.broadcast %cst_18 : f32 to vector<1x128xf32>
    %19 = arith.select %16, %17, %18 : vector<1x128xi1>, vector<1x128xf32>
    %20 = vector.shape_cast %19 : vector<1x128xf32> to vector<1x128xf32>
    %21 = vector.broadcast %20 : vector<1x128xf32> to vector<8x128xf32>
    %cst_19 = arith.constant 5.000000e-01 : f32
    %22 = vector.broadcast %cst_19 : f32 to vector<1x128xf32>
    %23 = arith.cmpf ogt, %5, %22 : vector<1x128xf32>
    %24 = vector.shape_cast %23 : vector<1x128xi1> to vector<1x128xi1>
    %25 = vector.broadcast %24 : vector<1x128xi1> to vector<8x128xi1>
    %26 = vector.broadcast %3 : vector<128x1xi32> to vector<128x128xi32>
    %27 = vector.broadcast %11 : vector<1x128xi32> to vector<128x128xi32>
    %28 = arith.cmpi eq, %26, %27 : vector<128x128xi32>
    %29 = arith.extui %28 : vector<128x128xi1> to vector<128x128xi32>
    %30 = arith.sitofp %29 : vector<128x128xi32> to vector<128x128xf32>
    %31 = arith.truncf %30 : vector<128x128xf32> to vector<128x128xbf16>
    %32 = tpu.concatenate %6, %1 in 0 : vector<128x32xbf16>, vector<128x32xbf16> -> vector<256x32xbf16>
    %33 = tpu.concatenate %31, %1 in 1 : vector<128x128xbf16>, vector<128x32xbf16> -> vector<128x160xbf16>
    %34 = vector.extract_strided_slice %10 {offsets = [0, 0], sizes = [1, 128], strides = [1, 1]} : vector<8x128xf32> to vector<1x128xf32>
    %35 = vector.shape_cast %34 : vector<1x128xf32> to vector<1x128xf32>
    %36 = vector.broadcast %35 : vector<1x128xf32> to vector<8x128xf32>
    %37 = vector.extract_strided_slice %10 {offsets = [1, 0], sizes = [1, 128], strides = [1, 1]} : vector<8x128xf32> to vector<1x128xf32>
    %38 = vector.shape_cast %37 : vector<1x128xf32> to vector<1x128xf32>
    %39 = vector.broadcast %38 : vector<1x128xf32> to vector<8x128xf32>
    %40 = vector.extract_strided_slice %10 {offsets = [2, 0], sizes = [1, 32], strides = [1, 1]} : vector<8x128xf32> to vector<1x32xf32>
    %41 = vector.shape_cast %40 : vector<1x32xf32> to vector<1x32xf32>
    %42 = vector.broadcast %41 : vector<1x32xf32> to vector<8x32xf32>
    %43 = vector.extract_strided_slice %10 {offsets = [3, 0], sizes = [1, 32], strides = [1, 1]} : vector<8x128xf32> to vector<1x32xf32>
    %44 = vector.shape_cast %43 : vector<1x32xf32> to vector<1x32xf32>
    %45 = vector.broadcast %44 : vector<1x32xf32> to vector<8x32xf32>
    %46 = vector.extract_strided_slice %10 {offsets = [4, 0], sizes = [1, 32], strides = [1, 1]} : vector<8x128xf32> to vector<1x32xf32>
    %47 = vector.shape_cast %46 : vector<1x32xf32> to vector<1x32xf32>
    %48 = vector.broadcast %47 : vector<1x32xf32> to vector<8x32xf32>
    %49 = vector.extract_strided_slice %10 {offsets = [5, 0], sizes = [1, 128], strides = [1, 1]} : vector<8x128xf32> to vector<1x128xf32>
    %50 = vector.shape_cast %49 : vector<1x128xf32> to vector<1x128xf32>
    %51 = vector.broadcast %50 : vector<1x128xf32> to vector<8x128xf32>
    %52 = vector.extract_strided_slice %10 {offsets = [6, 0], sizes = [1, 1], strides = [1, 1]} : vector<8x128xf32> to vector<1x1xf32>
    %53 = vector.shape_cast %52 : vector<1x1xf32> to vector<1x1xf32>
    %54 = vector.broadcast %53 : vector<1x1xf32> to vector<8x1xf32>
    %c0_20 = arith.constant 0 : index
    %c0_21 = arith.constant 0 : index
    %55 = vector.load %arg5[%c0_20, %c0_21] : memref<8x32xf32, #tpu.memory_space<vmem>>, vector<8x32xf32>
    %c0_22 = arith.constant 0 : index
    %c0_23 = arith.constant 0 : index
    %c0_24 = arith.constant 0 : index
    %56 = vector.load %arg4[%c0_22, %c0_23, %c0_24] : memref<1x1x32xf32, #tpu.memory_space<vmem>>, vector<1x1x32xf32>
    %57 = vector.shape_cast %56 : vector<1x1x32xf32> to vector<1x32xf32>
    %58 = vector.shape_cast %57 : vector<1x32xf32> to vector<1x32xf32>
    %59 = vector.broadcast %58 : vector<1x32xf32> to vector<8x32xf32>
    %60 = arith.truncf %55 : vector<8x32xf32> to vector<8x32xbf16>
    %61 = arith.truncf %59 : vector<8x32xf32> to vector<8x32xbf16>
    %cst_25 = arith.constant dense<0.000000e+00> : vector<8x128xf32>
    %62 = tpu.matmul %60, %7, %cst_25 {dimension_numbers = #tpu.dot_dimension_numbers<[1], [0], [0], [1], [0, 0, 1, 1], [], []>} : vector<8x32xbf16>, vector<32x128xbf16>, vector<8x128xf32> -> vector<8x128xf32>
    %63 = arith.addf %62, %36 : vector<8x128xf32>
    %cst_26 = arith.constant dense<0.000000e+00> : vector<8x128xf32>
    %64 = tpu.matmul %61, %8, %cst_26 {dimension_numbers = #tpu.dot_dimension_numbers<[1], [0], [0], [1], [0, 0, 1, 1], [], []>} : vector<8x32xbf16>, vector<32x128xbf16>, vector<8x128xf32> -> vector<8x128xf32>
    %65 = arith.addf %64, %39 : vector<8x128xf32>
    %66 = vector.extract_strided_slice %63 {offsets = [0, 0], sizes = [8, 32], strides = [1, 1]} : vector<8x128xf32> to vector<8x32xf32>
    %67 = vector.extract_strided_slice %65 {offsets = [0, 0], sizes = [8, 32], strides = [1, 1]} : vector<8x128xf32> to vector<8x32xf32>
    %68 = arith.addf %66, %67 : vector<8x32xf32>
    %69 = arith.negf %68 : vector<8x32xf32>
    %70 = math.exp %69 : vector<8x32xf32>
    %cst_27 = arith.constant 1.000000e+00 : f32
    %71 = vector.broadcast %cst_27 : f32 to vector<8x32xf32>
    %72 = arith.addf %71, %70 : vector<8x32xf32>
    %73 = arith.divf %71, %72 : vector<8x32xf32>
    %74 = vector.extract_strided_slice %63 {offsets = [0, 32], sizes = [8, 32], strides = [1, 1]} : vector<8x128xf32> to vector<8x32xf32>
    %75 = vector.extract_strided_slice %65 {offsets = [0, 32], sizes = [8, 32], strides = [1, 1]} : vector<8x128xf32> to vector<8x32xf32>
    %76 = arith.addf %74, %75 : vector<8x32xf32>
    %77 = arith.negf %76 : vector<8x32xf32>
    %78 = math.exp %77 : vector<8x32xf32>
    %cst_28 = arith.constant 1.000000e+00 : f32
    %79 = vector.broadcast %cst_28 : f32 to vector<8x32xf32>
    %80 = arith.addf %79, %78 : vector<8x32xf32>
    %81 = arith.divf %79, %80 : vector<8x32xf32>
    %82 = vector.extract_strided_slice %63 {offsets = [0, 64], sizes = [8, 32], strides = [1, 1]} : vector<8x128xf32> to vector<8x32xf32>
    %83 = vector.extract_strided_slice %65 {offsets = [0, 64], sizes = [8, 32], strides = [1, 1]} : vector<8x128xf32> to vector<8x32xf32>
    %84 = arith.mulf %73, %83 : vector<8x32xf32>
    %85 = arith.addf %82, %84 : vector<8x32xf32>
    %86 = math.tanh %85 : vector<8x32xf32>
    %cst_29 = arith.constant 1.000000e+00 : f32
    %87 = vector.broadcast %cst_29 : f32 to vector<8x32xf32>
    %88 = arith.subf %87, %81 : vector<8x32xf32>
    %89 = arith.mulf %88, %86 : vector<8x32xf32>
    %90 = arith.mulf %81, %59 : vector<8x32xf32>
    %91 = arith.addf %89, %90 : vector<8x32xf32>
    %92 = arith.truncf %91 : vector<8x32xf32> to vector<8x32xbf16>
    %cst_30 = arith.constant dense<0.000000e+00> : vector<8x256xf32>
    %93 = tpu.matmul %92, %32, %cst_30 {dimension_numbers = #tpu.dot_dimension_numbers<[1], [1], [0], [0], [0, 0, 1, 0], [], []>} : vector<8x32xbf16>, vector<256x32xbf16>, vector<8x256xf32> -> vector<8x256xf32>
    %94 = vector.extract_strided_slice %93 {offsets = [0, 0], sizes = [8, 128], strides = [1, 1]} : vector<8x256xf32> to vector<8x128xf32>
    %95 = arith.addf %94, %21 : vector<8x128xf32>
    %cst_31 = arith.constant dense<0xFF800000> : vector<8xf32>
    %96 = vector.multi_reduction <maximumf>, %95, %cst_31 [1] : vector<8x128xf32> to vector<8xf32>
    %97 = vector.shape_cast %96 : vector<8xf32> to vector<8x1xf32>
    %98 = vector.broadcast %97 : vector<8x1xf32> to vector<8x128xf32>
    %99 = arith.subf %95, %98 : vector<8x128xf32>
    %100 = math.exp %99 : vector<8x128xf32>
    %cst_32 = arith.constant dense<0.000000e+00> : vector<8xf32>
    %101 = vector.multi_reduction <add>, %100, %cst_32 [1] : vector<8x128xf32> to vector<8xf32>
    %102 = vector.shape_cast %101 : vector<8xf32> to vector<8x1xf32>
    %103 = tpu.reciprocal %102 {approx = true} : vector<8x1xf32> -> vector<8x1xf32>
    %104 = vector.broadcast %103 : vector<8x1xf32> to vector<8x128xf32>
    %105 = arith.mulf %100, %104 : vector<8x128xf32>
    %106 = vector.extract_strided_slice %93 {offsets = [0, 128], sizes = [8, 128], strides = [1, 1]} : vector<8x256xf32> to vector<8x128xf32>
    %cst_33 = arith.constant -1.000000e+04 : f32
    %107 = vector.broadcast %cst_33 : f32 to vector<8x128xf32>
    %108 = arith.select %25, %107, %106 : vector<8x128xi1>, vector<8x128xf32>
    %cst_34 = arith.constant dense<0xFF800000> : vector<8xf32>
    %109 = vector.multi_reduction <maximumf>, %108, %cst_34 [1] : vector<8x128xf32> to vector<8xf32>
    %110 = vector.shape_cast %109 : vector<8xf32> to vector<8x1xf32>
    %111 = vector.broadcast %110 : vector<8x1xf32> to vector<8x128xf32>
    %112 = arith.subf %108, %111 : vector<8x128xf32>
    %113 = math.exp %112 : vector<8x128xf32>
    %cst_35 = arith.constant dense<0.000000e+00> : vector<8xf32>
    %114 = vector.multi_reduction <add>, %113, %cst_35 [1] : vector<8x128xf32> to vector<8xf32>
    %115 = vector.shape_cast %114 : vector<8xf32> to vector<8x1xf32>
    %116 = tpu.reciprocal %115 {approx = true} : vector<8x1xf32> -> vector<8x1xf32>
    %117 = vector.broadcast %116 : vector<8x1xf32> to vector<8x128xf32>
    %118 = arith.mulf %113, %117 : vector<8x128xf32>
    %119 = arith.truncf %118 : vector<8x128xf32> to vector<8x128xbf16>
    %cst_36 = arith.constant dense<0.000000e+00> : vector<8x160xf32>
    %120 = tpu.matmul %119, %33, %cst_36 {dimension_numbers = #tpu.dot_dimension_numbers<[1], [0], [0], [1], [0, 0, 1, 1], [], []>} : vector<8x128xbf16>, vector<128x160xbf16>, vector<8x160xf32> -> vector<8x160xf32>
    %121 = vector.extract_strided_slice %120 {offsets = [0, 0], sizes = [8, 128], strides = [1, 1]} : vector<8x160xf32> to vector<8x128xf32>
    %122 = vector.extract_strided_slice %120 {offsets = [0, 128], sizes = [8, 32], strides = [1, 1]} : vector<8x160xf32> to vector<8x32xf32>
    %123 = arith.mulf %55, %42 : vector<8x32xf32>
    %124 = arith.mulf %91, %45 : vector<8x32xf32>
    %125 = arith.addf %123, %124 : vector<8x32xf32>
    %126 = arith.mulf %122, %48 : vector<8x32xf32>
    %127 = arith.addf %125, %126 : vector<8x32xf32>
    %cst_37 = arith.constant dense<0.000000e+00> : vector<8xf32>
    %128 = vector.multi_reduction <add>, %127, %cst_37 [1] : vector<8x32xf32> to vector<8xf32>
    %129 = vector.shape_cast %128 : vector<8xf32> to vector<8x1xf32>
    %130 = arith.addf %129, %54 : vector<8x1xf32>
    %131 = arith.negf %130 : vector<8x1xf32>
    %132 = math.exp %131 : vector<8x1xf32>
    %cst_38 = arith.constant 1.000000e+00 : f32
    %133 = vector.broadcast %cst_38 : f32 to vector<8x1xf32>
    %134 = arith.addf %133, %132 : vector<8x1xf32>
    %135 = arith.divf %133, %134 : vector<8x1xf32>
    %136 = vector.broadcast %135 : vector<8x1xf32> to vector<8x128xf32>
    %137 = arith.mulf %136, %105 : vector<8x128xf32>
    %cst_39 = arith.constant 1.000000e+00 : f32
    %138 = vector.broadcast %cst_39 : f32 to vector<8x1xf32>
    %139 = arith.subf %138, %135 : vector<8x1xf32>
    %140 = vector.broadcast %139 : vector<8x1xf32> to vector<8x128xf32>
    %141 = arith.mulf %140, %121 : vector<8x128xf32>
    %142 = arith.addf %137, %141 : vector<8x128xf32>
    %c0_40 = arith.constant 0 : index
    %c0_41 = arith.constant 0 : index
    %c0_42 = arith.constant 0 : index
    %c0_43 = arith.constant 0 : index
    %143 = vector.load %arg11[%c0_40, %c0_41, %c0_42, %c0_43] : memref<1x4x8x128xf32, #tpu.memory_space<vmem>>, vector<1x1x8x128xf32>
    %144 = vector.shape_cast %143 : vector<1x1x8x128xf32> to vector<8x128xf32>
    %145 = vector.shape_cast %142 : vector<8x128xf32> to vector<1x1x8x128xf32>
    tpu.vector_store %arg11[%c0_40, %c0_41, %c0_42, %c0_43], %145 {strides = array<i32>} : memref<1x4x8x128xf32, #tpu.memory_space<vmem>>, vector<1x1x8x128xf32>,
    %cst_44 = arith.constant dense<0xFF800000> : vector<8xf32>
    %146 = vector.multi_reduction <maximumf>, %142, %cst_44 [1] : vector<8x128xf32> to vector<8xf32>
    %147 = vector.shape_cast %146 : vector<8xf32> to vector<8x1xf32>
    %148 = vector.broadcast %147 : vector<8x1xf32> to vector<8x128xf32>
    %149 = arith.cmpf oge, %142, %148 : vector<8x128xf32>
    %cst_45 = arith.constant 1.280000e+02 : f32
    %150 = vector.broadcast %cst_45 : f32 to vector<8x128xf32>
    %151 = arith.select %149, %14, %150 : vector<8x128xi1>, vector<8x128xf32>
    %cst_46 = arith.constant dense<0x7F800000> : vector<8xf32>
    %152 = vector.multi_reduction <minimumf>, %151, %cst_46 [1] : vector<8x128xf32> to vector<8xf32>
    %153 = vector.shape_cast %152 : vector<8xf32> to vector<8x1xf32>
    %154 = vector.broadcast %153 : vector<8x1xf32> to vector<8x128xf32>
    %155 = arith.cmpf oeq, %154, %14 : vector<8x128xf32>
    %156 = arith.extui %155 : vector<8x128xi1> to vector<8x128xi32>
    %157 = arith.sitofp %156 : vector<8x128xi32> to vector<8x128xf32>
    %158 = arith.truncf %157 : vector<8x128xf32> to vector<8x128xbf16>
    %cst_47 = arith.constant dense<0.000000e+00> : vector<8x32xf32>
    %159 = tpu.matmul %158, %6, %cst_47 {dimension_numbers = #tpu.dot_dimension_numbers<[1], [0], [0], [1], [0, 0, 1, 1], [], []>} : vector<8x128xbf16>, vector<128x32xbf16>, vector<8x32xf32> -> vector<8x32xf32>
    %160 = arith.truncf %122 : vector<8x32xf32> to vector<8x32xbf16>
    %cst_48 = arith.constant dense<0.000000e+00> : vector<8x128xf32>
    %161 = tpu.matmul %160, %9, %cst_48 {dimension_numbers = #tpu.dot_dimension_numbers<[1], [0], [0], [1], [0, 0, 1, 1], [], []>} : vector<8x32xbf16>, vector<32x128xbf16>, vector<8x128xf32> -> vector<8x128xf32>
    %162 = arith.addf %161, %51 : vector<8x128xf32>
    %c0_49 = arith.constant 0 : index
    %c0_50 = arith.constant 0 : index
    %c0_51 = arith.constant 0 : index
    %163 = vector.load %arg12[%c0_49, %c0_50, %c0_51] : memref<1x8x128xf32, #tpu.memory_space<vmem>>, vector<1x8x128xf32>
    %164 = vector.shape_cast %163 : vector<1x8x128xf32> to vector<8x128xf32>
    %165 = vector.shape_cast %162 : vector<8x128xf32> to vector<1x8x128xf32>
    tpu.vector_store %arg12[%c0_49, %c0_50, %c0_51], %165 {strides = array<i32>} : memref<1x8x128xf32, #tpu.memory_space<vmem>>, vector<1x8x128xf32>,
    %c1_i32 = arith.constant 1 : i32
    %166 = arith.truncf %159 : vector<8x32xf32> to vector<8x32xbf16>
    %167 = arith.truncf %91 : vector<8x32xf32> to vector<8x32xbf16>
    %cst_52 = arith.constant dense<0.000000e+00> : vector<8x128xf32>
    %168 = tpu.matmul %166, %7, %cst_52 {dimension_numbers = #tpu.dot_dimension_numbers<[1], [0], [0], [1], [0, 0, 1, 1], [], []>} : vector<8x32xbf16>, vector<32x128xbf16>, vector<8x128xf32> -> vector<8x128xf32>
    %169 = arith.addf %168, %36 : vector<8x128xf32>
    %cst_53 = arith.constant dense<0.000000e+00> : vector<8x128xf32>
    %170 = tpu.matmul %167, %8, %cst_53 {dimension_numbers = #tpu.dot_dimension_numbers<[1], [0], [0], [1], [0, 0, 1, 1], [], []>} : vector<8x32xbf16>, vector<32x128xbf16>, vector<8x128xf32> -> vector<8x128xf32>
    %171 = arith.addf %170, %39 : vector<8x128xf32>
    %172 = vector.extract_strided_slice %169 {offsets = [0, 0], sizes = [8, 32], strides = [1, 1]} : vector<8x128xf32> to vector<8x32xf32>
    %173 = vector.extract_strided_slice %171 {offsets = [0, 0], sizes = [8, 32], strides = [1, 1]} : vector<8x128xf32> to vector<8x32xf32>
    %174 = arith.addf %172, %173 : vector<8x32xf32>
    %175 = arith.negf %174 : vector<8x32xf32>
    %176 = math.exp %175 : vector<8x32xf32>
    %cst_54 = arith.constant 1.000000e+00 : f32
    %177 = vector.broadcast %cst_54 : f32 to vector<8x32xf32>
    %178 = arith.addf %177, %176 : vector<8x32xf32>
    %179 = arith.divf %177, %178 : vector<8x32xf32>
    %180 = vector.extract_strided_slice %169 {offsets = [0, 32], sizes = [8, 32], strides = [1, 1]} : vector<8x128xf32> to vector<8x32xf32>
    %181 = vector.extract_strided_slice %171 {offsets = [0, 32], sizes = [8, 32], strides = [1, 1]} : vector<8x128xf32> to vector<8x32xf32>
    %182 = arith.addf %180, %181 : vector<8x32xf32>
    %183 = arith.negf %182 : vector<8x32xf32>
    %184 = math.exp %183 : vector<8x32xf32>
    %cst_55 = arith.constant 1.000000e+00 : f32
    %185 = vector.broadcast %cst_55 : f32 to vector<8x32xf32>
    %186 = arith.addf %185, %184 : vector<8x32xf32>
    %187 = arith.divf %185, %186 : vector<8x32xf32>
    %188 = vector.extract_strided_slice %169 {offsets = [0, 64], sizes = [8, 32], strides = [1, 1]} : vector<8x128xf32> to vector<8x32xf32>
    %189 = vector.extract_strided_slice %171 {offsets = [0, 64], sizes = [8, 32], strides = [1, 1]} : vector<8x128xf32> to vector<8x32xf32>
    %190 = arith.mulf %179, %189 : vector<8x32xf32>
    %191 = arith.addf %188, %190 : vector<8x32xf32>
    %192 = math.tanh %191 : vector<8x32xf32>
    %cst_56 = arith.constant 1.000000e+00 : f32
    %193 = vector.broadcast %cst_56 : f32 to vector<8x32xf32>
    %194 = arith.subf %193, %187 : vector<8x32xf32>
    %195 = arith.mulf %194, %192 : vector<8x32xf32>
    %196 = arith.mulf %187, %91 : vector<8x32xf32>
    %197 = arith.addf %195, %196 : vector<8x32xf32>
    %198 = arith.truncf %197 : vector<8x32xf32> to vector<8x32xbf16>
    %cst_57 = arith.constant dense<0.000000e+00> : vector<8x256xf32>
    %199 = tpu.matmul %198, %32, %cst_57 {dimension_numbers = #tpu.dot_dimension_numbers<[1], [1], [0], [0], [0, 0, 1, 0], [], []>} : vector<8x32xbf16>, vector<256x32xbf16>, vector<8x256xf32> -> vector<8x256xf32>
    %200 = vector.extract_strided_slice %199 {offsets = [0, 0], sizes = [8, 128], strides = [1, 1]} : vector<8x256xf32> to vector<8x128xf32>
    %201 = arith.addf %200, %21 : vector<8x128xf32>
    %cst_58 = arith.constant dense<0xFF800000> : vector<8xf32>
    %202 = vector.multi_reduction <maximumf>, %201, %cst_58 [1] : vector<8x128xf32> to vector<8xf32>
    %203 = vector.shape_cast %202 : vector<8xf32> to vector<8x1xf32>
    %204 = vector.broadcast %203 : vector<8x1xf32> to vector<8x128xf32>
    %205 = arith.subf %201, %204 : vector<8x128xf32>
    %206 = math.exp %205 : vector<8x128xf32>
    %cst_59 = arith.constant dense<0.000000e+00> : vector<8xf32>
    %207 = vector.multi_reduction <add>, %206, %cst_59 [1] : vector<8x128xf32> to vector<8xf32>
    %208 = vector.shape_cast %207 : vector<8xf32> to vector<8x1xf32>
    %209 = tpu.reciprocal %208 {approx = true} : vector<8x1xf32> -> vector<8x1xf32>
    %210 = vector.broadcast %209 : vector<8x1xf32> to vector<8x128xf32>
    %211 = arith.mulf %206, %210 : vector<8x128xf32>
    %212 = vector.extract_strided_slice %199 {offsets = [0, 128], sizes = [8, 128], strides = [1, 1]} : vector<8x256xf32> to vector<8x128xf32>
    %cst_60 = arith.constant -1.000000e+04 : f32
    %213 = vector.broadcast %cst_60 : f32 to vector<8x128xf32>
    %214 = arith.select %25, %213, %212 : vector<8x128xi1>, vector<8x128xf32>
    %cst_61 = arith.constant dense<0xFF800000> : vector<8xf32>
    %215 = vector.multi_reduction <maximumf>, %214, %cst_61 [1] : vector<8x128xf32> to vector<8xf32>
    %216 = vector.shape_cast %215 : vector<8xf32> to vector<8x1xf32>
    %217 = vector.broadcast %216 : vector<8x1xf32> to vector<8x128xf32>
    %218 = arith.subf %214, %217 : vector<8x128xf32>
    %219 = math.exp %218 : vector<8x128xf32>
    %cst_62 = arith.constant dense<0.000000e+00> : vector<8xf32>
    %220 = vector.multi_reduction <add>, %219, %cst_62 [1] : vector<8x128xf32> to vector<8xf32>
    %221 = vector.shape_cast %220 : vector<8xf32> to vector<8x1xf32>
    %222 = tpu.reciprocal %221 {approx = true} : vector<8x1xf32> -> vector<8x1xf32>
    %223 = vector.broadcast %222 : vector<8x1xf32> to vector<8x128xf32>
    %224 = arith.mulf %219, %223 : vector<8x128xf32>
    %225 = arith.truncf %224 : vector<8x128xf32> to vector<8x128xbf16>
    %cst_63 = arith.constant dense<0.000000e+00> : vector<8x160xf32>
    %226 = tpu.matmul %225, %33, %cst_63 {dimension_numbers = #tpu.dot_dimension_numbers<[1], [0], [0], [1], [0, 0, 1, 1], [], []>} : vector<8x128xbf16>, vector<128x160xbf16>, vector<8x160xf32> -> vector<8x160xf32>
    %227 = vector.extract_strided_slice %226 {offsets = [0, 0], sizes = [8, 128], strides = [1, 1]} : vector<8x160xf32> to vector<8x128xf32>
    %228 = vector.extract_strided_slice %226 {offsets = [0, 128], sizes = [8, 32], strides = [1, 1]} : vector<8x160xf32> to vector<8x32xf32>
    %229 = arith.mulf %159, %42 : vector<8x32xf32>
    %230 = arith.mulf %197, %45 : vector<8x32xf32>
    %231 = arith.addf %229, %230 : vector<8x32xf32>
    %232 = arith.mulf %228, %48 : vector<8x32xf32>
    %233 = arith.addf %231, %232 : vector<8x32xf32>
    %cst_64 = arith.constant dense<0.000000e+00> : vector<8xf32>
    %234 = vector.multi_reduction <add>, %233, %cst_64 [1] : vector<8x32xf32> to vector<8xf32>
    %235 = vector.shape_cast %234 : vector<8xf32> to vector<8x1xf32>
    %236 = arith.addf %235, %54 : vector<8x1xf32>
    %237 = arith.negf %236 : vector<8x1xf32>
    %238 = math.exp %237 : vector<8x1xf32>
    %cst_65 = arith.constant 1.000000e+00 : f32
    %239 = vector.broadcast %cst_65 : f32 to vector<8x1xf32>
    %240 = arith.addf %239, %238 : vector<8x1xf32>
    %241 = arith.divf %239, %240 : vector<8x1xf32>
    %242 = vector.broadcast %241 : vector<8x1xf32> to vector<8x128xf32>
    %243 = arith.mulf %242, %211 : vector<8x128xf32>
    %cst_66 = arith.constant 1.000000e+00 : f32
    %244 = vector.broadcast %cst_66 : f32 to vector<8x1xf32>
    %245 = arith.subf %244, %241 : vector<8x1xf32>
    %246 = vector.broadcast %245 : vector<8x1xf32> to vector<8x128xf32>
    %247 = arith.mulf %246, %227 : vector<8x128xf32>
    %248 = arith.addf %243, %247 : vector<8x128xf32>
    %c0_67 = arith.constant 0 : index
    %249 = arith.index_cast %c1_i32 : i32 to index
    %c0_68 = arith.constant 0 : index
    %c0_69 = arith.constant 0 : index
    %250 = vector.load %arg11[%c0_67, %249, %c0_68, %c0_69] : memref<1x4x8x128xf32, #tpu.memory_space<vmem>>, vector<1x1x8x128xf32>
    %251 = vector.shape_cast %250 : vector<1x1x8x128xf32> to vector<8x128xf32>
    %252 = vector.shape_cast %248 : vector<8x128xf32> to vector<1x1x8x128xf32>
    tpu.vector_store %arg11[%c0_67, %249, %c0_68, %c0_69], %252 {strides = array<i32>} : memref<1x4x8x128xf32, #tpu.memory_space<vmem>>, vector<1x1x8x128xf32>,
    %cst_70 = arith.constant dense<0xFF800000> : vector<8xf32>
    %253 = vector.multi_reduction <maximumf>, %248, %cst_70 [1] : vector<8x128xf32> to vector<8xf32>
    %254 = vector.shape_cast %253 : vector<8xf32> to vector<8x1xf32>
    %255 = vector.broadcast %254 : vector<8x1xf32> to vector<8x128xf32>
    %256 = arith.cmpf oge, %248, %255 : vector<8x128xf32>
    %cst_71 = arith.constant 1.280000e+02 : f32
    %257 = vector.broadcast %cst_71 : f32 to vector<8x128xf32>
    %258 = arith.select %256, %14, %257 : vector<8x128xi1>, vector<8x128xf32>
    %cst_72 = arith.constant dense<0x7F800000> : vector<8xf32>
    %259 = vector.multi_reduction <minimumf>, %258, %cst_72 [1] : vector<8x128xf32> to vector<8xf32>
    %260 = vector.shape_cast %259 : vector<8xf32> to vector<8x1xf32>
    %261 = vector.broadcast %260 : vector<8x1xf32> to vector<8x128xf32>
    %262 = arith.cmpf oeq, %261, %14 : vector<8x128xf32>
    %263 = arith.extui %262 : vector<8x128xi1> to vector<8x128xi32>
    %264 = arith.sitofp %263 : vector<8x128xi32> to vector<8x128xf32>
    %265 = arith.truncf %264 : vector<8x128xf32> to vector<8x128xbf16>
    %cst_73 = arith.constant dense<0.000000e+00> : vector<8x32xf32>
    %266 = tpu.matmul %265, %6, %cst_73 {dimension_numbers = #tpu.dot_dimension_numbers<[1], [0], [0], [1], [0, 0, 1, 1], [], []>} : vector<8x128xbf16>, vector<128x32xbf16>, vector<8x32xf32> -> vector<8x32xf32>
    %c2_i32 = arith.constant 2 : i32
    %267 = arith.truncf %266 : vector<8x32xf32> to vector<8x32xbf16>
    %268 = arith.truncf %197 : vector<8x32xf32> to vector<8x32xbf16>
    %cst_74 = arith.constant dense<0.000000e+00> : vector<8x128xf32>
    %269 = tpu.matmul %267, %7, %cst_74 {dimension_numbers = #tpu.dot_dimension_numbers<[1], [0], [0], [1], [0, 0, 1, 1], [], []>} : vector<8x32xbf16>, vector<32x128xbf16>, vector<8x128xf32> -> vector<8x128xf32>
    %270 = arith.addf %269, %36 : vector<8x128xf32>
    %cst_75 = arith.constant dense<0.000000e+00> : vector<8x128xf32>
    %271 = tpu.matmul %268, %8, %cst_75 {dimension_numbers = #tpu.dot_dimension_numbers<[1], [0], [0], [1], [0, 0, 1, 1], [], []>} : vector<8x32xbf16>, vector<32x128xbf16>, vector<8x128xf32> -> vector<8x128xf32>
    %272 = arith.addf %271, %39 : vector<8x128xf32>
    %273 = vector.extract_strided_slice %270 {offsets = [0, 0], sizes = [8, 32], strides = [1, 1]} : vector<8x128xf32> to vector<8x32xf32>
    %274 = vector.extract_strided_slice %272 {offsets = [0, 0], sizes = [8, 32], strides = [1, 1]} : vector<8x128xf32> to vector<8x32xf32>
    %275 = arith.addf %273, %274 : vector<8x32xf32>
    %276 = arith.negf %275 : vector<8x32xf32>
    %277 = math.exp %276 : vector<8x32xf32>
    %cst_76 = arith.constant 1.000000e+00 : f32
    %278 = vector.broadcast %cst_76 : f32 to vector<8x32xf32>
    %279 = arith.addf %278, %277 : vector<8x32xf32>
    %280 = arith.divf %278, %279 : vector<8x32xf32>
    %281 = vector.extract_strided_slice %270 {offsets = [0, 32], sizes = [8, 32], strides = [1, 1]} : vector<8x128xf32> to vector<8x32xf32>
    %282 = vector.extract_strided_slice %272 {offsets = [0, 32], sizes = [8, 32], strides = [1, 1]} : vector<8x128xf32> to vector<8x32xf32>
    %283 = arith.addf %281, %282 : vector<8x32xf32>
    %284 = arith.negf %283 : vector<8x32xf32>
    %285 = math.exp %284 : vector<8x32xf32>
    %cst_77 = arith.constant 1.000000e+00 : f32
    %286 = vector.broadcast %cst_77 : f32 to vector<8x32xf32>
    %287 = arith.addf %286, %285 : vector<8x32xf32>
    %288 = arith.divf %286, %287 : vector<8x32xf32>
    %289 = vector.extract_strided_slice %270 {offsets = [0, 64], sizes = [8, 32], strides = [1, 1]} : vector<8x128xf32> to vector<8x32xf32>
    %290 = vector.extract_strided_slice %272 {offsets = [0, 64], sizes = [8, 32], strides = [1, 1]} : vector<8x128xf32> to vector<8x32xf32>
    %291 = arith.mulf %280, %290 : vector<8x32xf32>
    %292 = arith.addf %289, %291 : vector<8x32xf32>
    %293 = math.tanh %292 : vector<8x32xf32>
    %cst_78 = arith.constant 1.000000e+00 : f32
    %294 = vector.broadcast %cst_78 : f32 to vector<8x32xf32>
    %295 = arith.subf %294, %288 : vector<8x32xf32>
    %296 = arith.mulf %295, %293 : vector<8x32xf32>
    %297 = arith.mulf %288, %197 : vector<8x32xf32>
    %298 = arith.addf %296, %297 : vector<8x32xf32>
    %299 = arith.truncf %298 : vector<8x32xf32> to vector<8x32xbf16>
    %cst_79 = arith.constant dense<0.000000e+00> : vector<8x256xf32>
    %300 = tpu.matmul %299, %32, %cst_79 {dimension_numbers = #tpu.dot_dimension_numbers<[1], [1], [0], [0], [0, 0, 1, 0], [], []>} : vector<8x32xbf16>, vector<256x32xbf16>, vector<8x256xf32> -> vector<8x256xf32>
    %301 = vector.extract_strided_slice %300 {offsets = [0, 0], sizes = [8, 128], strides = [1, 1]} : vector<8x256xf32> to vector<8x128xf32>
    %302 = arith.addf %301, %21 : vector<8x128xf32>
    %cst_80 = arith.constant dense<0xFF800000> : vector<8xf32>
    %303 = vector.multi_reduction <maximumf>, %302, %cst_80 [1] : vector<8x128xf32> to vector<8xf32>
    %304 = vector.shape_cast %303 : vector<8xf32> to vector<8x1xf32>
    %305 = vector.broadcast %304 : vector<8x1xf32> to vector<8x128xf32>
    %306 = arith.subf %302, %305 : vector<8x128xf32>
    %307 = math.exp %306 : vector<8x128xf32>
    %cst_81 = arith.constant dense<0.000000e+00> : vector<8xf32>
    %308 = vector.multi_reduction <add>, %307, %cst_81 [1] : vector<8x128xf32> to vector<8xf32>
    %309 = vector.shape_cast %308 : vector<8xf32> to vector<8x1xf32>
    %310 = tpu.reciprocal %309 {approx = true} : vector<8x1xf32> -> vector<8x1xf32>
    %311 = vector.broadcast %310 : vector<8x1xf32> to vector<8x128xf32>
    %312 = arith.mulf %307, %311 : vector<8x128xf32>
    %313 = vector.extract_strided_slice %300 {offsets = [0, 128], sizes = [8, 128], strides = [1, 1]} : vector<8x256xf32> to vector<8x128xf32>
    %cst_82 = arith.constant -1.000000e+04 : f32
    %314 = vector.broadcast %cst_82 : f32 to vector<8x128xf32>
    %315 = arith.select %25, %314, %313 : vector<8x128xi1>, vector<8x128xf32>
    %cst_83 = arith.constant dense<0xFF800000> : vector<8xf32>
    %316 = vector.multi_reduction <maximumf>, %315, %cst_83 [1] : vector<8x128xf32> to vector<8xf32>
    %317 = vector.shape_cast %316 : vector<8xf32> to vector<8x1xf32>
    %318 = vector.broadcast %317 : vector<8x1xf32> to vector<8x128xf32>
    %319 = arith.subf %315, %318 : vector<8x128xf32>
    %320 = math.exp %319 : vector<8x128xf32>
    %cst_84 = arith.constant dense<0.000000e+00> : vector<8xf32>
    %321 = vector.multi_reduction <add>, %320, %cst_84 [1] : vector<8x128xf32> to vector<8xf32>
    %322 = vector.shape_cast %321 : vector<8xf32> to vector<8x1xf32>
    %323 = tpu.reciprocal %322 {approx = true} : vector<8x1xf32> -> vector<8x1xf32>
    %324 = vector.broadcast %323 : vector<8x1xf32> to vector<8x128xf32>
    %325 = arith.mulf %320, %324 : vector<8x128xf32>
    %326 = arith.truncf %325 : vector<8x128xf32> to vector<8x128xbf16>
    %cst_85 = arith.constant dense<0.000000e+00> : vector<8x160xf32>
    %327 = tpu.matmul %326, %33, %cst_85 {dimension_numbers = #tpu.dot_dimension_numbers<[1], [0], [0], [1], [0, 0, 1, 1], [], []>} : vector<8x128xbf16>, vector<128x160xbf16>, vector<8x160xf32> -> vector<8x160xf32>
    %328 = vector.extract_strided_slice %327 {offsets = [0, 0], sizes = [8, 128], strides = [1, 1]} : vector<8x160xf32> to vector<8x128xf32>
    %329 = vector.extract_strided_slice %327 {offsets = [0, 128], sizes = [8, 32], strides = [1, 1]} : vector<8x160xf32> to vector<8x32xf32>
    %330 = arith.mulf %266, %42 : vector<8x32xf32>
    %331 = arith.mulf %298, %45 : vector<8x32xf32>
    %332 = arith.addf %330, %331 : vector<8x32xf32>
    %333 = arith.mulf %329, %48 : vector<8x32xf32>
    %334 = arith.addf %332, %333 : vector<8x32xf32>
    %cst_86 = arith.constant dense<0.000000e+00> : vector<8xf32>
    %335 = vector.multi_reduction <add>, %334, %cst_86 [1] : vector<8x32xf32> to vector<8xf32>
    %336 = vector.shape_cast %335 : vector<8xf32> to vector<8x1xf32>
    %337 = arith.addf %336, %54 : vector<8x1xf32>
    %338 = arith.negf %337 : vector<8x1xf32>
    %339 = math.exp %338 : vector<8x1xf32>
    %cst_87 = arith.constant 1.000000e+00 : f32
    %340 = vector.broadcast %cst_87 : f32 to vector<8x1xf32>
    %341 = arith.addf %340, %339 : vector<8x1xf32>
    %342 = arith.divf %340, %341 : vector<8x1xf32>
    %343 = vector.broadcast %342 : vector<8x1xf32> to vector<8x128xf32>
    %344 = arith.mulf %343, %312 : vector<8x128xf32>
    %cst_88 = arith.constant 1.000000e+00 : f32
    %345 = vector.broadcast %cst_88 : f32 to vector<8x1xf32>
    %346 = arith.subf %345, %342 : vector<8x1xf32>
    %347 = vector.broadcast %346 : vector<8x1xf32> to vector<8x128xf32>
    %348 = arith.mulf %347, %328 : vector<8x128xf32>
    %349 = arith.addf %344, %348 : vector<8x128xf32>
    %c0_89 = arith.constant 0 : index
    %350 = arith.index_cast %c2_i32 : i32 to index
    %c0_90 = arith.constant 0 : index
    %c0_91 = arith.constant 0 : index
    %351 = vector.load %arg11[%c0_89, %350, %c0_90, %c0_91] : memref<1x4x8x128xf32, #tpu.memory_space<vmem>>, vector<1x1x8x128xf32>
    %352 = vector.shape_cast %351 : vector<1x1x8x128xf32> to vector<8x128xf32>
    %353 = vector.shape_cast %349 : vector<8x128xf32> to vector<1x1x8x128xf32>
    tpu.vector_store %arg11[%c0_89, %350, %c0_90, %c0_91], %353 {strides = array<i32>} : memref<1x4x8x128xf32, #tpu.memory_space<vmem>>, vector<1x1x8x128xf32>,
    %cst_92 = arith.constant dense<0xFF800000> : vector<8xf32>
    %354 = vector.multi_reduction <maximumf>, %349, %cst_92 [1] : vector<8x128xf32> to vector<8xf32>
    %355 = vector.shape_cast %354 : vector<8xf32> to vector<8x1xf32>
    %356 = vector.broadcast %355 : vector<8x1xf32> to vector<8x128xf32>
    %357 = arith.cmpf oge, %349, %356 : vector<8x128xf32>
    %cst_93 = arith.constant 1.280000e+02 : f32
    %358 = vector.broadcast %cst_93 : f32 to vector<8x128xf32>
    %359 = arith.select %357, %14, %358 : vector<8x128xi1>, vector<8x128xf32>
    %cst_94 = arith.constant dense<0x7F800000> : vector<8xf32>
    %360 = vector.multi_reduction <minimumf>, %359, %cst_94 [1] : vector<8x128xf32> to vector<8xf32>
    %361 = vector.shape_cast %360 : vector<8xf32> to vector<8x1xf32>
    %362 = vector.broadcast %361 : vector<8x1xf32> to vector<8x128xf32>
    %363 = arith.cmpf oeq, %362, %14 : vector<8x128xf32>
    %364 = arith.extui %363 : vector<8x128xi1> to vector<8x128xi32>
    %365 = arith.sitofp %364 : vector<8x128xi32> to vector<8x128xf32>
    %366 = arith.truncf %365 : vector<8x128xf32> to vector<8x128xbf16>
    %cst_95 = arith.constant dense<0.000000e+00> : vector<8x32xf32>
    %367 = tpu.matmul %366, %6, %cst_95 {dimension_numbers = #tpu.dot_dimension_numbers<[1], [0], [0], [1], [0, 0, 1, 1], [], []>} : vector<8x128xbf16>, vector<128x32xbf16>, vector<8x32xf32> -> vector<8x32xf32>
    %c3_i32 = arith.constant 3 : i32
    %368 = arith.truncf %367 : vector<8x32xf32> to vector<8x32xbf16>
    %369 = arith.truncf %298 : vector<8x32xf32> to vector<8x32xbf16>
    %cst_96 = arith.constant dense<0.000000e+00> : vector<8x128xf32>
    %370 = tpu.matmul %368, %7, %cst_96 {dimension_numbers = #tpu.dot_dimension_numbers<[1], [0], [0], [1], [0, 0, 1, 1], [], []>} : vector<8x32xbf16>, vector<32x128xbf16>, vector<8x128xf32> -> vector<8x128xf32>
    %371 = arith.addf %370, %36 : vector<8x128xf32>
    %cst_97 = arith.constant dense<0.000000e+00> : vector<8x128xf32>
    %372 = tpu.matmul %369, %8, %cst_97 {dimension_numbers = #tpu.dot_dimension_numbers<[1], [0], [0], [1], [0, 0, 1, 1], [], []>} : vector<8x32xbf16>, vector<32x128xbf16>, vector<8x128xf32> -> vector<8x128xf32>
    %373 = arith.addf %372, %39 : vector<8x128xf32>
    %374 = vector.extract_strided_slice %371 {offsets = [0, 0], sizes = [8, 32], strides = [1, 1]} : vector<8x128xf32> to vector<8x32xf32>
    %375 = vector.extract_strided_slice %373 {offsets = [0, 0], sizes = [8, 32], strides = [1, 1]} : vector<8x128xf32> to vector<8x32xf32>
    %376 = arith.addf %374, %375 : vector<8x32xf32>
    %377 = arith.negf %376 : vector<8x32xf32>
    %378 = math.exp %377 : vector<8x32xf32>
    %cst_98 = arith.constant 1.000000e+00 : f32
    %379 = vector.broadcast %cst_98 : f32 to vector<8x32xf32>
    %380 = arith.addf %379, %378 : vector<8x32xf32>
    %381 = arith.divf %379, %380 : vector<8x32xf32>
    %382 = vector.extract_strided_slice %371 {offsets = [0, 32], sizes = [8, 32], strides = [1, 1]} : vector<8x128xf32> to vector<8x32xf32>
    %383 = vector.extract_strided_slice %373 {offsets = [0, 32], sizes = [8, 32], strides = [1, 1]} : vector<8x128xf32> to vector<8x32xf32>
    %384 = arith.addf %382, %383 : vector<8x32xf32>
    %385 = arith.negf %384 : vector<8x32xf32>
    %386 = math.exp %385 : vector<8x32xf32>
    %cst_99 = arith.constant 1.000000e+00 : f32
    %387 = vector.broadcast %cst_99 : f32 to vector<8x32xf32>
    %388 = arith.addf %387, %386 : vector<8x32xf32>
    %389 = arith.divf %387, %388 : vector<8x32xf32>
    %390 = vector.extract_strided_slice %371 {offsets = [0, 64], sizes = [8, 32], strides = [1, 1]} : vector<8x128xf32> to vector<8x32xf32>
    %391 = vector.extract_strided_slice %373 {offsets = [0, 64], sizes = [8, 32], strides = [1, 1]} : vector<8x128xf32> to vector<8x32xf32>
    %392 = arith.mulf %381, %391 : vector<8x32xf32>
    %393 = arith.addf %390, %392 : vector<8x32xf32>
    %394 = math.tanh %393 : vector<8x32xf32>
    %cst_100 = arith.constant 1.000000e+00 : f32
    %395 = vector.broadcast %cst_100 : f32 to vector<8x32xf32>
    %396 = arith.subf %395, %389 : vector<8x32xf32>
    %397 = arith.mulf %396, %394 : vector<8x32xf32>
    %398 = arith.mulf %389, %298 : vector<8x32xf32>
    %399 = arith.addf %397, %398 : vector<8x32xf32>
    %400 = arith.truncf %399 : vector<8x32xf32> to vector<8x32xbf16>
    %cst_101 = arith.constant dense<0.000000e+00> : vector<8x256xf32>
    %401 = tpu.matmul %400, %32, %cst_101 {dimension_numbers = #tpu.dot_dimension_numbers<[1], [1], [0], [0], [0, 0, 1, 0], [], []>} : vector<8x32xbf16>, vector<256x32xbf16>, vector<8x256xf32> -> vector<8x256xf32>
    %402 = vector.extract_strided_slice %401 {offsets = [0, 0], sizes = [8, 128], strides = [1, 1]} : vector<8x256xf32> to vector<8x128xf32>
    %403 = arith.addf %402, %21 : vector<8x128xf32>
    %cst_102 = arith.constant dense<0xFF800000> : vector<8xf32>
    %404 = vector.multi_reduction <maximumf>, %403, %cst_102 [1] : vector<8x128xf32> to vector<8xf32>
    %405 = vector.shape_cast %404 : vector<8xf32> to vector<8x1xf32>
    %406 = vector.broadcast %405 : vector<8x1xf32> to vector<8x128xf32>
    %407 = arith.subf %403, %406 : vector<8x128xf32>
    %408 = math.exp %407 : vector<8x128xf32>
    %cst_103 = arith.constant dense<0.000000e+00> : vector<8xf32>
    %409 = vector.multi_reduction <add>, %408, %cst_103 [1] : vector<8x128xf32> to vector<8xf32>
    %410 = vector.shape_cast %409 : vector<8xf32> to vector<8x1xf32>
    %411 = tpu.reciprocal %410 {approx = true} : vector<8x1xf32> -> vector<8x1xf32>
    %412 = vector.broadcast %411 : vector<8x1xf32> to vector<8x128xf32>
    %413 = arith.mulf %408, %412 : vector<8x128xf32>
    %414 = vector.extract_strided_slice %401 {offsets = [0, 128], sizes = [8, 128], strides = [1, 1]} : vector<8x256xf32> to vector<8x128xf32>
    %cst_104 = arith.constant -1.000000e+04 : f32
    %415 = vector.broadcast %cst_104 : f32 to vector<8x128xf32>
    %416 = arith.select %25, %415, %414 : vector<8x128xi1>, vector<8x128xf32>
    %cst_105 = arith.constant dense<0xFF800000> : vector<8xf32>
    %417 = vector.multi_reduction <maximumf>, %416, %cst_105 [1] : vector<8x128xf32> to vector<8xf32>
    %418 = vector.shape_cast %417 : vector<8xf32> to vector<8x1xf32>
    %419 = vector.broadcast %418 : vector<8x1xf32> to vector<8x128xf32>
    %420 = arith.subf %416, %419 : vector<8x128xf32>
    %421 = math.exp %420 : vector<8x128xf32>
    %cst_106 = arith.constant dense<0.000000e+00> : vector<8xf32>
    %422 = vector.multi_reduction <add>, %421, %cst_106 [1] : vector<8x128xf32> to vector<8xf32>
    %423 = vector.shape_cast %422 : vector<8xf32> to vector<8x1xf32>
    %424 = tpu.reciprocal %423 {approx = true} : vector<8x1xf32> -> vector<8x1xf32>
    %425 = vector.broadcast %424 : vector<8x1xf32> to vector<8x128xf32>
    %426 = arith.mulf %421, %425 : vector<8x128xf32>
    %427 = arith.truncf %426 : vector<8x128xf32> to vector<8x128xbf16>
    %cst_107 = arith.constant dense<0.000000e+00> : vector<8x160xf32>
    %428 = tpu.matmul %427, %33, %cst_107 {dimension_numbers = #tpu.dot_dimension_numbers<[1], [0], [0], [1], [0, 0, 1, 1], [], []>} : vector<8x128xbf16>, vector<128x160xbf16>, vector<8x160xf32> -> vector<8x160xf32>
    %429 = vector.extract_strided_slice %428 {offsets = [0, 0], sizes = [8, 128], strides = [1, 1]} : vector<8x160xf32> to vector<8x128xf32>
    %430 = vector.extract_strided_slice %428 {offsets = [0, 128], sizes = [8, 32], strides = [1, 1]} : vector<8x160xf32> to vector<8x32xf32>
    %431 = arith.mulf %367, %42 : vector<8x32xf32>
    %432 = arith.mulf %399, %45 : vector<8x32xf32>
    %433 = arith.addf %431, %432 : vector<8x32xf32>
    %434 = arith.mulf %430, %48 : vector<8x32xf32>
    %435 = arith.addf %433, %434 : vector<8x32xf32>
    %cst_108 = arith.constant dense<0.000000e+00> : vector<8xf32>
    %436 = vector.multi_reduction <add>, %435, %cst_108 [1] : vector<8x32xf32> to vector<8xf32>
    %437 = vector.shape_cast %436 : vector<8xf32> to vector<8x1xf32>
    %438 = arith.addf %437, %54 : vector<8x1xf32>
    %439 = arith.negf %438 : vector<8x1xf32>
    %440 = math.exp %439 : vector<8x1xf32>
    %cst_109 = arith.constant 1.000000e+00 : f32
    %441 = vector.broadcast %cst_109 : f32 to vector<8x1xf32>
    %442 = arith.addf %441, %440 : vector<8x1xf32>
    %443 = arith.divf %441, %442 : vector<8x1xf32>
    %444 = vector.broadcast %443 : vector<8x1xf32> to vector<8x128xf32>
    %445 = arith.mulf %444, %413 : vector<8x128xf32>
    %cst_110 = arith.constant 1.000000e+00 : f32
    %446 = vector.broadcast %cst_110 : f32 to vector<8x1xf32>
    %447 = arith.subf %446, %443 : vector<8x1xf32>
    %448 = vector.broadcast %447 : vector<8x1xf32> to vector<8x128xf32>
    %449 = arith.mulf %448, %429 : vector<8x128xf32>
    %450 = arith.addf %445, %449 : vector<8x128xf32>
    %c0_111 = arith.constant 0 : index
    %451 = arith.index_cast %c3_i32 : i32 to index
    %c0_112 = arith.constant 0 : index
    %c0_113 = arith.constant 0 : index
    %452 = vector.load %arg11[%c0_111, %451, %c0_112, %c0_113] : memref<1x4x8x128xf32, #tpu.memory_space<vmem>>, vector<1x1x8x128xf32>
    %453 = vector.shape_cast %452 : vector<1x1x8x128xf32> to vector<8x128xf32>
    %454 = vector.shape_cast %450 : vector<8x128xf32> to vector<1x1x8x128xf32>
    tpu.vector_store %arg11[%c0_111, %451, %c0_112, %c0_113], %454 {strides = array<i32>} : memref<1x4x8x128xf32, #tpu.memory_space<vmem>>, vector<1x1x8x128xf32>,
    %cst_114 = arith.constant dense<0xFF800000> : vector<8xf32>
    %455 = vector.multi_reduction <maximumf>, %450, %cst_114 [1] : vector<8x128xf32> to vector<8xf32>
    %456 = vector.shape_cast %455 : vector<8xf32> to vector<8x1xf32>
    %457 = vector.broadcast %456 : vector<8x1xf32> to vector<8x128xf32>
    %458 = arith.cmpf oge, %450, %457 : vector<8x128xf32>
    %cst_115 = arith.constant 1.280000e+02 : f32
    %459 = vector.broadcast %cst_115 : f32 to vector<8x128xf32>
    %460 = arith.select %458, %14, %459 : vector<8x128xi1>, vector<8x128xf32>
    %cst_116 = arith.constant dense<0x7F800000> : vector<8xf32>
    %461 = vector.multi_reduction <minimumf>, %460, %cst_116 [1] : vector<8x128xf32> to vector<8xf32>
    %462 = vector.shape_cast %461 : vector<8xf32> to vector<8x1xf32>
    %463 = vector.broadcast %462 : vector<8x1xf32> to vector<8x128xf32>
    %464 = arith.cmpf oeq, %463, %14 : vector<8x128xf32>
    %465 = arith.extui %464 : vector<8x128xi1> to vector<8x128xi32>
    %466 = arith.sitofp %465 : vector<8x128xi32> to vector<8x128xf32>
    %467 = arith.truncf %466 : vector<8x128xf32> to vector<8x128xbf16>
    %cst_117 = arith.constant dense<0.000000e+00> : vector<8x32xf32>
    %468 = tpu.matmul %467, %6, %cst_117 {dimension_numbers = #tpu.dot_dimension_numbers<[1], [0], [0], [1], [0, 0, 1, 1], [], []>} : vector<8x128xbf16>, vector<128x32xbf16>, vector<8x32xf32> -> vector<8x32xf32>
    %c3_i32_118 = arith.constant 3 : i32
    return
  }
  func.func @transform_0(%arg0: i32) -> (i32, i32, i32) {
    %c0_i32 = arith.constant 0 : i32
    %c0_i32_0 = arith.constant 0 : i32
    %c0_i32_1 = arith.constant 0 : i32
    return %arg0, %c0_i32, %c0_i32_0 : i32, i32, i32
  }
  func.func @transform_1(%arg0: i32) -> (i32, i32, i32) {
    %c0_i32 = arith.constant 0 : i32
    %c0_i32_0 = arith.constant 0 : i32
    %c0_i32_1 = arith.constant 0 : i32
    return %arg0, %c0_i32, %c0_i32_0 : i32, i32, i32
  }
  func.func @transform_2(%arg0: i32) -> (i32, i32, i32) {
    %c0_i32 = arith.constant 0 : i32
    %c0_i32_0 = arith.constant 0 : i32
    %c0_i32_1 = arith.constant 0 : i32
    return %arg0, %c0_i32, %c0_i32_0 : i32, i32, i32
  }
  func.func @transform_3(%arg0: i32) -> (i32, i32, i32) {
    %c0_i32 = arith.constant 0 : i32
    %c0_i32_0 = arith.constant 0 : i32
    %c0_i32_1 = arith.constant 0 : i32
    return %arg0, %c0_i32, %c0_i32_0 : i32, i32, i32
  }
  func.func @transform_4(%arg0: i32) -> (i32, i32) {
    %c0_i32 = arith.constant 0 : i32
    %c0_i32_0 = arith.constant 0 : i32
    %c0_i32_1 = arith.constant 0 : i32
    return %c0_i32, %c0_i32_0 : i32, i32
  }
  func.func @transform_5(%arg0: i32) -> (i32, i32) {
    %c0_i32 = arith.constant 0 : i32
    %c0_i32_0 = arith.constant 0 : i32
    %c0_i32_1 = arith.constant 0 : i32
    return %c0_i32, %c0_i32_0 : i32, i32
  }
  func.func @transform_6(%arg0: i32) -> (i32, i32) {
    %c0_i32 = arith.constant 0 : i32
    %c0_i32_0 = arith.constant 0 : i32
    %c0_i32_1 = arith.constant 0 : i32
    return %c0_i32, %c0_i32_0 : i32, i32
  }
  func.func @transform_7(%arg0: i32) -> (i32, i32) {
    %c0_i32 = arith.constant 0 : i32
    %c0_i32_0 = arith.constant 0 : i32
    %c0_i32_1 = arith.constant 0 : i32
    return %c0_i32, %c0_i32_0 : i32, i32
  }
  func.func @transform_8(%arg0: i32) -> (i32, i32) {
    %c0_i32 = arith.constant 0 : i32
    %c0_i32_0 = arith.constant 0 : i32
    %c0_i32_1 = arith.constant 0 : i32
    return %c0_i32, %c0_i32_0 : i32, i32
  }
  func.func @transform_9(%arg0: i32) -> (i32, i32) {
    %c0_i32 = arith.constant 0 : i32
    %c0_i32_0 = arith.constant 0 : i32
    %c0_i32_1 = arith.constant 0 : i32
    return %c0_i32, %c0_i32_0 : i32, i32
  }
  func.func @transform_10(%arg0: i32) -> (i32, i32, i32, i32) {
    %c0_i32 = arith.constant 0 : i32
    %c0_i32_0 = arith.constant 0 : i32
    %c0_i32_1 = arith.constant 0 : i32
    %c0_i32_2 = arith.constant 0 : i32
    return %arg0, %c0_i32, %c0_i32_0, %c0_i32_1 : i32, i32, i32, i32
  }
  func.func @transform_11(%arg0: i32) -> (i32, i32, i32) {
    %c0_i32 = arith.constant 0 : i32
    %c0_i32_0 = arith.constant 0 : i32
    %c0_i32_1 = arith.constant 0 : i32
    return %arg0, %c0_i32, %c0_i32_0 : i32, i32, i32
  }
}

</mosaic_0001>

<llo_original>
// kernel: trade_forward.1
$region0: #{trade_forward.1}
  #allocation0 [shape = 'u32[]', space=smem, size = 0x4, offset = 0x4, fixed_abs, tag = 'smem constant byte address 0x4 - core index']
  #allocation1 [shape = 'u32[144,128]{1,0:T(1,128)}', space=vmem, size = 0x12000, scoped, tag = 'internal scratch']
  %s0 = inlined_call_operand.vmem [shape: bf16[2,128,32], index: 0, kind: input, shape index: {}]
  %s1 = inlined_call_operand.vmem [shape: s32[2,128,1], index: 1, kind: input, shape index: {}]
  %s2 = inlined_call_operand.vmem [shape: f32[2,1,128], index: 2, kind: input, shape index: {}]
  %s3 = inlined_call_operand.vmem [shape: f32[2,1,32], index: 3, kind: input, shape index: {}]
  %s4 = inlined_call_operand.vmem [shape: f32[8,32], index: 4, kind: input, shape index: {}]
  %s5 = inlined_call_operand.vmem [shape: bf16[128,32], index: 5, kind: input, shape index: {}]
  %s6 = inlined_call_operand.vmem [shape: bf16[32,128], index: 6, kind: input, shape index: {}]
  %s7 = inlined_call_operand.vmem [shape: bf16[32,128], index: 7, kind: input, shape index: {}]
  %s8 = inlined_call_operand.vmem [shape: f32[8,128], index: 8, kind: input, shape index: {}]
  %s9 = inlined_call_operand.vmem [shape: bf16[32,128], index: 9, kind: input, shape index: {}]
  %s10 = inlined_call_operand.vmem [shape: f32[2,4,8,128], index: 10, kind: output, shape index: {0}]
  %s11 = inlined_call_operand.vmem [shape: f32[2,8,128], index: 11, kind: output, shape index: {1}]
  %12 = xla_tuple %s10, %s11
  %s13 = sld [smem:[#allocation0]]
  $region81: #{trade_forward.1} parent=0
    _
  %s15 = ssub.s32 1, %s13
  %s16 = scalar_select 0, %s15, %s13
  loop: start=0, step=1, limit=4
  $region2: #{trade_forward.1} parent=0 // loop_pre_header
    _
  $region3: #{trade_forward.1} parent=0 // loop_header
    %s18 = sphi 0, %s22
    %p19 = scmp.ge.s32.totalorder %s18, 4
    %s28 = sphi 0, %s30
    %s31 = sphi 0, %s28
    %s32 = sphi 0, %s31
    %s48 = sphi 0, %s32
    %s54 = sphi 0, %s56
    %s57 = sphi 0, %s54
    %s58 = sphi 0, %s57
    %s74 = sphi 0, %s58
    %s80 = sphi 0, %s82
    %s83 = sphi 0, %s80
    %s84 = sphi 0, %s83
    %s100 = sphi 0, %s84
    %s106 = sphi 0, %s108
    %s109 = sphi 0, %s106
    %s110 = sphi 0, %s109
    %s126 = sphi 0, %s110
    %s130 = sphi 0, %s130
    %s132 = sphi 0, %s130
    %s133 = sphi 0, %s132
    %s147 = sphi 0, %s133
    %s151 = sphi 0, %s151
    %s153 = sphi 0, %s151
    %s154 = sphi 0, %s153
    %s168 = sphi 0, %s154
    %s172 = sphi 0, %s172
    %s174 = sphi 0, %s172
    %s175 = sphi 0, %s174
    %s189 = sphi 0, %s175
    %s193 = sphi 0, %s193
    %s195 = sphi 0, %s193
    %s196 = sphi 0, %s195
    %s210 = sphi 0, %s196
    %s214 = sphi 0, %s214
    %s216 = sphi 0, %s214
    %s217 = sphi 0, %s216
    %s231 = sphi 0, %s217
    %s235 = sphi 0, %s235
    %s237 = sphi 0, %s235
    %s238 = sphi 0, %s237
    %s252 = sphi 0, %s238
    %s258 = sphi 0, %s260
    %s261 = sphi 0, %s258
    %s262 = sphi 0, %s261
    %s278 = sphi 0, %s262
    %s284 = sphi 0, %s286
    %s287 = sphi 0, %s284
    %s288 = sphi 0, %s287
    %s304 = sphi 0, %s288
  $region4: #{trade_forward.1} parent=0 // loop_header_branch
    %21 = sbr.rel (%p19) target = $region8
  $region5: #{trade_forward.1} parent=0 // loop_body
    %s23 = ssub.s32 %s18, 1
    %s24 = ssub.s32 %s18, 2
    %s25 = sadd.s32 %s18, 1
    %s26 = ssub.s32 %s18, %s25
    %p27 = scmp.eq.s32.totalorder %s26, 0
    %s29 = sadd.s32 %s28, 1
    %s30 = scalar_select %p27, %s28, %s29
    %p33 = pneg %p27
    %p34 = scmp.eq.s32.totalorder %s18, 1
    %p35 = por %p33, %p34
    %p36 = scmp.ne.s32.totalorder %s28, %s31
    %p37 = scmp.eq.s32.totalorder %s18, 0
    %p38 = por %p36, %p37
    %p39 = scmp.ne.s32.totalorder %s28, %s31
    %p40 = scmp.eq.s32.totalorder %s23, 1
    %p41 = por %p39, %p40
    %p42 = scmp.ne.s32.totalorder %s31, %s32
    %p43 = scmp.eq.s32.totalorder %s23, 0
    %p44 = por %p42, %p43
    %p45 = scmp.ne.s32.totalorder %s31, %s32
    %p46 = scmp.eq.s32.totalorder %s24, 1
    %p47 = por %p45, %p46
    %p49 = scmp.ne.s32.totalorder %s32, %s48
    %p50 = scmp.eq.s32.totalorder %s24, 0
    %p51 = por %p49, %p50
    %s52 = ssub.s32 %s18, %s25
    %p53 = scmp.eq.s32.totalorder %s52, 0
    %s55 = sadd.s32 %s54, 1
    %s56 = scalar_select %p53, %s54, %s55
    %p59 = pneg %p53
    %p60 = scmp.eq.s32.totalorder %s18, 1
    %p61 = por %p59, %p60
    %p62 = scmp.ne.s32.totalorder %s54, %s57
    %p63 = scmp.eq.s32.totalorder %s18, 0
    %p64 = por %p62, %p63
    %p65 = scmp.ne.s32.totalorder %s54, %s57
    %p66 = scmp.eq.s32.totalorder %s23, 1
    %p67 = por %p65, %p66
    %p68 = scmp.ne.s32.totalorder %s57, %s58
    %p69 = scmp.eq.s32.totalorder %s23, 0
    %p70 = por %p68, %p69
    %p71 = scmp.ne.s32.totalorder %s57, %s58
    %p72 = scmp.eq.s32.totalorder %s24, 1
    %p73 = por %p71, %p72
    %p75 = scmp.ne.s32.totalorder %s58, %s74
    %p76 = scmp.eq.s32.totalorder %s24, 0
    %p77 = por %p75, %p76
    %s78 = ssub.s32 %s18, %s25
    %p79 = scmp.eq.s32.totalorder %s78, 0
    %s81 = sadd.s32 %s80, 1
    %s82 = scalar_select %p79, %s80, %s81
    %p85 = pneg %p79
    %p86 = scmp.eq.s32.totalorder %s18, 1
    %p87 = por %p85, %p86
    %p88 = scmp.ne.s32.totalorder %s80, %s83
    %p89 = scmp.eq.s32.totalorder %s18, 0
    %p90 = por %p88, %p89
    %p91 = scmp.ne.s32.totalorder %s80, %s83
    %p92 = scmp.eq.s32.totalorder %s23, 1
    %p93 = por %p91, %p92
    %p94 = scmp.ne.s32.totalorder %s83, %s84
    %p95 = scmp.eq.s32.totalorder %s23, 0
    %p96 = por %p94, %p95
    %p97 = scmp.ne.s32.totalorder %s83, %s84
    %p98 = scmp.eq.s32.totalorder %s24, 1
    %p99 = por %p97, %p98
    %p101 = scmp.ne.s32.totalorder %s84, %s100
    %p102 = scmp.eq.s32.totalorder %s24, 0
    %p103 = por %p101, %p102
    %s104 = ssub.s32 %s18, %s25
    %p105 = scmp.eq.s32.totalorder %s104, 0
    %s107 = sadd.s32 %s106, 1
    %s108 = scalar_select %p105, %s106, %s107
    %p111 = pneg %p105
    %p112 = scmp.eq.s32.totalorder %s18, 1
    %p113 = por %p111, %p112
    %p114 = scmp.ne.s32.totalorder %s106, %s109
    %p115 = scmp.eq.s32.totalorder %s18, 0
    %p116 = por %p114, %p115
    %p117 = scmp.ne.s32.totalorder %s106, %s109
    %p118 = scmp.eq.s32.totalorder %s23, 1
    %p119 = por %p117, %p118
    %p120 = scmp.ne.s32.totalorder %s109, %s110
    %p121 = scmp.eq.s32.totalorder %s23, 0
    %p122 = por %p120, %p121
    %p123 = scmp.ne.s32.totalorder %s109, %s110
    %p124 = scmp.eq.s32.totalorder %s24, 1
    %p125 = por %p123, %p124
    %p127 = scmp.ne.s32.totalorder %s110, %s126
    %p128 = scmp.eq.s32.totalorder %s24, 0
    %p129 = por %p127, %p128
    %s131 = sadd.s32 %s130, 1
    %p134 = scmp.eq.s32.totalorder %s18, 1
    %p135 = scmp.ne.s32.totalorder %s130, %s132
    %p136 = scmp.eq.s32.totalorder %s18, 0
    %p137 = por %p135, %p136
    %p138 = scmp.ne.s32.totalorder %s130, %s132
    %p139 = scmp.eq.s32.totalorder %s23, 1
    %p140 = por %p138, %p139
    %p141 = scmp.ne.s32.totalorder %s132, %s133
    %p142 = scmp.eq.s32.totalorder %s23, 0
    %p143 = por %p141, %p142
    %p144 = scmp.ne.s32.totalorder %s132, %s133
    %p145 = scmp.eq.s32.totalorder %s24, 1
    %p146 = por %p144, %p145
    %p148 = scmp.ne.s32.totalorder %s133, %s147
    %p149 = scmp.eq.s32.totalorder %s24, 0
    %p150 = por %p148, %p149
    %s152 = sadd.s32 %s151, 1
    %p155 = scmp.eq.s32.totalorder %s18, 1
    %p156 = scmp.ne.s32.totalorder %s151, %s153
    %p157 = scmp.eq.s32.totalorder %s18, 0
    %p158 = por %p156, %p157
    %p159 = scmp.ne.s32.totalorder %s151, %s153
    %p160 = scmp.eq.s32.totalorder %s23, 1
    %p161 = por %p159, %p160
    %p162 = scmp.ne.s32.totalorder %s153, %s154
    %p163 = scmp.eq.s32.totalorder %s23, 0
    %p164 = por %p162, %p163
    %p165 = scmp.ne.s32.totalorder %s153, %s154
    %p166 = scmp.eq.s32.totalorder %s24, 1
    %p167 = por %p165, %p166
    %p169 = scmp.ne.s32.totalorder %s154, %s168
    %p170 = scmp.eq.s32.totalorder %s24, 0
    %p171 = por %p169, %p170
    %s173 = sadd.s32 %s172, 1
    %p176 = scmp.eq.s32.totalorder %s18, 1
    %p177 = scmp.ne.s32.totalorder %s172, %s174
    %p178 = scmp.eq.s32.totalorder %s18, 0
    %p179 = por %p177, %p178
    %p180 = scmp.ne.s32.totalorder %s172, %s174
    %p181 = scmp.eq.s32.totalorder %s23, 1
    %p182 = por %p180, %p181
    %p183 = scmp.ne.s32.totalorder %s174, %s175
    %p184 = scmp.eq.s32.totalorder %s23, 0
    %p185 = por %p183, %p184
    %p186 = scmp.ne.s32.totalorder %s174, %s175
    %p187 = scmp.eq.s32.totalorder %s24, 1
    %p188 = por %p186, %p187
    %p190 = scmp.ne.s32.totalorder %s175, %s189
    %p191 = scmp.eq.s32.totalorder %s24, 0
    %p192 = por %p190, %p191
    %s194 = sadd.s32 %s193, 1
    %p197 = scmp.eq.s32.totalorder %s18, 1
    %p198 = scmp.ne.s32.totalorder %s193, %s195
    %p199 = scmp.eq.s32.totalorder %s18, 0
    %p200 = por %p198, %p199
    %p201 = scmp.ne.s32.totalorder %s193, %s195
    %p202 = scmp.eq.s32.totalorder %s23, 1
    %p203 = por %p201, %p202
    %p204 = scmp.ne.s32.totalorder %s195, %s196
    %p205 = scmp.eq.s32.totalorder %s23, 0
    %p206 = por %p204, %p205
    %p207 = scmp.ne.s32.totalorder %s195, %s196
    %p208 = scmp.eq.s32.totalorder %s24, 1
    %p209 = por %p207, %p208
    %p211 = scmp.ne.s32.totalorder %s196, %s210
    %p212 = scmp.eq.s32.totalorder %s24, 0
    %p213 = por %p211, %p212
    %s215 = sadd.s32 %s214, 1
    %p218 = scmp.eq.s32.totalorder %s18, 1
    %p219 = scmp.ne.s32.totalorder %s214, %s216
    %p220 = scmp.eq.s32.totalorder %s18, 0
    %p221 = por %p219, %p220
    %p222 = scmp.ne.s32.totalorder %s214, %s216
    %p223 = scmp.eq.s32.totalorder %s23, 1
    %p224 = por %p222, %p223
    %p225 = scmp.ne.s32.totalorder %s216, %s217
    %p226 = scmp.eq.s32.totalorder %s23, 0
    %p227 = por %p225, %p226
    %p228 = scmp.ne.s32.totalorder %s216, %s217
    %p229 = scmp.eq.s32.totalorder %s24, 1
    %p230 = por %p228, %p229
    %p232 = scmp.ne.s32.totalorder %s217, %s231
    %p233 = scmp.eq.s32.totalorder %s24, 0
    %p234 = por %p232, %p233
    %s236 = sadd.s32 %s235, 1
    %p239 = scmp.eq.s32.totalorder %s18, 1
    %p240 = scmp.ne.s32.totalorder %s235, %s237
    %p241 = scmp.eq.s32.totalorder %s18, 0
    %p242 = por %p240, %p241
    %p243 = scmp.ne.s32.totalorder %s235, %s237
    %p244 = scmp.eq.s32.totalorder %s23, 1
    %p245 = por %p243, %p244
    %p246 = scmp.ne.s32.totalorder %s237, %s238
    %p247 = scmp.eq.s32.totalorder %s23, 0
    %p248 = por %p246, %p247
    %p249 = scmp.ne.s32.totalorder %s237, %s238
    %p250 = scmp.eq.s32.totalorder %s24, 1
    %p251 = por %p249, %p250
    %p253 = scmp.ne.s32.totalorder %s238, %s252
    %p254 = scmp.eq.s32.totalorder %s24, 0
    %p255 = por %p253, %p254
    %s256 = ssub.s32 %s18, %s25
    %p257 = scmp.eq.s32.totalorder %s256, 0
    %s259 = sadd.s32 %s258, 1
    %s260 = scalar_select %p257, %s258, %s259
    %p263 = pneg %p257
    %p264 = scmp.eq.s32.totalorder %s18, 1
    %p265 = por %p263, %p264
    %p266 = scmp.ne.s32.totalorder %s258, %s261
    %p267 = scmp.eq.s32.totalorder %s18, 0
    %p268 = por %p266, %p267
    %p269 = scmp.ne.s32.totalorder %s258, %s261
    %p270 = scmp.eq.s32.totalorder %s23, 1
    %p271 = por %p269, %p270
    %p272 = scmp.ne.s32.totalorder %s261, %s262
    %p273 = scmp.eq.s32.totalorder %s23, 0
    %p274 = por %p272, %p273
    %p275 = scmp.ne.s32.totalorder %s261, %s262
    %p276 = scmp.eq.s32.totalorder %s24, 1
    %p277 = por %p275, %p276
    %p279 = scmp.ne.s32.totalorder %s262, %s278
    %p280 = scmp.eq.s32.totalorder %s24, 0
    %p281 = por %p279, %p280
    %s282 = ssub.s32 %s18, %s25
    %p283 = scmp.eq.s32.totalorder %s282, 0
    %s285 = sadd.s32 %s284, 1
    %s286 = scalar_select %p283, %s284, %s285
    %p289 = pneg %p283
    %p290 = scmp.eq.s32.totalorder %s18, 1
    %p291 = por %p289, %p290
    %p292 = scmp.ne.s32.totalorder %s284, %s287
    %p293 = scmp.eq.s32.totalorder %s18, 0
    %p294 = por %p292, %p293
    %p295 = scmp.ne.s32.totalorder %s284, %s287
    %p296 = scmp.eq.s32.totalorder %s23, 1
    %p297 = por %p295, %p296
    %p298 = scmp.ne.s32.totalorder %s287, %s288
    %p299 = scmp.eq.s32.totalorder %s23, 0
    %p300 = por %p298, %p299
    %p301 = scmp.ne.s32.totalorder %s287, %s288
    %p302 = scmp.eq.s32.totalorder %s24, 1
    %p303 = por %p301, %p302
    %p305 = scmp.ne.s32.totalorder %s288, %s304
    %p306 = scmp.eq.s32.totalorder %s24, 0
    %p307 = por %p305, %p306
    %p308 = scmp.le.s32.totalorder 1, %s18
    %p309 = scmp.lt.s32.totalorder %s18, 3
    %p310 = pnand %p308, %p309
    %p311 = pneg %p310
    // Predicated region
    $region9: #{trade_forward.1} parent=5 // pred_check
      _
    $region10: #{trade_forward.1} parent=5 // pred_check_branch
      %313 = sbr.rel (%p310) target = $region12
    $region11: #{trade_forward.1} parent=5 // pred_region
      %s314 = ssub.s32 %s18, 1
      // Predicated region
      $region13: #{trade_forward.1} parent=11 // pred_check
        %p315 = pneg %p143
      $region14: #{trade_forward.1} parent=11 // pred_check_branch
        %317 = sbr.rel (%p315) target = $region16
      $region15: #{trade_forward.1} parent=11 // pred_region
        _
      $region16: #{trade_forward.1} parent=11 // pred_fallthru
        _
      // Predicated region
      $region17: #{trade_forward.1} parent=11 // pred_check
        %p318 = pneg %p164
      $region18: #{trade_forward.1} parent=11 // pred_check_branch
        %320 = sbr.rel (%p318) target = $region20
      $region19: #{trade_forward.1} parent=11 // pred_region
        _
      $region20: #{trade_forward.1} parent=11 // pred_fallthru
        _
      // Predicated region
      $region21: #{trade_forward.1} parent=11 // pred_check
        %p321 = pneg %p185
      $region22: #{trade_forward.1} parent=11 // pred_check_branch
        %323 = sbr.rel (%p321) target = $region24
      $region23: #{trade_forward.1} parent=11 // pred_region
        _
      $region24: #{trade_forward.1} parent=11 // pred_fallthru
        _
      // Predicated region
      $region25: #{trade_forward.1} parent=11 // pred_check
        %p324 = pneg %p206
      $region26: #{trade_forward.1} parent=11 // pred_check_branch
        %326 = sbr.rel (%p324) target = $region28
      $region27: #{trade_forward.1} parent=11 // pred_region
        _
      $region28: #{trade_forward.1} parent=11 // pred_fallthru
        _
      // Predicated region
      $region29: #{trade_forward.1} parent=11 // pred_check
        %p327 = pneg %p227
      $region30: #{trade_forward.1} parent=11 // pred_check_branch
        %329 = sbr.rel (%p327) target = $region32
      $region31: #{trade_forward.1} parent=11 // pred_region
        _
      $region32: #{trade_forward.1} parent=11 // pred_fallthru
        _
      // Predicated region
      $region33: #{trade_forward.1} parent=11 // pred_check
        %p330 = pneg %p248
      $region34: #{trade_forward.1} parent=11 // pred_check_branch
        %332 = sbr.rel (%p330) target = $region36
      $region35: #{trade_forward.1} parent=11 // pred_region
        _
      $region36: #{trade_forward.1} parent=11 // pred_fallthru
        _
    $region12: #{trade_forward.1} parent=5 // pred_fallthru
      _
    %p333 = scmp.lt.s32.totalorder %s18, 2
    // Predicated region
    $region37: #{trade_forward.1} parent=5 // pred_check
      %p334 = pneg %p333
    $region38: #{trade_forward.1} parent=5 // pred_check_branch
      %336 = sbr.rel (%p334) target = $region40
    $region39: #{trade_forward.1} parent=5 // pred_region
      // Predicated region
      $region41: #{trade_forward.1} parent=39 // pred_check
        %p337 = pneg %p38
      $region42: #{trade_forward.1} parent=39 // pred_check_branch
        %339 = sbr.rel (%p337) target = $region44
      $region43: #{trade_forward.1} parent=39 // pred_region
        %p340 = scmp.lt.s32.totalorder %s18, 1
        %s341 = scalar_select %p340, %s18, 1
        %s342 = smul.addr %s341, 16
        %s343 = smul.addr %s342, 4
        %s344 = scalar_lea.vmem %s0, %s343
      $region44: #{trade_forward.1} parent=39 // pred_fallthru
        _
      // Predicated region
      $region45: #{trade_forward.1} parent=39 // pred_check
        %p345 = pneg %p64
      $region46: #{trade_forward.1} parent=39 // pred_check_branch
        %347 = sbr.rel (%p345) target = $region48
      $region47: #{trade_forward.1} parent=39 // pred_region
        %p348 = scmp.lt.s32.totalorder %s18, 1
        %s349 = scalar_select %p348, %s18, 1
        %s350 = smul.addr %s349, 16
        %s351 = smul.addr %s350, 8
        %s352 = scalar_lea.vmem %s1, %s351
      $region48: #{trade_forward.1} parent=39 // pred_fallthru
        _
      // Predicated region
      $region49: #{trade_forward.1} parent=39 // pred_check
        %p353 = pneg %p90
      $region50: #{trade_forward.1} parent=39 // pred_check_branch
        %355 = sbr.rel (%p353) target = $region52
      $region51: #{trade_forward.1} parent=39 // pred_region
        %p356 = scmp.lt.s32.totalorder %s18, 1
        %s357 = scalar_select %p356, %s18, 1
        %s358 = scalar_lea.vmem %s2, %s357
      $region52: #{trade_forward.1} parent=39 // pred_fallthru
        _
      // Predicated region
      $region53: #{trade_forward.1} parent=39 // pred_check
        %p359 = pneg %p116
      $region54: #{trade_forward.1} parent=39 // pred_check_branch
        %361 = sbr.rel (%p359) target = $region56
      $region55: #{trade_forward.1} parent=39 // pred_region
        %p362 = scmp.lt.s32.totalorder %s18, 1
        %s363 = scalar_select %p362, %s18, 1
        %s364 = scalar_lea.vmem %s3, %s363
      $region56: #{trade_forward.1} parent=39 // pred_fallthru
        _
    $region40: #{trade_forward.1} parent=5 // pred_fallthru
      _
    %p365 = scmp.le.s32.totalorder 1, %s18
    %p366 = scmp.lt.s32.totalorder %s18, 3
    %p367 = pnand %p365, %p366
    %p368 = pneg %p367
    // Predicated region
    $region57: #{trade_forward.1} parent=5 // pred_check
      _
    $region58: #{trade_forward.1} parent=5 // pred_check_branch
      %370 = sbr.rel (%p367) target = $region60
    $region59: #{trade_forward.1} parent=5 // pred_region
      %s371 = ssub.s32 %s18, 1
      %p372 = scmp.lt.s32.totalorder %s23, 1
      %s373 = scalar_select %p372, %s23, 1
      %s374 = smul.addr %s373, 16
      %s375 = smul.addr %s374, 4
      %s376 = scalar_lea.vmem %s0, %s375
      %p377 = pneg %p44
      %p378 = pneg %p41
      %p379 = scmp.lt.s32.totalorder %s23, 1
      %s380 = scalar_select %p379, %s23, 1
      %s381 = smul.addr %s380, 16
      %s382 = smul.addr %s381, 8
      %s383 = scalar_lea.vmem %s1, %s382
      %p384 = pneg %p70
      %p385 = pneg %p67
      %p386 = scmp.lt.s32.totalorder %s23, 1
      %s387 = scalar_select %p386, %s23, 1
      %s388 = scalar_lea.vmem %s2, %s387
      %p389 = pneg %p96
      %p390 = pneg %p93
      %p391 = scmp.lt.s32.totalorder %s23, 1
      %s392 = scalar_select %p391, %s23, 1
      %s393 = scalar_lea.vmem %s3, %s392
      %p394 = pneg %p122
      %p395 = pneg %p119
      %p396 = pneg %p143
      %p397 = pneg %p140
      %p398 = pneg %p164
      %p399 = pneg %p161
      %p400 = pneg %p185
      %p401 = pneg %p182
      %p402 = pneg %p206
      %p403 = pneg %p203
      %p404 = pneg %p227
      %p405 = pneg %p224
      %p406 = pneg %p248
      %p407 = pneg %p245
      %p408 = pneg %p274
      %p409 = pneg %p271
      %p410 = scmp.lt.s32.totalorder %s23, 1
      %s411 = scalar_select %p410, %s23, 1
      %s412 = smul.addr %s411, 4
      %s413 = smul.addr %s412, 8
      %s414 = scalar_lea.vmem %s10, %s413
      %p415 = pneg %p300
      %p416 = pneg %p297
      %p417 = scmp.lt.s32.totalorder %s23, 1
      %s418 = scalar_select %p417, %s23, 1
      %s419 = smul.addr %s418, 8
      %s420 = scalar_lea.vmem %s11, %s419
      %p421 = scmp.lt.s32.totalorder %s23, 1
      %s422 = scalar_select %p421, %s23, 1
      %s423 = smul.addr %s422, 16
      %s424 = smul.addr %s423, 4
      %s425 = scalar_lea.vmem %s0, %s424
      %p426 = scmp.lt.s32.totalorder %s23, 1
      %s427 = scalar_select %p426, %s23, 1
      %s428 = smul.addr %s427, 16
      %s429 = smul.addr %s428, 8
      %s430 = scalar_lea.vmem %s1, %s429
      %p431 = scmp.lt.s32.totalorder %s23, 1
      %s432 = scalar_select %p431, %s23, 1
      %s433 = scalar_lea.vmem %s2, %s432
      %p434 = scmp.lt.s32.totalorder %s23, 1
      %s435 = scalar_select %p434, %s23, 1
      %s436 = scalar_lea.vmem %s3, %s435
      %p437 = scmp.lt.s32.totalorder %s23, 1
      %s438 = scalar_select %p437, %s23, 1
      %s439 = smul.addr %s438, 4
      %s440 = smul.addr %s439, 8
      %s441 = scalar_lea.vmem %s10, %s440
      %p442 = scmp.lt.s32.totalorder %s23, 1
      %s443 = scalar_select %p442, %s23, 1
      %s444 = smul.addr %s443, 8
      %s445 = scalar_lea.vmem %s11, %s444
      %v447 = vld [vmem:[%s425] sm:$0xf]
      %v448 = vld [vmem:[%s425 + $0x4] sm:$0xf]
      %v449 = vld [vmem:[%s425 + $0x8] sm:$0xf]
      %v450 = vld [vmem:[%s425 + $0xc] sm:$0xf]
      %v451 = vld [vmem:[%s425 + $0x10] sm:$0xf]
      %v452 = vld [vmem:[%s425 + $0x14] sm:$0xf]
      %v453 = vld [vmem:[%s425 + $0x18] sm:$0xf]
      %v454 = vld [vmem:[%s425 + $0x1c] sm:$0xf]
      %v455 = vld [vmem:[%s425 + $0x20] sm:$0xf]
      %v456 = vld [vmem:[%s425 + $0x24] sm:$0xf]
      %v457 = vld [vmem:[%s425 + $0x28] sm:$0xf]
      %v458 = vld [vmem:[%s425 + $0x2c] sm:$0xf]
      %v459 = vld [vmem:[%s425 + $0x30] sm:$0xf]
      %v460 = vld [vmem:[%s425 + $0x34] sm:$0xf]
      %v461 = vld [vmem:[%s425 + $0x38] sm:$0xf]
      %v462 = vld [vmem:[%s425 + $0x3c] sm:$0xf]
      %v463 = vld [vmem:[%s430] sm:$0xff]
      %v464 = vld [vmem:[%s430 + $0x8] sm:$0xff]
      %v465 = vld [vmem:[%s430 + $0x10] sm:$0xff]
      %v466 = vld [vmem:[%s430 + $0x18] sm:$0xff]
      %v467 = vld [vmem:[%s430 + $0x20] sm:$0xff]
      %v468 = vld [vmem:[%s430 + $0x28] sm:$0xff]
      %v469 = vld [vmem:[%s430 + $0x30] sm:$0xff]
      %v470 = vld [vmem:[%s430 + $0x38] sm:$0xff]
      %v471 = vld [vmem:[%s430 + $0x40] sm:$0xff]
      %v472 = vld [vmem:[%s430 + $0x48] sm:$0xff]
      %v473 = vld [vmem:[%s430 + $0x50] sm:$0xff]
      %v474 = vld [vmem:[%s430 + $0x58] sm:$0xff]
      %v475 = vld [vmem:[%s430 + $0x60] sm:$0xff]
      %v476 = vld [vmem:[%s430 + $0x68] sm:$0xff]
      %v477 = vld [vmem:[%s430 + $0x70] sm:$0xff]
      %v478 = vld [vmem:[%s430 + $0x78] sm:$0xff]
      %v479 = vld [vmem:[%s433] sm:$0x1]
      %v480 = vld [vmem:[%s5] sm:$0xf]
      %v481 = vld [vmem:[%s5 + $0x4] sm:$0xf]
      %v482 = vld [vmem:[%s5 + $0x8] sm:$0xf]
      %v483 = vld [vmem:[%s5 + $0xc] sm:$0xf]
      %v484 = vld [vmem:[%s5 + $0x10] sm:$0xf]
      %v485 = vld [vmem:[%s5 + $0x14] sm:$0xf]
      %v486 = vld [vmem:[%s5 + $0x18] sm:$0xf]
      %v487 = vld [vmem:[%s5 + $0x1c] sm:$0xf]
      %v488 = vld [vmem:[%s5 + $0x20] sm:$0xf]
      %v489 = vld [vmem:[%s5 + $0x24] sm:$0xf]
      %v490 = vld [vmem:[%s5 + $0x28] sm:$0xf]
      %v491 = vld [vmem:[%s5 + $0x2c] sm:$0xf]
      %v492 = vld [vmem:[%s5 + $0x30] sm:$0xf]
      %v493 = vld [vmem:[%s5 + $0x34] sm:$0xf]
      %v494 = vld [vmem:[%s5 + $0x38] sm:$0xf]
      %v495 = vld [vmem:[%s5 + $0x3c] sm:$0xf]
      %v496 = vld [vmem:[%s6] sm:$0xf]
      %v497 = vld [vmem:[%s6 + $0x4] sm:$0xf]
      %v498 = vld [vmem:[%s6 + $0x8] sm:$0xf]
      %v499 = vld [vmem:[%s6 + $0xc] sm:$0xf]
      %v500 = vld [vmem:[%s7] sm:$0xf]
      %v501 = vld [vmem:[%s7 + $0x4] sm:$0xf]
      %v502 = vld [vmem:[%s7 + $0x8] sm:$0xf]
      %v503 = vld [vmem:[%s7 + $0xc] sm:$0xf]
      %v504 = vld [vmem:[%s9] sm:$0xf]
      %v505 = vld [vmem:[%s9 + $0x4] sm:$0xf]
      %v506 = vld [vmem:[%s9 + $0x8] sm:$0xf]
      %v507 = vld [vmem:[%s9 + $0xc] sm:$0xf]
      %v508 = vld [vmem:[%s8] sm:$0xff]
      %v509 = vlaneseq
      %v510 = vand.u32 %v509, 127
      %v511 = vcvt.s32.f32 %v510
      %vm512 = vcmp.lt.s32.totalorder %v510, 100
      %v513 = vsel %vm512, 0.0, -1e+09
      %vm514 = vcmp.gt.f32.partialorder %v479, 0.5
      %v515 = vsel %vm514, 1, 0
      %v516 = vlaneseq
      %v517 = vshrl.u32 %v516, 7
      %v518 = vsub.s32 0, %v517
      %v519 = vrot.slane %v515, %v518
      %vm520 = vcmp.eq.s32.totalorder %v519, 1
      %521 = vset.pattern.permute.xlu0 0
      %522 = vperm.xlu0 %521, %v463
      %v523 = vpop.permute.xlu0 %522
      %524 = vset.pattern.permute.xlu0 0
      %525 = vperm.xlu0 %524, %v464
      %v526 = vpop.permute.xlu0 %525
      %527 = vset.pattern.permute.xlu0 0
      %528 = vperm.xlu0 %527, %v465
      %v529 = vpop.permute.xlu0 %528
      %530 = vset.pattern.permute.xlu0 0
      %531 = vperm.xlu0 %530, %v466
      %v532 = vpop.permute.xlu0 %531
      %533 = vset.pattern.permute.xlu0 0
      %534 = vperm.xlu0 %533, %v467
      %v535 = vpop.permute.xlu0 %534
      %536 = vset.pattern.permute.xlu0 0
      %537 = vperm.xlu0 %536, %v468
      %v538 = vpop.permute.xlu0 %537
      %539 = vset.pattern.permute.xlu0 0
      %540 = vperm.xlu0 %539, %v469
      %v541 = vpop.permute.xlu0 %540
      %542 = vset.pattern.permute.xlu0 0
      %543 = vperm.xlu0 %542, %v470
      %v544 = vpop.permute.xlu0 %543
      %545 = vset.pattern.permute.xlu0 0
      %546 = vperm.xlu0 %545, %v471
      %v547 = vpop.permute.xlu0 %546
      %548 = vset.pattern.permute.xlu0 0
      %549 = vperm.xlu0 %548, %v472
      %v550 = vpop.permute.xlu0 %549
      %551 = vset.pattern.permute.xlu0 0
      %552 = vperm.xlu0 %551, %v473
      %v553 = vpop.permute.xlu0 %552
      %554 = vset.pattern.permute.xlu0 0
      %555 = vperm.xlu0 %554, %v474
      %v556 = vpop.permute.xlu0 %555
      %557 = vset.pattern.permute.xlu0 0
      %558 = vperm.xlu0 %557, %v475
      %v559 = vpop.permute.xlu0 %558
      %560 = vset.pattern.permute.xlu0 0
      %561 = vperm.xlu0 %560, %v476
      %v562 = vpop.permute.xlu0 %561
      %563 = vset.pattern.permute.xlu0 0
      %564 = vperm.xlu0 %563, %v477
      %v565 = vpop.permute.xlu0 %564
      %566 = vset.pattern.permute.xlu0 0
      %567 = vperm.xlu0 %566, %v478
      %v568 = vpop.permute.xlu0 %567
      %vm569 = vcmp.eq.s32.totalorder %v523, %v510
      %vm570 = vcmp.eq.s32.totalorder %v526, %v510
      %vm571 = vcmp.eq.s32.totalorder %v529, %v510
      %vm572 = vcmp.eq.s32.totalorder %v532, %v510
      %vm573 = vcmp.eq.s32.totalorder %v535, %v510
      %vm574 = vcmp.eq.s32.totalorder %v538, %v510
      %vm575 = vcmp.eq.s32.totalorder %v541, %v510
      %vm576 = vcmp.eq.s32.totalorder %v544, %v510
      %vm577 = vcmp.eq.s32.totalorder %v547, %v510
      %vm578 = vcmp.eq.s32.totalorder %v550, %v510
      %vm579 = vcmp.eq.s32.totalorder %v553, %v510
      %vm580 = vcmp.eq.s32.totalorder %v556, %v510
      %vm581 = vcmp.eq.s32.totalorder %v559, %v510
      %vm582 = vcmp.eq.s32.totalorder %v562, %v510
      %vm583 = vcmp.eq.s32.totalorder %v565, %v510
      %vm584 = vcmp.eq.s32.totalorder %v568, %v510
      %v585 = vsel %vm569, 1, 0
      %v586 = vsel %vm570, 1, 0
      %v587 = vsel %vm571, 1, 0
      %v588 = vsel %vm572, 1, 0
      %v589 = vsel %vm573, 1, 0
      %v590 = vsel %vm574, 1, 0
      %v591 = vsel %vm575, 1, 0
      %v592 = vsel %vm576, 1, 0
      %v593 = vsel %vm577, 1, 0
      %v594 = vsel %vm578, 1, 0
      %v595 = vsel %vm579, 1, 0
      %v596 = vsel %vm580, 1, 0
      %v597 = vsel %vm581, 1, 0
      %v598 = vsel %vm582, 1, 0
      %v599 = vsel %vm583, 1, 0
      %v600 = vsel %vm584, 1, 0
      %v601 = vcvt.s32.f32 %v585
      %v602 = vcvt.s32.f32 %v586
      %v603 = vcvt.s32.f32 %v587
      %v604 = vcvt.s32.f32 %v588
      %v605 = vcvt.s32.f32 %v589
      %v606 = vcvt.s32.f32 %v590
      %v607 = vcvt.s32.f32 %v591
      %v608 = vcvt.s32.f32 %v592
      %v609 = vcvt.s32.f32 %v593
      %v610 = vcvt.s32.f32 %v594
      %v611 = vcvt.s32.f32 %v595
      %v612 = vcvt.s32.f32 %v596
      %v613 = vcvt.s32.f32 %v597
      %v614 = vcvt.s32.f32 %v598
      %v615 = vcvt.s32.f32 %v599
      %v616 = vcvt.s32.f32 %v600
      %v617 = vpack.c.bf16 %v602, %v601
      %v618 = vpack.c.bf16 %v604, %v603
      %v619 = vpack.c.bf16 %v606, %v605
      %v620 = vpack.c.bf16 %v608, %v607
      %v621 = vpack.c.bf16 %v610, %v609
      %v622 = vpack.c.bf16 %v612, %v611
      %v623 = vpack.c.bf16 %v614, %v613
      %v624 = vpack.c.bf16 %v616, %v615
      %v641 = vunpack.c.l.b16 %v480
      %v642 = vunpack.c.l.b16 %v481
      %v643 = vunpack.c.l.b16 %v482
      %v644 = vunpack.c.l.b16 %v483
      %v645 = vunpack.c.l.b16 %v484
      %v646 = vunpack.c.l.b16 %v485
      %v647 = vunpack.c.l.b16 %v486
      %v648 = vunpack.c.l.b16 %v487
      %v649 = vunpack.c.l.b16 %v488
      %v650 = vunpack.c.l.b16 %v489
      %v651 = vunpack.c.l.b16 %v490
      %v652 = vunpack.c.l.b16 %v491
      %v653 = vunpack.c.l.b16 %v492
      %v654 = vunpack.c.l.b16 %v493
      %v655 = vunpack.c.l.b16 %v494
      %v656 = vunpack.c.l.b16 %v495
      %v657 = vpack.c.b16 %v642, %v641
      %v658 = vpack.c.b16 %v644, %v643
      %v659 = vpack.c.b16 %v646, %v645
      %v660 = vpack.c.b16 %v648, %v647
      %v661 = vpack.c.b16 %v650, %v649
      %v662 = vpack.c.b16 %v652, %v651
      %v663 = vpack.c.b16 %v654, %v653
      %v664 = vpack.c.b16 %v656, %v655
      %v681 = vunpack.c.l.b16 %v447
      %v682 = vunpack.c.l.b16 %v448
      %v683 = vunpack.c.l.b16 %v449
      %v684 = vunpack.c.l.b16 %v450
      %v685 = vunpack.c.l.b16 %v451
      %v686 = vunpack.c.l.b16 %v452
      %v687 = vunpack.c.l.b16 %v453
      %v688 = vunpack.c.l.b16 %v454
      %v689 = vunpack.c.l.b16 %v455
      %v690 = vunpack.c.l.b16 %v456
      %v691 = vunpack.c.l.b16 %v457
      %v692 = vunpack.c.l.b16 %v458
      %v693 = vunpack.c.l.b16 %v459
      %v694 = vunpack.c.l.b16 %v460
      %v695 = vunpack.c.l.b16 %v461
      %v696 = vunpack.c.l.b16 %v462
      %v697 = vpack.c.b16 %v682, %v681
      %v698 = vpack.c.b16 %v684, %v683
      %v699 = vpack.c.b16 %v686, %v685
      %v700 = vpack.c.b16 %v688, %v687
      %v701 = vpack.c.b16 %v690, %v689
      %v702 = vpack.c.b16 %v692, %v691
      %v703 = vpack.c.b16 %v694, %v693
      %v704 = vpack.c.b16 %v696, %v695
      %v713 = vlaneseq
      %v714 = vshrl.u32 %v713, 7
      %v715 = vsub.s32 0, %v714
      %v716 = vrot.slane %v508, %v715
      %v717 = vlaneseq
      %v718 = vshrl.u32 %v717, 7
      %v719 = vsub.s32 1, %v718
      %v720 = vrot.slane %v508, %v719
      %v721 = vlaneseq
      %v722 = vshrl.u32 %v721, 7
      %v723 = vsub.s32 2, %v722
      %v724 = vrot.slane %v508, %v723
      %v725 = vlaneseq
      %v726 = vshrl.u32 %v725, 7
      %v727 = vsub.s32 3, %v726
      %v728 = vrot.slane %v508, %v727
      %v729 = vlaneseq
      %v730 = vshrl.u32 %v729, 7
      %v731 = vsub.s32 4, %v730
      %v732 = vrot.slane %v508, %v731
      %v733 = vlaneseq
      %v734 = vshrl.u32 %v733, 7
      %v735 = vsub.s32 5, %v734
      %v736 = vrot.slane %v508, %v735
      %v737 = vlaneseq
      %v738 = vshrl.u32 %v737, 7
      %v739 = vsub.s32 6, %v738
      %v740 = vrot.slane %v508, %v739
      %v741 = vld [vmem:[%s4] sm:$0xff]
      %v742 = vld [vmem:[%s436] sm:$0x1]
      %v744 = vlaneseq
      %v745 = vshrl.u32 %v744, 7
      %v746 = vsub.s32 0, %v745
      %v747 = vrot.slane %v742, %v746
      %v749 = vpack.c.bf16 %v741, %v741
      %v750 = vpack.c.bf16 %v747, %v747
      %v755 = vunpack.c.l.b16 %v496
      %v756 = vunpack.c.l.b16 %v497
      %v757 = vunpack.c.l.b16 %v498
      %v758 = vunpack.c.l.b16 %v499
      %v759 = vpack.c.b16 %v756, %v755
      %v760 = vpack.c.b16 %v758, %v757
      %vm763 = vcmask 261120
      %v765 = vsel %vm763, %v749, 0
      %767 = vmatprep.subr.bf16.mxu0 0
      %768 = vmatpush1.bf16.msra.mxu0 %v759
      %769 = vmatprep.subr.bf16.mxu0 0
      %770 = vmatpush1.bf16.msra.mxu0 %v760
      %771 = vmatprep.subr.bf16.mxu0 0
      %772 = vmatpush1.bf16.msra.mxu0 0
      %773 = vmatprep.subr.bf16.mxu0 0
      %774 = vmatpush1.bf16.msra.mxu0 0
      %775 = vmatprep.subr.bf16.mxu0 0
      %776 = vmatpush1.bf16.msra.mxu0 0
      %777 = vmatprep.subr.bf16.mxu0 0
      %778 = vmatpush1.bf16.msra.mxu0 0
      %779 = vmatprep.subr.bf16.mxu0 0
      %780 = vmatpush1.bf16.msra.mxu0 0
      %781 = vmatprep.subr.bf16.mxu0 0
      %782 = vmatpush1.bf16.msra.mxu0 0
      %783 = vmatprep.subr.bf16.mxu0 0
      %784 = vmatpush1.bf16.msra.mxu0 0
      %785 = vmatprep.subr.bf16.mxu0 0
      %786 = vmatpush1.bf16.msra.mxu0 0
      %787 = vmatprep.subr.bf16.mxu0 0
      %788 = vmatpush1.bf16.msra.mxu0 0
      %789 = vmatprep.subr.bf16.mxu0 0
      %790 = vmatpush1.bf16.msra.mxu0 0
      %791 = vmatprep.subr.bf16.mxu0 0
      %792 = vmatpush1.bf16.msra.mxu0 0
      %793 = vmatprep.subr.bf16.mxu0 0
      %794 = vmatpush1.bf16.msra.mxu0 0
      %795 = vmatprep.subr.bf16.mxu0 0
      %796 = vmatpush1.bf16.msra.mxu0 0
      %797 = vmatprep.subr.bf16.mxu0 0
      %798 = vmatpush1.bf16.msra.mxu0 0
      %799 = vmatprep.mubr.bf16.mxu0 0
      %800 = vmatmul.mubr.bf16.gmra.mrb[0].mxu0 %v765
      %v801 = vpop.f32.mrb[0].mxu0
      %v802 = vadd.f32 %v716, %v801
      %v803 = vpop.f32.mrb[0].mxu0
      %v804 = vpop.f32.mrb[0].mxu0
      %v805 = vpop.f32.mrb[0].mxu0
      %806 = vdwg.mxu0
      %v811 = vunpack.c.l.b16 %v500
      %v812 = vunpack.c.l.b16 %v501
      %v813 = vunpack.c.l.b16 %v502
      %v814 = vunpack.c.l.b16 %v503
      %v815 = vpack.c.b16 %v812, %v811
      %v816 = vpack.c.b16 %v814, %v813
      %v820 = vsel %vm763, %v750, 0
      %822 = vmatprep.subr.bf16.mxu0 0
      %823 = vmatpush1.bf16.msra.mxu0 %v815
      %824 = vmatprep.subr.bf16.mxu0 0
      %825 = vmatpush1.bf16.msra.mxu0 %v816
      %826 = vmatprep.subr.bf16.mxu0 0
      %827 = vmatpush1.bf16.msra.mxu0 0
      %828 = vmatprep.subr.bf16.mxu0 0
      %829 = vmatpush1.bf16.msra.mxu0 0
      %830 = vmatprep.subr.bf16.mxu0 0
      %831 = vmatpush1.bf16.msra.mxu0 0
      %832 = vmatprep.subr.bf16.mxu0 0
      %833 = vmatpush1.bf16.msra.mxu0 0
      %834 = vmatprep.subr.bf16.mxu0 0
      %835 = vmatpush1.bf16.msra.mxu0 0
      %836 = vmatprep.subr.bf16.mxu0 0
      %837 = vmatpush1.bf16.msra.mxu0 0
      %838 = vmatprep.subr.bf16.mxu0 0
      %839 = vmatpush1.bf16.msra.mxu0 0
      %840 = vmatprep.subr.bf16.mxu0 0
      %841 = vmatpush1.bf16.msra.mxu0 0
      %842 = vmatprep.subr.bf16.mxu0 0
      %843 = vmatpush1.bf16.msra.mxu0 0
      %844 = vmatprep.subr.bf16.mxu0 0
      %845 = vmatpush1.bf16.msra.mxu0 0
      %846 = vmatprep.subr.bf16.mxu0 0
      %847 = vmatpush1.bf16.msra.mxu0 0
      %848 = vmatprep.subr.bf16.mxu0 0
      %849 = vmatpush1.bf16.msra.mxu0 0
      %850 = vmatprep.subr.bf16.mxu0 0
      %851 = vmatpush1.bf16.msra.mxu0 0
      %852 = vmatprep.subr.bf16.mxu0 0
      %853 = vmatpush1.bf16.msra.mxu0 0
      %854 = vmatprep.mubr.bf16.mxu0 0
      %855 = vmatmul.mubr.bf16.gmra.mrb[0].mxu0 %v820
      %v856 = vpop.f32.mrb[0].mxu0
      %v857 = vadd.f32 %v720, %v856
      %v858 = vpop.f32.mrb[0].mxu0
      %v859 = vpop.f32.mrb[0].mxu0
      %v860 = vpop.f32.mrb[0].mxu0
      %861 = vdwg.mxu0
      %v862 = vadd.f32 %v802, %v857
      %v863 = vxor.u32 %v862, 2147483648
      %v864 = vmul.f32 %v863, 1.442695
      %v865 = vpow.pop %v864
      %v866 = vadd.f32 %v865, 1.0
      %v867 = vrcp.pop %v866
      %v868 = vmul.f32 1.0, %v867
      %870 = vrot.lane.b32.xlu0 %v857, 64
      %v871 = vpop.permute.xlu0 %870
      %v873 = vmul.f32 %v868, %v871
      %875 = vrot.lane.b32.xlu0 %v873, 64
      %v876 = vpop.permute.xlu0 %875
      %v878 = vadd.f32 %v802, %v876
      %v879 = vtanh.pop %v878
      %v880 = vsub.f32 1.0, %v868
      %882 = vrot.lane.b32.xlu0 %v879, 96
      %v883 = vpop.permute.xlu0 %882
      %v885 = vmul.f32 %v880, %v883
      %886 = vrot.lane.b32.xlu0 %v747, 32
      %v887 = vpop.permute.xlu0 %886
      %v889 = vmul.f32 %v868, %v887
      %v890 = vadd.f32 %v885, %v889
      %v891 = vpack.c.bf16 %v890, %v890
      %893 = vrot.lane.b32.xlu0 %v891, 96
      %v894 = vpop.permute.xlu0 %893
      %v896 = vsel %vm763, %v894, 0
      %v899 = vsel %vm763, %v657, 0
      %v902 = vsel %vm763, %v658, 0
      %v905 = vsel %vm763, %v659, 0
      %v908 = vsel %vm763, %v660, 0
      %v911 = vsel %vm763, %v661, 0
      %v914 = vsel %vm763, %v662, 0
      %v917 = vsel %vm763, %v663, 0
      %v920 = vsel %vm763, %v664, 0
      %v923 = vsel %vm763, %v697, 0
      %v926 = vsel %vm763, %v698, 0
      %v929 = vsel %vm763, %v699, 0
      %v932 = vsel %vm763, %v700, 0
      %v935 = vsel %vm763, %v701, 0
      %v938 = vsel %vm763, %v702, 0
      %v941 = vsel %vm763, %v703, 0
      %v944 = vsel %vm763, %v704, 0
      %946 = vmatprep.subr.bf16.mxu0 0
      %947 = vmatpush1.bf16.xpose.msra.mxu0 %v899
      %948 = vmatprep.subr.bf16.mxu0 0
      %949 = vmatpush1.bf16.xpose.msra.mxu0 %v902
      %950 = vmatprep.subr.bf16.mxu0 0
      %951 = vmatpush1.bf16.xpose.msra.mxu0 %v905
      %952 = vmatprep.subr.bf16.mxu0 0
      %953 = vmatpush1.bf16.xpose.msra.mxu0 %v908
      %954 = vmatprep.subr.bf16.mxu0 0
      %955 = vmatpush1.bf16.xpose.msra.mxu0 %v911
      %956 = vmatprep.subr.bf16.mxu0 0
      %957 = vmatpush1.bf16.xpose.msra.mxu0 %v914
      %958 = vmatprep.subr.bf16.mxu0 0
      %959 = vmatpush1.bf16.xpose.msra.mxu0 %v917
      %960 = vmatprep.subr.bf16.mxu0 0
      %961 = vmatpush1.bf16.xpose.msra.mxu0 %v920
      %962 = vmatprep.subr.bf16.mxu0 0
      %963 = vmatpush1.bf16.xpose.msra.mxu0 %v923
      %964 = vmatprep.subr.bf16.mxu0 0
      %965 = vmatpush1.bf16.xpose.msra.mxu0 %v926
      %966 = vmatprep.subr.bf16.mxu0 0
      %967 = vmatpush1.bf16.xpose.msra.mxu0 %v929
      %968 = vmatprep.subr.bf16.mxu0 0
      %969 = vmatpush1.bf16.xpose.msra.mxu0 %v932
      %970 = vmatprep.subr.bf16.mxu0 0
      %971 = vmatpush1.bf16.xpose.msra.mxu0 %v935
      %972 = vmatprep.subr.bf16.mxu0 0
      %973 = vmatpush1.bf16.xpose.msra.mxu0 %v938
      %974 = vmatprep.subr.bf16.mxu0 0
      %975 = vmatpush1.bf16.xpose.msra.mxu0 %v941
      %976 = vmatprep.subr.bf16.mxu0 0
      %977 = vmatpush1.bf16.xpose.msra.mxu0 %v944
      %978 = vmatprep.mubr.bf16.mxu0 0
      %979 = vmatmul.mubr.bf16.gmra.mrb[0].mxu0 %v896
      %v980 = vpop.f32.mrb[0].mxu0
      %v981 = vadd.f32 0.0, %v980
      %v982 = vpop.f32.mrb[0].mxu0
      %v983 = vadd.f32 0.0, %v982
      %v984 = vpop.f32.mrb[0].mxu0
      %v985 = vpop.f32.mrb[0].mxu0
      %986 = vdwg.mxu0
      %v987 = vadd.f32 %v981, %v513
      %988 = vmax.xlane.f32.xlu0 %v987
      %v989 = vpop.xlane.xlu0 %988
      %v990 = vsub.f32 %v987, %v989
      %v991 = vmul.f32 %v990, 1.442695
      %v992 = vpow.pop %v991
      %993 = vadd.xlane.f32.xlu0 %v992
      %v994 = vpop.xlane.xlu0 %993
      %v995 = vrcp.pop %v994
      %v996 = vmul.f32 %v992, %v995
      %v997 = vsel %vm520, -10000.0, %v983
      %998 = vmax.xlane.f32.xlu0 %v997
      %v999 = vpop.xlane.xlu0 %998
      %v1000 = vsub.f32 %v997, %v999
      %v1001 = vmul.f32 %v1000, 1.442695
      %v1002 = vpow.pop %v1001
      %1003 = vadd.xlane.f32.xlu0 %v1002
      %v1004 = vpop.xlane.xlu0 %1003
      %v1005 = vrcp.pop %v1004
      %v1006 = vmul.f32 %v1002, %v1005
      %v1007 = vpack.c.bf16 %v1006, %v1006
      %1008 = vmatprep.subr.bf16.mxu0 %v697
      %1009 = vmatpush1.bf16.msra.mxu0 %v617
      %1010 = vmatprep.subr.bf16.mxu0 %v698
      %1011 = vmatpush1.bf16.msra.mxu0 %v618
      %1012 = vmatprep.subr.bf16.mxu0 %v699
      %1013 = vmatpush1.bf16.msra.mxu0 %v619
      %1014 = vmatprep.subr.bf16.mxu0 %v700
      %1015 = vmatpush1.bf16.msra.mxu0 %v620
      %1016 = vmatprep.subr.bf16.mxu0 %v701
      %1017 = vmatpush1.bf16.msra.mxu0 %v621
      %1018 = vmatprep.subr.bf16.mxu0 %v702
      %1019 = vmatpush1.bf16.msra.mxu0 %v622
      %1020 = vmatprep.subr.bf16.mxu0 %v703
      %1021 = vmatpush1.bf16.msra.mxu0 %v623
      %1022 = vmatprep.subr.bf16.mxu0 %v704
      %1023 = vmatpush1.bf16.msra.mxu0 %v624
      %1024 = vmatprep.subr.bf16.mxu0 0
      %1025 = vmatpush1.bf16.msra.mxu0 0
      %1026 = vmatprep.subr.bf16.mxu0 0
      %1027 = vmatpush1.bf16.msra.mxu0 0
      %1028 = vmatprep.subr.bf16.mxu0 0
      %1029 = vmatpush1.bf16.msra.mxu0 0
      %1030 = vmatprep.subr.bf16.mxu0 0
      %1031 = vmatpush1.bf16.msra.mxu0 0
      %1032 = vmatprep.subr.bf16.mxu0 0
      %1033 = vmatpush1.bf16.msra.mxu0 0
      %1034 = vmatprep.subr.bf16.mxu0 0
      %1035 = vmatpush1.bf16.msra.mxu0 0
      %1036 = vmatprep.subr.bf16.mxu0 0
      %1037 = vmatpush1.bf16.msra.mxu0 0
      %1038 = vmatprep.subr.bf16.mxu0 0
      %1039 = vmatpush1.bf16.msra.mxu0 0
      %1040 = vmatprep.mubr.bf16.mxu0 0
      %1041 = vmatmul.mubr.bf16.gmra.mrb[0].mxu0 %v1007
      %v1042 = vpop.f32.mrb[0].mxu0
      %v1043 = vadd.f32 0.0, %v1042
      %v1044 = vpop.f32.mrb[0].mxu0
      %v1045 = vadd.f32 0.0, %v1044
      %v1046 = vpop.f32.mrb[0].mxu0
      %v1047 = vpop.f32.mrb[0].mxu0
      %1048 = vdwg.mxu0
      %v1049 = vmul.f32 %v741, %v724
      %1051 = vrot.lane.b32.xlu0 %v728, 32
      %v1052 = vpop.permute.xlu0 %1051
      %v1054 = vmul.f32 %v890, %v1052
      %1056 = vrot.lane.b32.xlu0 %v1054, 96
      %v1057 = vpop.permute.xlu0 %1056
      %v1059 = vadd.f32 %v1049, %v1057
      %v1060 = vmul.f32 %v1045, %v732
      %v1061 = vadd.f32 %v1059, %v1060
      %v1062 = vsel %vm763, %v1061, 0.0
      %1063 = vadd.xlane.f32.xlu0 %v1062
      %v1064 = vpop.xlane.xlu0 %1063
      %v1065 = vadd.f32 %v1064, %v740
      %v1066 = vxor.u32 %v1065, 2147483648
      %v1067 = vmul.f32 %v1066, 1.442695
      %v1068 = vpow.pop %v1067
      %v1069 = vadd.f32 %v1068, 1.0
      %v1070 = vrcp.pop %v1069
      %v1071 = vmul.f32 1.0, %v1070
      %1073 = vset.pattern.permute.xlu0 0
      %1074 = vperm.xlu0 %1073, %v1071
      %v1075 = vpop.permute.xlu0 %1074
      %v1077 = vmul.f32 %v1075, %v996
      %v1078 = vsub.f32 1.0, %v1071
      %1080 = vset.pattern.permute.xlu0 0
      %1081 = vperm.xlu0 %1080, %v1078
      %v1082 = vpop.permute.xlu0 %1081
      %v1084 = vmul.f32 %v1082, %v1043
      %v1085 = vadd.f32 %v1077, %v1084
      %1086 = vst [vmem:[%s441] sm:$0xff] %v1085
      %1087 = vmax.xlane.f32.xlu0 %v1085
      %v1088 = vpop.xlane.xlu0 %1087
      %vm1089 = vcmp.ge.f32.partialorder %v1085, %v1088
      %v1090 = vsel %vm1089, %v511, 128.0
      %1091 = vmin.xlane.f32.xlu0 %v1090
      %v1092 = vpop.xlane.xlu0 %1091
      %vm1093 = vcmp.eq.f32.partialorder %v1092, %v511
      %v1094 = vsel %vm1093, 1, 0
      %v1095 = vcvt.s32.f32 %v1094
      %v1096 = vpack.c.bf16 %v1095, %v1095
      %1105 = vmatprep.subr.bf16.mxu0 0
      %1106 = vmatpush1.bf16.msra.mxu0 %v657
      %1107 = vmatprep.subr.bf16.mxu0 0
      %1108 = vmatpush1.bf16.msra.mxu0 %v658
      %1109 = vmatprep.subr.bf16.mxu0 0
      %1110 = vmatpush1.bf16.msra.mxu0 %v659
      %1111 = vmatprep.subr.bf16.mxu0 0
      %1112 = vmatpush1.bf16.msra.mxu0 %v660
      %1113 = vmatprep.subr.bf16.mxu0 0
      %1114 = vmatpush1.bf16.msra.mxu0 %v661
      %1115 = vmatprep.subr.bf16.mxu0 0
      %1116 = vmatpush1.bf16.msra.mxu0 %v662
      %1117 = vmatprep.subr.bf16.mxu0 0
      %1118 = vmatpush1.bf16.msra.mxu0 %v663
      %1119 = vmatprep.subr.bf16.mxu0 0
      %1120 = vmatpush1.bf16.msra.mxu0 %v664
      %1121 = vmatprep.subr.bf16.mxu0 0
      %1122 = vmatpush1.bf16.msra.mxu0 0
      %1123 = vmatprep.subr.bf16.mxu0 0
      %1124 = vmatpush1.bf16.msra.mxu0 0
      %1125 = vmatprep.subr.bf16.mxu0 0
      %1126 = vmatpush1.bf16.msra.mxu0 0
      %1127 = vmatprep.subr.bf16.mxu0 0
      %1128 = vmatpush1.bf16.msra.mxu0 0
      %1129 = vmatprep.subr.bf16.mxu0 0
      %1130 = vmatpush1.bf16.msra.mxu0 0
      %1131 = vmatprep.subr.bf16.mxu0 0
      %1132 = vmatpush1.bf16.msra.mxu0 0
      %1133 = vmatprep.subr.bf16.mxu0 0
      %1134 = vmatpush1.bf16.msra.mxu0 0
      %1135 = vmatprep.subr.bf16.mxu0 0
      %1136 = vmatpush1.bf16.msra.mxu0 0
      %1137 = vmatprep.mubr.bf16.mxu0 0
      %1138 = vmatmul.mubr.bf16.gmra.mrb[0].mxu0 %v1096
      %v1139 = vpop.f32.mrb[0].mxu0
      %v1140 = vadd.f32 0.0, %v1139
      %v1141 = vpop.f32.mrb[0].mxu0
      %v1142 = vpop.f32.mrb[0].mxu0
      %v1143 = vpop.f32.mrb[0].mxu0
      %1144 = vdwg.mxu0
      %v1145 = vpack.c.bf16 %v1045, %v1045
      %v1150 = vunpack.c.l.b16 %v504
      %v1151 = vunpack.c.l.b16 %v505
      %v1152 = vunpack.c.l.b16 %v506
      %v1153 = vunpack.c.l.b16 %v507
      %v1154 = vpack.c.b16 %v1151, %v1150
      %v1155 = vpack.c.b16 %v1153, %v1152
      %v1159 = vsel %vm763, %v1145, 0
      %1161 = vmatprep.subr.bf16.mxu0 0
      %1162 = vmatpush1.bf16.msra.mxu0 %v1154
      %1163 = vmatprep.subr.bf16.mxu0 0
      %1164 = vmatpush1.bf16.msra.mxu0 %v1155
      %1165 = vmatprep.subr.bf16.mxu0 0
      %1166 = vmatpush1.bf16.msra.mxu0 0
      %1167 = vmatprep.subr.bf16.mxu0 0
      %1168 = vmatpush1.bf16.msra.mxu0 0
      %1169 = vmatprep.subr.bf16.mxu0 0
      %1170 = vmatpush1.bf16.msra.mxu0 0
      %1171 = vmatprep.subr.bf16.mxu0 0
      %1172 = vmatpush1.bf16.msra.mxu0 0
      %1173 = vmatprep.subr.bf16.mxu0 0
      %1174 = vmatpush1.bf16.msra.mxu0 0
      %1175 = vmatprep.subr.bf16.mxu0 0
      %1176 = vmatpush1.bf16.msra.mxu0 0
      %1177 = vmatprep.subr.bf16.mxu0 0
      %1178 = vmatpush1.bf16.msra.mxu0 0
      %1179 = vmatprep.subr.bf16.mxu0 0
      %1180 = vmatpush1.bf16.msra.mxu0 0
      %1181 = vmatprep.subr.bf16.mxu0 0
      %1182 = vmatpush1.bf16.msra.mxu0 0
      %1183 = vmatprep.subr.bf16.mxu0 0
      %1184 = vmatpush1.bf16.msra.mxu0 0
      %1185 = vmatprep.subr.bf16.mxu0 0
      %1186 = vmatpush1.bf16.msra.mxu0 0
      %1187 = vmatprep.subr.bf16.mxu0 0
      %1188 = vmatpush1.bf16.msra.mxu0 0
      %1189 = vmatprep.subr.bf16.mxu0 0
      %1190 = vmatpush1.bf16.msra.mxu0 0
      %1191 = vmatprep.subr.bf16.mxu0 0
      %1192 = vmatpush1.bf16.msra.mxu0 0
      %1193 = vmatprep.mubr.bf16.mxu0 0
      %1194 = vmatmul.mubr.bf16.gmra.mrb[0].mxu0 %v1159
      %v1195 = vpop.f32.mrb[0].mxu0
      %v1196 = vadd.f32 %v736, %v1195
      %v1197 = vpop.f32.mrb[0].mxu0
      %v1198 = vpop.f32.mrb[0].mxu0
      %v1199 = vpop.f32.mrb[0].mxu0
      %1200 = vdwg.mxu0
      %1201 = vst [vmem:[%s445] sm:$0xff] %v1196
      %v1202 = vpack.c.bf16 %v1140, %v1140
      %v1204 = vsel %vm763, %v1202, 0
      %1206 = vmatprep.subr.bf16.mxu0 0
      %1207 = vmatpush1.bf16.msra.mxu0 %v759
      %1208 = vmatprep.subr.bf16.mxu0 0
      %1209 = vmatpush1.bf16.msra.mxu0 %v760
      %1210 = vmatprep.subr.bf16.mxu0 0
      %1211 = vmatpush1.bf16.msra.mxu0 0
      %1212 = vmatprep.subr.bf16.mxu0 0
      %1213 = vmatpush1.bf16.msra.mxu0 0
      %1214 = vmatprep.subr.bf16.mxu0 0
      %1215 = vmatpush1.bf16.msra.mxu0 0
      %1216 = vmatprep.subr.bf16.mxu0 0
      %1217 = vmatpush1.bf16.msra.mxu0 0
      %1218 = vmatprep.subr.bf16.mxu0 0
      %1219 = vmatpush1.bf16.msra.mxu0 0
      %1220 = vmatprep.subr.bf16.mxu0 0
      %1221 = vmatpush1.bf16.msra.mxu0 0
      %1222 = vmatprep.subr.bf16.mxu0 0
      %1223 = vmatpush1.bf16.msra.mxu0 0
      %1224 = vmatprep.subr.bf16.mxu0 0
      %1225 = vmatpush1.bf16.msra.mxu0 0
      %1226 = vmatprep.subr.bf16.mxu0 0
      %1227 = vmatpush1.bf16.msra.mxu0 0
      %1228 = vmatprep.subr.bf16.mxu0 0
      %1229 = vmatpush1.bf16.msra.mxu0 0
      %1230 = vmatprep.subr.bf16.mxu0 0
      %1231 = vmatpush1.bf16.msra.mxu0 0
      %1232 = vmatprep.subr.bf16.mxu0 0
      %1233 = vmatpush1.bf16.msra.mxu0 0
      %1234 = vmatprep.subr.bf16.mxu0 0
      %1235 = vmatpush1.bf16.msra.mxu0 0
      %1236 = vmatprep.subr.bf16.mxu0 0
      %1237 = vmatpush1.bf16.msra.mxu0 0
      %1238 = vmatprep.mubr.bf16.mxu0 0
      %1239 = vmatmul.mubr.bf16.gmra.mrb[0].mxu0 %v1204
      %v1240 = vpop.f32.mrb[0].mxu0
      %v1241 = vadd.f32 %v716, %v1240
      %v1242 = vpop.f32.mrb[0].mxu0
      %v1243 = vpop.f32.mrb[0].mxu0
      %v1244 = vpop.f32.mrb[0].mxu0
      %1245 = vdwg.mxu0
      %1246 = vmatprep.subr.bf16.mxu0 0
      %1247 = vmatpush1.bf16.msra.mxu0 %v815
      %1248 = vmatprep.subr.bf16.mxu0 0
      %1249 = vmatpush1.bf16.msra.mxu0 %v816
      %1250 = vmatprep.subr.bf16.mxu0 0
      %1251 = vmatpush1.bf16.msra.mxu0 0
      %1252 = vmatprep.subr.bf16.mxu0 0
      %1253 = vmatpush1.bf16.msra.mxu0 0
      %1254 = vmatprep.subr.bf16.mxu0 0
      %1255 = vmatpush1.bf16.msra.mxu0 0
      %1256 = vmatprep.subr.bf16.mxu0 0
      %1257 = vmatpush1.bf16.msra.mxu0 0
      %1258 = vmatprep.subr.bf16.mxu0 0
      %1259 = vmatpush1.bf16.msra.mxu0 0
      %1260 = vmatprep.subr.bf16.mxu0 0
      %1261 = vmatpush1.bf16.msra.mxu0 0
      %1262 = vmatprep.subr.bf16.mxu0 0
      %1263 = vmatpush1.bf16.msra.mxu0 0
      %1264 = vmatprep.subr.bf16.mxu0 0
      %1265 = vmatpush1.bf16.msra.mxu0 0
      %1266 = vmatprep.subr.bf16.mxu0 0
      %1267 = vmatpush1.bf16.msra.mxu0 0
      %1268 = vmatprep.subr.bf16.mxu0 0
      %1269 = vmatpush1.bf16.msra.mxu0 0
      %1270 = vmatprep.subr.bf16.mxu0 0
      %1271 = vmatpush1.bf16.msra.mxu0 0
      %1272 = vmatprep.subr.bf16.mxu0 0
      %1273 = vmatpush1.bf16.msra.mxu0 0
      %1274 = vmatprep.subr.bf16.mxu0 0
      %1275 = vmatpush1.bf16.msra.mxu0 0
      %1276 = vmatprep.subr.bf16.mxu0 0
      %1277 = vmatpush1.bf16.msra.mxu0 0
      %1278 = vmatprep.mubr.bf16.mxu0 0
      %1279 = vmatmul.mubr.bf16.gmra.mrb[0].mxu0 %v896
      %v1280 = vpop.f32.mrb[0].mxu0
      %v1281 = vadd.f32 %v720, %v1280
      %v1282 = vpop.f32.mrb[0].mxu0
      %v1283 = vpop.f32.mrb[0].mxu0
      %v1284 = vpop.f32.mrb[0].mxu0
      %1285 = vdwg.mxu0
      %v1286 = vadd.f32 %v1241, %v1281
      %v1287 = vxor.u32 %v1286, 2147483648
      %v1288 = vmul.f32 %v1287, 1.442695
      %v1289 = vpow.pop %v1288
      %v1290 = vadd.f32 %v1289, 1.0
      %v1291 = vrcp.pop %v1290
      %v1292 = vmul.f32 1.0, %v1291
      %1294 = vrot.lane.b32.xlu0 %v1281, 64
      %v1295 = vpop.permute.xlu0 %1294
      %v1297 = vmul.f32 %v1292, %v1295
      %1299 = vrot.lane.b32.xlu0 %v1297, 64
      %v1300 = vpop.permute.xlu0 %1299
      %v1302 = vadd.f32 %v1241, %v1300
      %v1303 = vtanh.pop %v1302
      %v1304 = vsub.f32 1.0, %v1292
      %1306 = vrot.lane.b32.xlu0 %v1303, 96
      %v1307 = vpop.permute.xlu0 %1306
      %v1309 = vmul.f32 %v1304, %v1307
      %v1310 = vmul.f32 %v1292, %v890
      %v1311 = vadd.f32 %v1309, %v1310
      %v1312 = vpack.c.bf16 %v1311, %v1311
      %1314 = vrot.lane.b32.xlu0 %v1312, 96
      %v1315 = vpop.permute.xlu0 %1314
      %v1317 = vsel %vm763, %v1315, 0
      %1319 = vmatprep.subr.bf16.mxu0 0
      %1320 = vmatpush1.bf16.xpose.msra.mxu0 %v899
      %1321 = vmatprep.subr.bf16.mxu0 0
      %1322 = vmatpush1.bf16.xpose.msra.mxu0 %v902
      %1323 = vmatprep.subr.bf16.mxu0 0
      %1324 = vmatpush1.bf16.xpose.msra.mxu0 %v905
      %1325 = vmatprep.subr.bf16.mxu0 0
      %1326 = vmatpush1.bf16.xpose.msra.mxu0 %v908
      %1327 = vmatprep.subr.bf16.mxu0 0
      %1328 = vmatpush1.bf16.xpose.msra.mxu0 %v911
      %1329 = vmatprep.subr.bf16.mxu0 0
      %1330 = vmatpush1.bf16.xpose.msra.mxu0 %v914
      %1331 = vmatprep.subr.bf16.mxu0 0
      %1332 = vmatpush1.bf16.xpose.msra.mxu0 %v917
      %1333 = vmatprep.subr.bf16.mxu0 0
      %1334 = vmatpush1.bf16.xpose.msra.mxu0 %v920
      %1335 = vmatprep.subr.bf16.mxu0 0
      %1336 = vmatpush1.bf16.xpose.msra.mxu0 %v923
      %1337 = vmatprep.subr.bf16.mxu0 0
      %1338 = vmatpush1.bf16.xpose.msra.mxu0 %v926
      %1339 = vmatprep.subr.bf16.mxu0 0
      %1340 = vmatpush1.bf16.xpose.msra.mxu0 %v929
      %1341 = vmatprep.subr.bf16.mxu0 0
      %1342 = vmatpush1.bf16.xpose.msra.mxu0 %v932
      %1343 = vmatprep.subr.bf16.mxu0 0
      %1344 = vmatpush1.bf16.xpose.msra.mxu0 %v935
      %1345 = vmatprep.subr.bf16.mxu0 0
      %1346 = vmatpush1.bf16.xpose.msra.mxu0 %v938
      %1347 = vmatprep.subr.bf16.mxu0 0
      %1348 = vmatpush1.bf16.xpose.msra.mxu0 %v941
      %1349 = vmatprep.subr.bf16.mxu0 0
      %1350 = vmatpush1.bf16.xpose.msra.mxu0 %v944
      %1351 = vmatprep.mubr.bf16.mxu0 0
      %1352 = vmatmul.mubr.bf16.gmra.mrb[0].mxu0 %v1317
      %v1353 = vpop.f32.mrb[0].mxu0
      %v1354 = vadd.f32 0.0, %v1353
      %v1355 = vpop.f32.mrb[0].mxu0
      %v1356 = vadd.f32 0.0, %v1355
      %v1357 = vpop.f32.mrb[0].mxu0
      %v1358 = vpop.f32.mrb[0].mxu0
      %1359 = vdwg.mxu0
      %v1360 = vadd.f32 %v1354, %v513
      %1361 = vmax.xlane.f32.xlu0 %v1360
      %v1362 = vpop.xlane.xlu0 %1361
      %v1363 = vsub.f32 %v1360, %v1362
      %v1364 = vmul.f32 %v1363, 1.442695
      %v1365 = vpow.pop %v1364
      %1366 = vadd.xlane.f32.xlu0 %v1365
      %v1367 = vpop.xlane.xlu0 %1366
      %v1368 = vrcp.pop %v1367
      %v1369 = vmul.f32 %v1365, %v1368
      %v1370 = vsel %vm520, -10000.0, %v1356
      %1371 = vmax.xlane.f32.xlu0 %v1370
      %v1372 = vpop.xlane.xlu0 %1371
      %v1373 = vsub.f32 %v1370, %v1372
      %v1374 = vmul.f32 %v1373, 1.442695
      %v1375 = vpow.pop %v1374
      %1376 = vadd.xlane.f32.xlu0 %v1375
      %v1377 = vpop.xlane.xlu0 %1376
      %v1378 = vrcp.pop %v1377
      %v1379 = vmul.f32 %v1375, %v1378
      %v1380 = vpack.c.bf16 %v1379, %v1379
      %1381 = vmatprep.subr.bf16.mxu0 %v697
      %1382 = vmatpush1.bf16.msra.mxu0 %v617
      %1383 = vmatprep.subr.bf16.mxu0 %v698
      %1384 = vmatpush1.bf16.msra.mxu0 %v618
      %1385 = vmatprep.subr.bf16.mxu0 %v699
      %1386 = vmatpush1.bf16.msra.mxu0 %v619
      %1387 = vmatprep.subr.bf16.mxu0 %v700
      %1388 = vmatpush1.bf16.msra.mxu0 %v620
      %1389 = vmatprep.subr.bf16.mxu0 %v701
      %1390 = vmatpush1.bf16.msra.mxu0 %v621
      %1391 = vmatprep.subr.bf16.mxu0 %v702
      %1392 = vmatpush1.bf16.msra.mxu0 %v622
      %1393 = vmatprep.subr.bf16.mxu0 %v703
      %1394 = vmatpush1.bf16.msra.mxu0 %v623
      %1395 = vmatprep.subr.bf16.mxu0 %v704
      %1396 = vmatpush1.bf16.msra.mxu0 %v624
      %1397 = vmatprep.subr.bf16.mxu0 0
      %1398 = vmatpush1.bf16.msra.mxu0 0
      %1399 = vmatprep.subr.bf16.mxu0 0
      %1400 = vmatpush1.bf16.msra.mxu0 0
      %1401 = vmatprep.subr.bf16.mxu0 0
      %1402 = vmatpush1.bf16.msra.mxu0 0
      %1403 = vmatprep.subr.bf16.mxu0 0
      %1404 = vmatpush1.bf16.msra.mxu0 0
      %1405 = vmatprep.subr.bf16.mxu0 0
      %1406 = vmatpush1.bf16.msra.mxu0 0
      %1407 = vmatprep.subr.bf16.mxu0 0
      %1408 = vmatpush1.bf16.msra.mxu0 0
      %1409 = vmatprep.subr.bf16.mxu0 0
      %1410 = vmatpush1.bf16.msra.mxu0 0
      %1411 = vmatprep.subr.bf16.mxu0 0
      %1412 = vmatpush1.bf16.msra.mxu0 0
      %1413 = vmatprep.mubr.bf16.mxu0 0
      %1414 = vmatmul.mubr.bf16.gmra.mrb[0].mxu0 %v1380
      %v1415 = vpop.f32.mrb[0].mxu0
      %v1416 = vadd.f32 0.0, %v1415
      %v1417 = vpop.f32.mrb[0].mxu0
      %v1418 = vadd.f32 0.0, %v1417
      %v1419 = vpop.f32.mrb[0].mxu0
      %v1420 = vpop.f32.mrb[0].mxu0
      %1421 = vdwg.mxu0
      %v1422 = vmul.f32 %v1140, %v724
      %v1423 = vmul.f32 %v1311, %v1052
      %1425 = vrot.lane.b32.xlu0 %v1423, 96
      %v1426 = vpop.permute.xlu0 %1425
      %v1428 = vadd.f32 %v1422, %v1426
      %v1429 = vmul.f32 %v1418, %v732
      %v1430 = vadd.f32 %v1428, %v1429
      %v1431 = vsel %vm763, %v1430, 0.0
      %1432 = vadd.xlane.f32.xlu0 %v1431
      %v1433 = vpop.xlane.xlu0 %1432
      %v1434 = vadd.f32 %v1433, %v740
      %v1435 = vxor.u32 %v1434, 2147483648
      %v1436 = vmul.f32 %v1435, 1.442695
      %v1437 = vpow.pop %v1436
      %v1438 = vadd.f32 %v1437, 1.0
      %v1439 = vrcp.pop %v1438
      %v1440 = vmul.f32 1.0, %v1439
      %1442 = vset.pattern.permute.xlu0 0
      %1443 = vperm.xlu0 %1442, %v1440
      %v1444 = vpop.permute.xlu0 %1443
      %v1446 = vmul.f32 %v1444, %v1369
      %v1447 = vsub.f32 1.0, %v1440
      %1449 = vset.pattern.permute.xlu0 0
      %1450 = vperm.xlu0 %1449, %v1447
      %v1451 = vpop.permute.xlu0 %1450
      %v1453 = vmul.f32 %v1451, %v1416
      %v1454 = vadd.f32 %v1446, %v1453
      %s1455 = scalar_lea.vmem %s441, 8
      %1456 = vst [vmem:[%s1455] sm:$0xff] %v1454
      %1457 = vmax.xlane.f32.xlu0 %v1454
      %v1458 = vpop.xlane.xlu0 %1457
      %vm1459 = vcmp.ge.f32.partialorder %v1454, %v1458
      %v1460 = vsel %vm1459, %v511, 128.0
      %1461 = vmin.xlane.f32.xlu0 %v1460
      %v1462 = vpop.xlane.xlu0 %1461
      %vm1463 = vcmp.eq.f32.partialorder %v1462, %v511
      %v1464 = vsel %vm1463, 1, 0
      %v1465 = vcvt.s32.f32 %v1464
      %v1466 = vpack.c.bf16 %v1465, %v1465
      %1467 = vmatprep.subr.bf16.mxu0 0
      %1468 = vmatpush1.bf16.msra.mxu0 %v657
      %1469 = vmatprep.subr.bf16.mxu0 0
      %1470 = vmatpush1.bf16.msra.mxu0 %v658
      %1471 = vmatprep.subr.bf16.mxu0 0
      %1472 = vmatpush1.bf16.msra.mxu0 %v659
      %1473 = vmatprep.subr.bf16.mxu0 0
      %1474 = vmatpush1.bf16.msra.mxu0 %v660
      %1475 = vmatprep.subr.bf16.mxu0 0
      %1476 = vmatpush1.bf16.msra.mxu0 %v661
      %1477 = vmatprep.subr.bf16.mxu0 0
      %1478 = vmatpush1.bf16.msra.mxu0 %v662
      %1479 = vmatprep.subr.bf16.mxu0 0
      %1480 = vmatpush1.bf16.msra.mxu0 %v663
      %1481 = vmatprep.subr.bf16.mxu0 0
      %1482 = vmatpush1.bf16.msra.mxu0 %v664
      %1483 = vmatprep.subr.bf16.mxu0 0
      %1484 = vmatpush1.bf16.msra.mxu0 0
      %1485 = vmatprep.subr.bf16.mxu0 0
      %1486 = vmatpush1.bf16.msra.mxu0 0
      %1487 = vmatprep.subr.bf16.mxu0 0
      %1488 = vmatpush1.bf16.msra.mxu0 0
      %1489 = vmatprep.subr.bf16.mxu0 0
      %1490 = vmatpush1.bf16.msra.mxu0 0
      %1491 = vmatprep.subr.bf16.mxu0 0
      %1492 = vmatpush1.bf16.msra.mxu0 0
      %1493 = vmatprep.subr.bf16.mxu0 0
      %1494 = vmatpush1.bf16.msra.mxu0 0
      %1495 = vmatprep.subr.bf16.mxu0 0
      %1496 = vmatpush1.bf16.msra.mxu0 0
      %1497 = vmatprep.subr.bf16.mxu0 0
      %1498 = vmatpush1.bf16.msra.mxu0 0
      %1499 = vmatprep.mubr.bf16.mxu0 0
      %1500 = vmatmul.mubr.bf16.gmra.mrb[0].mxu0 %v1466
      %v1501 = vpop.f32.mrb[0].mxu0
      %v1502 = vadd.f32 0.0, %v1501
      %v1503 = vpop.f32.mrb[0].mxu0
      %v1504 = vpop.f32.mrb[0].mxu0
      %v1505 = vpop.f32.mrb[0].mxu0
      %1506 = vdwg.mxu0
      %v1507 = vpack.c.bf16 %v1502, %v1502
      %v1509 = vsel %vm763, %v1507, 0
      %1511 = vmatprep.subr.bf16.mxu0 0
      %1512 = vmatpush1.bf16.msra.mxu0 %v759
      %1513 = vmatprep.subr.bf16.mxu0 0
      %1514 = vmatpush1.bf16.msra.mxu0 %v760
      %1515 = vmatprep.subr.bf16.mxu0 0
      %1516 = vmatpush1.bf16.msra.mxu0 0
      %1517 = vmatprep.subr.bf16.mxu0 0
      %1518 = vmatpush1.bf16.msra.mxu0 0
      %1519 = vmatprep.subr.bf16.mxu0 0
      %1520 = vmatpush1.bf16.msra.mxu0 0
      %1521 = vmatprep.subr.bf16.mxu0 0
      %1522 = vmatpush1.bf16.msra.mxu0 0
      %1523 = vmatprep.subr.bf16.mxu0 0
      %1524 = vmatpush1.bf16.msra.mxu0 0
      %1525 = vmatprep.subr.bf16.mxu0 0
      %1526 = vmatpush1.bf16.msra.mxu0 0
      %1527 = vmatprep.subr.bf16.mxu0 0
      %1528 = vmatpush1.bf16.msra.mxu0 0
      %1529 = vmatprep.subr.bf16.mxu0 0
      %1530 = vmatpush1.bf16.msra.mxu0 0
      %1531 = vmatprep.subr.bf16.mxu0 0
      %1532 = vmatpush1.bf16.msra.mxu0 0
      %1533 = vmatprep.subr.bf16.mxu0 0
      %1534 = vmatpush1.bf16.msra.mxu0 0
      %1535 = vmatprep.subr.bf16.mxu0 0
      %1536 = vmatpush1.bf16.msra.mxu0 0
      %1537 = vmatprep.subr.bf16.mxu0 0
      %1538 = vmatpush1.bf16.msra.mxu0 0
      %1539 = vmatprep.subr.bf16.mxu0 0
      %1540 = vmatpush1.bf16.msra.mxu0 0
      %1541 = vmatprep.subr.bf16.mxu0 0
      %1542 = vmatpush1.bf16.msra.mxu0 0
      %1543 = vmatprep.mubr.bf16.mxu0 0
      %1544 = vmatmul.mubr.bf16.gmra.mrb[0].mxu0 %v1509
      %v1545 = vpop.f32.mrb[0].mxu0
      %v1546 = vadd.f32 %v716, %v1545
      %v1547 = vpop.f32.mrb[0].mxu0
      %v1548 = vpop.f32.mrb[0].mxu0
      %v1549 = vpop.f32.mrb[0].mxu0
      %1550 = vdwg.mxu0
      %1551 = vmatprep.subr.bf16.mxu0 0
      %1552 = vmatpush1.bf16.msra.mxu0 %v815
      %1553 = vmatprep.subr.bf16.mxu0 0
      %1554 = vmatpush1.bf16.msra.mxu0 %v816
      %1555 = vmatprep.subr.bf16.mxu0 0
      %1556 = vmatpush1.bf16.msra.mxu0 0
      %1557 = vmatprep.subr.bf16.mxu0 0
      %1558 = vmatpush1.bf16.msra.mxu0 0
      %1559 = vmatprep.subr.bf16.mxu0 0
      %1560 = vmatpush1.bf16.msra.mxu0 0
      %1561 = vmatprep.subr.bf16.mxu0 0
      %1562 = vmatpush1.bf16.msra.mxu0 0
      %1563 = vmatprep.subr.bf16.mxu0 0
      %1564 = vmatpush1.bf16.msra.mxu0 0
      %1565 = vmatprep.subr.bf16.mxu0 0
      %1566 = vmatpush1.bf16.msra.mxu0 0
      %1567 = vmatprep.subr.bf16.mxu0 0
      %1568 = vmatpush1.bf16.msra.mxu0 0
      %1569 = vmatprep.subr.bf16.mxu0 0
      %1570 = vmatpush1.bf16.msra.mxu0 0
      %1571 = vmatprep.subr.bf16.mxu0 0
      %1572 = vmatpush1.bf16.msra.mxu0 0
      %1573 = vmatprep.subr.bf16.mxu0 0
      %1574 = vmatpush1.bf16.msra.mxu0 0
      %1575 = vmatprep.subr.bf16.mxu0 0
      %1576 = vmatpush1.bf16.msra.mxu0 0
      %1577 = vmatprep.subr.bf16.mxu0 0
      %1578 = vmatpush1.bf16.msra.mxu0 0
      %1579 = vmatprep.subr.bf16.mxu0 0
      %1580 = vmatpush1.bf16.msra.mxu0 0
      %1581 = vmatprep.subr.bf16.mxu0 0
      %1582 = vmatpush1.bf16.msra.mxu0 0
      %1583 = vmatprep.mubr.bf16.mxu0 0
      %1584 = vmatmul.mubr.bf16.gmra.mrb[0].mxu0 %v1317
      %v1585 = vpop.f32.mrb[0].mxu0
      %v1586 = vadd.f32 %v720, %v1585
      %v1587 = vpop.f32.mrb[0].mxu0
      %v1588 = vpop.f32.mrb[0].mxu0
      %v1589 = vpop.f32.mrb[0].mxu0
      %1590 = vdwg.mxu0
      %v1591 = vadd.f32 %v1546, %v1586
      %v1592 = vxor.u32 %v1591, 2147483648
      %v1593 = vmul.f32 %v1592, 1.442695
      %v1594 = vpow.pop %v1593
      %v1595 = vadd.f32 %v1594, 1.0
      %v1596 = vrcp.pop %v1595
      %v1597 = vmul.f32 1.0, %v1596
      %1599 = vrot.lane.b32.xlu0 %v1586, 64
      %v1600 = vpop.permute.xlu0 %1599
      %v1602 = vmul.f32 %v1597, %v1600
      %1604 = vrot.lane.b32.xlu0 %v1602, 64
      %v1605 = vpop.permute.xlu0 %1604
      %v1607 = vadd.f32 %v1546, %v1605
      %v1608 = vtanh.pop %v1607
      %v1609 = vsub.f32 1.0, %v1597
      %1611 = vrot.lane.b32.xlu0 %v1608, 96
      %v1612 = vpop.permute.xlu0 %1611
      %v1614 = vmul.f32 %v1609, %v1612
      %v1615 = vmul.f32 %v1597, %v1311
      %v1616 = vadd.f32 %v1614, %v1615
      %v1617 = vpack.c.bf16 %v1616, %v1616
      %1619 = vrot.lane.b32.xlu0 %v1617, 96
      %v1620 = vpop.permute.xlu0 %1619
      %v1622 = vsel %vm763, %v1620, 0
      %1624 = vmatprep.subr.bf16.mxu0 0
      %1625 = vmatpush1.bf16.xpose.msra.mxu0 %v899
      %1626 = vmatprep.subr.bf16.mxu0 0
      %1627 = vmatpush1.bf16.xpose.msra.mxu0 %v902
      %1628 = vmatprep.subr.bf16.mxu0 0
      %1629 = vmatpush1.bf16.xpose.msra.mxu0 %v905
      %1630 = vmatprep.subr.bf16.mxu0 0
      %1631 = vmatpush1.bf16.xpose.msra.mxu0 %v908
      %1632 = vmatprep.subr.bf16.mxu0 0
      %1633 = vmatpush1.bf16.xpose.msra.mxu0 %v911
      %1634 = vmatprep.subr.bf16.mxu0 0
      %1635 = vmatpush1.bf16.xpose.msra.mxu0 %v914
      %1636 = vmatprep.subr.bf16.mxu0 0
      %1637 = vmatpush1.bf16.xpose.msra.mxu0 %v917
      %1638 = vmatprep.subr.bf16.mxu0 0
      %1639 = vmatpush1.bf16.xpose.msra.mxu0 %v920
      %1640 = vmatprep.subr.bf16.mxu0 0
      %1641 = vmatpush1.bf16.xpose.msra.mxu0 %v923
      %1642 = vmatprep.subr.bf16.mxu0 0
      %1643 = vmatpush1.bf16.xpose.msra.mxu0 %v926
      %1644 = vmatprep.subr.bf16.mxu0 0
      %1645 = vmatpush1.bf16.xpose.msra.mxu0 %v929
      %1646 = vmatprep.subr.bf16.mxu0 0
      %1647 = vmatpush1.bf16.xpose.msra.mxu0 %v932
      %1648 = vmatprep.subr.bf16.mxu0 0
      %1649 = vmatpush1.bf16.xpose.msra.mxu0 %v935
      %1650 = vmatprep.subr.bf16.mxu0 0
      %1651 = vmatpush1.bf16.xpose.msra.mxu0 %v938
      %1652 = vmatprep.subr.bf16.mxu0 0
      %1653 = vmatpush1.bf16.xpose.msra.mxu0 %v941
      %1654 = vmatprep.subr.bf16.mxu0 0
      %1655 = vmatpush1.bf16.xpose.msra.mxu0 %v944
      %1656 = vmatprep.mubr.bf16.mxu0 0
      %1657 = vmatmul.mubr.bf16.gmra.mrb[0].mxu0 %v1622
      %v1658 = vpop.f32.mrb[0].mxu0
      %v1659 = vadd.f32 0.0, %v1658
      %v1660 = vpop.f32.mrb[0].mxu0
      %v1661 = vadd.f32 0.0, %v1660
      %v1662 = vpop.f32.mrb[0].mxu0
      %v1663 = vpop.f32.mrb[0].mxu0
      %1664 = vdwg.mxu0
      %v1665 = vadd.f32 %v1659, %v513
      %1666 = vmax.xlane.f32.xlu0 %v1665
      %v1667 = vpop.xlane.xlu0 %1666
      %v1668 = vsub.f32 %v1665, %v1667
      %v1669 = vmul.f32 %v1668, 1.442695
      %v1670 = vpow.pop %v1669
      %1671 = vadd.xlane.f32.xlu0 %v1670
      %v1672 = vpop.xlane.xlu0 %1671
      %v1673 = vrcp.pop %v1672
      %v1674 = vmul.f32 %v1670, %v1673
      %v1675 = vsel %vm520, -10000.0, %v1661
      %1676 = vmax.xlane.f32.xlu0 %v1675
      %v1677 = vpop.xlane.xlu0 %1676
      %v1678 = vsub.f32 %v1675, %v1677
      %v1679 = vmul.f32 %v1678, 1.442695
      %v1680 = vpow.pop %v1679
      %1681 = vadd.xlane.f32.xlu0 %v1680
      %v1682 = vpop.xlane.xlu0 %1681
      %v1683 = vrcp.pop %v1682
      %v1684 = vmul.f32 %v1680, %v1683
      %v1685 = vpack.c.bf16 %v1684, %v1684
      %1686 = vmatprep.subr.bf16.mxu0 %v697
      %1687 = vmatpush1.bf16.msra.mxu0 %v617
      %1688 = vmatprep.subr.bf16.mxu0 %v698
      %1689 = vmatpush1.bf16.msra.mxu0 %v618
      %1690 = vmatprep.subr.bf16.mxu0 %v699
      %1691 = vmatpush1.bf16.msra.mxu0 %v619
      %1692 = vmatprep.subr.bf16.mxu0 %v700
      %1693 = vmatpush1.bf16.msra.mxu0 %v620
      %1694 = vmatprep.subr.bf16.mxu0 %v701
      %1695 = vmatpush1.bf16.msra.mxu0 %v621
      %1696 = vmatprep.subr.bf16.mxu0 %v702
      %1697 = vmatpush1.bf16.msra.mxu0 %v622
      %1698 = vmatprep.subr.bf16.mxu0 %v703
      %1699 = vmatpush1.bf16.msra.mxu0 %v623
      %1700 = vmatprep.subr.bf16.mxu0 %v704
      %1701 = vmatpush1.bf16.msra.mxu0 %v624
      %1702 = vmatprep.subr.bf16.mxu0 0
      %1703 = vmatpush1.bf16.msra.mxu0 0
      %1704 = vmatprep.subr.bf16.mxu0 0
      %1705 = vmatpush1.bf16.msra.mxu0 0
      %1706 = vmatprep.subr.bf16.mxu0 0
      %1707 = vmatpush1.bf16.msra.mxu0 0
      %1708 = vmatprep.subr.bf16.mxu0 0
      %1709 = vmatpush1.bf16.msra.mxu0 0
      %1710 = vmatprep.subr.bf16.mxu0 0
      %1711 = vmatpush1.bf16.msra.mxu0 0
      %1712 = vmatprep.subr.bf16.mxu0 0
      %1713 = vmatpush1.bf16.msra.mxu0 0
      %1714 = vmatprep.subr.bf16.mxu0 0
      %1715 = vmatpush1.bf16.msra.mxu0 0
      %1716 = vmatprep.subr.bf16.mxu0 0
      %1717 = vmatpush1.bf16.msra.mxu0 0
      %1718 = vmatprep.mubr.bf16.mxu0 0
      %1719 = vmatmul.mubr.bf16.gmra.mrb[0].mxu0 %v1685
      %v1720 = vpop.f32.mrb[0].mxu0
      %v1721 = vadd.f32 0.0, %v1720
      %v1722 = vpop.f32.mrb[0].mxu0
      %v1723 = vadd.f32 0.0, %v1722
      %v1724 = vpop.f32.mrb[0].mxu0
      %v1725 = vpop.f32.mrb[0].mxu0
      %1726 = vdwg.mxu0
      %v1727 = vmul.f32 %v1502, %v724
      %v1728 = vmul.f32 %v1616, %v1052
      %1730 = vrot.lane.b32.xlu0 %v1728, 96
      %v1731 = vpop.permute.xlu0 %1730
      %v1733 = vadd.f32 %v1727, %v1731
      %v1734 = vmul.f32 %v1723, %v732
      %v1735 = vadd.f32 %v1733, %v1734
      %v1736 = vsel %vm763, %v1735, 0.0
      %1737 = vadd.xlane.f32.xlu0 %v1736
      %v1738 = vpop.xlane.xlu0 %1737
      %v1739 = vadd.f32 %v1738, %v740
      %v1740 = vxor.u32 %v1739, 2147483648
      %v1741 = vmul.f32 %v1740, 1.442695
      %v1742 = vpow.pop %v1741
      %v1743 = vadd.f32 %v1742, 1.0
      %v1744 = vrcp.pop %v1743
      %v1745 = vmul.f32 1.0, %v1744
      %1747 = vset.pattern.permute.xlu0 0
      %1748 = vperm.xlu0 %1747, %v1745
      %v1749 = vpop.permute.xlu0 %1748
      %v1751 = vmul.f32 %v1749, %v1674
      %v1752 = vsub.f32 1.0, %v1745
      %1754 = vset.pattern.permute.xlu0 0
      %1755 = vperm.xlu0 %1754, %v1752
      %v1756 = vpop.permute.xlu0 %1755
      %v1758 = vmul.f32 %v1756, %v1721
      %v1759 = vadd.f32 %v1751, %v1758
      %s1760 = scalar_lea.vmem %s441, 16
      %1761 = vst [vmem:[%s1760] sm:$0xff] %v1759
      %1762 = vmax.xlane.f32.xlu0 %v1759
      %v1763 = vpop.xlane.xlu0 %1762
      %vm1764 = vcmp.ge.f32.partialorder %v1759, %v1763
      %v1765 = vsel %vm1764, %v511, 128.0
      %1766 = vmin.xlane.f32.xlu0 %v1765
      %v1767 = vpop.xlane.xlu0 %1766
      %vm1768 = vcmp.eq.f32.partialorder %v1767, %v511
      %v1769 = vsel %vm1768, 1, 0
      %v1770 = vcvt.s32.f32 %v1769
      %v1771 = vpack.c.bf16 %v1770, %v1770
      %1772 = vmatprep.subr.bf16.mxu0 0
      %1773 = vmatpush1.bf16.msra.mxu0 %v657
      %1774 = vmatprep.subr.bf16.mxu0 0
      %1775 = vmatpush1.bf16.msra.mxu0 %v658
      %1776 = vmatprep.subr.bf16.mxu0 0
      %1777 = vmatpush1.bf16.msra.mxu0 %v659
      %1778 = vmatprep.subr.bf16.mxu0 0
      %1779 = vmatpush1.bf16.msra.mxu0 %v660
      %1780 = vmatprep.subr.bf16.mxu0 0
      %1781 = vmatpush1.bf16.msra.mxu0 %v661
      %1782 = vmatprep.subr.bf16.mxu0 0
      %1783 = vmatpush1.bf16.msra.mxu0 %v662
      %1784 = vmatprep.subr.bf16.mxu0 0
      %1785 = vmatpush1.bf16.msra.mxu0 %v663
      %1786 = vmatprep.subr.bf16.mxu0 0
      %1787 = vmatpush1.bf16.msra.mxu0 %v664
      %1788 = vmatprep.subr.bf16.mxu0 0
      %1789 = vmatpush1.bf16.msra.mxu0 0
      %1790 = vmatprep.subr.bf16.mxu0 0
      %1791 = vmatpush1.bf16.msra.mxu0 0
      %1792 = vmatprep.subr.bf16.mxu0 0
      %1793 = vmatpush1.bf16.msra.mxu0 0
      %1794 = vmatprep.subr.bf16.mxu0 0
      %1795 = vmatpush1.bf16.msra.mxu0 0
      %1796 = vmatprep.subr.bf16.mxu0 0
      %1797 = vmatpush1.bf16.msra.mxu0 0
      %1798 = vmatprep.subr.bf16.mxu0 0
      %1799 = vmatpush1.bf16.msra.mxu0 0
      %1800 = vmatprep.subr.bf16.mxu0 0
      %1801 = vmatpush1.bf16.msra.mxu0 0
      %1802 = vmatprep.subr.bf16.mxu0 0
      %1803 = vmatpush1.bf16.msra.mxu0 0
      %1804 = vmatprep.mubr.bf16.mxu0 0
      %1805 = vmatmul.mubr.bf16.gmra.mrb[0].mxu0 %v1771
      %v1806 = vpop.f32.mrb[0].mxu0
      %v1807 = vadd.f32 0.0, %v1806
      %v1808 = vpop.f32.mrb[0].mxu0
      %v1809 = vpop.f32.mrb[0].mxu0
      %v1810 = vpop.f32.mrb[0].mxu0
      %1811 = vdwg.mxu0
      %v1812 = vpack.c.bf16 %v1807, %v1807
      %v1814 = vsel %vm763, %v1812, 0
      %1816 = vmatprep.subr.bf16.mxu0 0
      %1817 = vmatpush1.bf16.msra.mxu0 %v759
      %1818 = vmatprep.subr.bf16.mxu0 0
      %1819 = vmatpush1.bf16.msra.mxu0 %v760
      %1820 = vmatprep.subr.bf16.mxu0 0
      %1821 = vmatpush1.bf16.msra.mxu0 0
      %1822 = vmatprep.subr.bf16.mxu0 0
      %1823 = vmatpush1.bf16.msra.mxu0 0
      %1824 = vmatprep.subr.bf16.mxu0 0
      %1825 = vmatpush1.bf16.msra.mxu0 0
      %1826 = vmatprep.subr.bf16.mxu0 0
      %1827 = vmatpush1.bf16.msra.mxu0 0
      %1828 = vmatprep.subr.bf16.mxu0 0
      %1829 = vmatpush1.bf16.msra.mxu0 0
      %1830 = vmatprep.subr.bf16.mxu0 0
      %1831 = vmatpush1.bf16.msra.mxu0 0
      %1832 = vmatprep.subr.bf16.mxu0 0
      %1833 = vmatpush1.bf16.msra.mxu0 0
      %1834 = vmatprep.subr.bf16.mxu0 0
      %1835 = vmatpush1.bf16.msra.mxu0 0
      %1836 = vmatprep.subr.bf16.mxu0 0
      %1837 = vmatpush1.bf16.msra.mxu0 0
      %1838 = vmatprep.subr.bf16.mxu0 0
      %1839 = vmatpush1.bf16.msra.mxu0 0
      %1840 = vmatprep.subr.bf16.mxu0 0
      %1841 = vmatpush1.bf16.msra.mxu0 0
      %1842 = vmatprep.subr.bf16.mxu0 0
      %1843 = vmatpush1.bf16.msra.mxu0 0
      %1844 = vmatprep.subr.bf16.mxu0 0
      %1845 = vmatpush1.bf16.msra.mxu0 0
      %1846 = vmatprep.subr.bf16.mxu0 0
      %1847 = vmatpush1.bf16.msra.mxu0 0
      %1848 = vmatprep.mubr.bf16.mxu0 0
      %1849 = vmatmul.mubr.bf16.gmra.mrb[0].mxu0 %v1814
      %v1850 = vpop.f32.mrb[0].mxu0
      %v1851 = vadd.f32 %v716, %v1850
      %v1852 = vpop.f32.mrb[0].mxu0
      %v1853 = vpop.f32.mrb[0].mxu0
      %v1854 = vpop.f32.mrb[0].mxu0
      %1855 = vdwg.mxu0
      %1856 = vmatprep.subr.bf16.mxu0 0
      %1857 = vmatpush1.bf16.msra.mxu0 %v815
      %1858 = vmatprep.subr.bf16.mxu0 0
      %1859 = vmatpush1.bf16.msra.mxu0 %v816
      %1860 = vmatprep.subr.bf16.mxu0 0
      %1861 = vmatpush1.bf16.msra.mxu0 0
      %1862 = vmatprep.subr.bf16.mxu0 0
      %1863 = vmatpush1.bf16.msra.mxu0 0
      %1864 = vmatprep.subr.bf16.mxu0 0
      %1865 = vmatpush1.bf16.msra.mxu0 0
      %1866 = vmatprep.subr.bf16.mxu0 0
      %1867 = vmatpush1.bf16.msra.mxu0 0
      %1868 = vmatprep.subr.bf16.mxu0 0
      %1869 = vmatpush1.bf16.msra.mxu0 0
      %1870 = vmatprep.subr.bf16.mxu0 0
      %1871 = vmatpush1.bf16.msra.mxu0 0
      %1872 = vmatprep.subr.bf16.mxu0 0
      %1873 = vmatpush1.bf16.msra.mxu0 0
      %1874 = vmatprep.subr.bf16.mxu0 0
      %1875 = vmatpush1.bf16.msra.mxu0 0
      %1876 = vmatprep.subr.bf16.mxu0 0
      %1877 = vmatpush1.bf16.msra.mxu0 0
      %1878 = vmatprep.subr.bf16.mxu0 0
      %1879 = vmatpush1.bf16.msra.mxu0 0
      %1880 = vmatprep.subr.bf16.mxu0 0
      %1881 = vmatpush1.bf16.msra.mxu0 0
      %1882 = vmatprep.subr.bf16.mxu0 0
      %1883 = vmatpush1.bf16.msra.mxu0 0
      %1884 = vmatprep.subr.bf16.mxu0 0
      %1885 = vmatpush1.bf16.msra.mxu0 0
      %1886 = vmatprep.subr.bf16.mxu0 0
      %1887 = vmatpush1.bf16.msra.mxu0 0
      %1888 = vmatprep.mubr.bf16.mxu0 0
      %1889 = vmatmul.mubr.bf16.gmra.mrb[0].mxu0 %v1622
      %v1890 = vpop.f32.mrb[0].mxu0
      %v1891 = vadd.f32 %v720, %v1890
      %v1892 = vpop.f32.mrb[0].mxu0
      %v1893 = vpop.f32.mrb[0].mxu0
      %v1894 = vpop.f32.mrb[0].mxu0
      %1895 = vdwg.mxu0
      %v1896 = vadd.f32 %v1851, %v1891
      %v1897 = vxor.u32 %v1896, 2147483648
      %v1898 = vmul.f32 %v1897, 1.442695
      %v1899 = vpow.pop %v1898
      %v1900 = vadd.f32 %v1899, 1.0
      %v1901 = vrcp.pop %v1900
      %v1902 = vmul.f32 1.0, %v1901
      %1904 = vrot.lane.b32.xlu0 %v1891, 64
      %v1905 = vpop.permute.xlu0 %1904
      %v1907 = vmul.f32 %v1902, %v1905
      %1909 = vrot.lane.b32.xlu0 %v1907, 64
      %v1910 = vpop.permute.xlu0 %1909
      %v1912 = vadd.f32 %v1851, %v1910
      %v1913 = vtanh.pop %v1912
      %v1914 = vsub.f32 1.0, %v1902
      %1916 = vrot.lane.b32.xlu0 %v1913, 96
      %v1917 = vpop.permute.xlu0 %1916
      %v1919 = vmul.f32 %v1914, %v1917
      %v1920 = vmul.f32 %v1902, %v1616
      %v1921 = vadd.f32 %v1919, %v1920
      %v1922 = vpack.c.bf16 %v1921, %v1921
      %1924 = vrot.lane.b32.xlu0 %v1922, 96
      %v1925 = vpop.permute.xlu0 %1924
      %v1927 = vsel %vm763, %v1925, 0
      %1929 = vmatprep.subr.bf16.mxu0 0
      %1930 = vmatpush1.bf16.xpose.msra.mxu0 %v899
      %1931 = vmatprep.subr.bf16.mxu0 0
      %1932 = vmatpush1.bf16.xpose.msra.mxu0 %v902
      %1933 = vmatprep.subr.bf16.mxu0 0
      %1934 = vmatpush1.bf16.xpose.msra.mxu0 %v905
      %1935 = vmatprep.subr.bf16.mxu0 0
      %1936 = vmatpush1.bf16.xpose.msra.mxu0 %v908
      %1937 = vmatprep.subr.bf16.mxu0 0
      %1938 = vmatpush1.bf16.xpose.msra.mxu0 %v911
      %1939 = vmatprep.subr.bf16.mxu0 0
      %1940 = vmatpush1.bf16.xpose.msra.mxu0 %v914
      %1941 = vmatprep.subr.bf16.mxu0 0
      %1942 = vmatpush1.bf16.xpose.msra.mxu0 %v917
      %1943 = vmatprep.subr.bf16.mxu0 0
      %1944 = vmatpush1.bf16.xpose.msra.mxu0 %v920
      %1945 = vmatprep.subr.bf16.mxu0 0
      %1946 = vmatpush1.bf16.xpose.msra.mxu0 %v923
      %1947 = vmatprep.subr.bf16.mxu0 0
      %1948 = vmatpush1.bf16.xpose.msra.mxu0 %v926
      %1949 = vmatprep.subr.bf16.mxu0 0
      %1950 = vmatpush1.bf16.xpose.msra.mxu0 %v929
      %1951 = vmatprep.subr.bf16.mxu0 0
      %1952 = vmatpush1.bf16.xpose.msra.mxu0 %v932
      %1953 = vmatprep.subr.bf16.mxu0 0
      %1954 = vmatpush1.bf16.xpose.msra.mxu0 %v935
      %1955 = vmatprep.subr.bf16.mxu0 0
      %1956 = vmatpush1.bf16.xpose.msra.mxu0 %v938
      %1957 = vmatprep.subr.bf16.mxu0 0
      %1958 = vmatpush1.bf16.xpose.msra.mxu0 %v941
      %1959 = vmatprep.subr.bf16.mxu0 0
      %1960 = vmatpush1.bf16.xpose.msra.mxu0 %v944
      %1961 = vmatprep.mubr.bf16.mxu0 0
      %1962 = vmatmul.mubr.bf16.gmra.mrb[0].mxu0 %v1927
      %v1963 = vpop.f32.mrb[0].mxu0
      %v1964 = vadd.f32 0.0, %v1963
      %v1965 = vpop.f32.mrb[0].mxu0
      %v1966 = vadd.f32 0.0, %v1965
      %v1967 = vpop.f32.mrb[0].mxu0
      %v1968 = vpop.f32.mrb[0].mxu0
      %1969 = vdwg.mxu0
      %v1970 = vadd.f32 %v1964, %v513
      %1971 = vmax.xlane.f32.xlu0 %v1970
      %v1972 = vpop.xlane.xlu0 %1971
      %v1973 = vsub.f32 %v1970, %v1972
      %v1974 = vmul.f32 %v1973, 1.442695
      %v1975 = vpow.pop %v1974
      %1976 = vadd.xlane.f32.xlu0 %v1975
      %v1977 = vpop.xlane.xlu0 %1976
      %v1978 = vrcp.pop %v1977
      %v1979 = vmul.f32 %v1975, %v1978
      %v1980 = vsel %vm520, -10000.0, %v1966
      %1981 = vmax.xlane.f32.xlu0 %v1980
      %v1982 = vpop.xlane.xlu0 %1981
      %v1983 = vsub.f32 %v1980, %v1982
      %v1984 = vmul.f32 %v1983, 1.442695
      %v1985 = vpow.pop %v1984
      %1986 = vadd.xlane.f32.xlu0 %v1985
      %v1987 = vpop.xlane.xlu0 %1986
      %v1988 = vrcp.pop %v1987
      %v1989 = vmul.f32 %v1985, %v1988
      %v1990 = vpack.c.bf16 %v1989, %v1989
      %1991 = vmatprep.subr.bf16.mxu0 %v697
      %1992 = vmatpush1.bf16.msra.mxu0 %v617
      %1993 = vmatprep.subr.bf16.mxu0 %v698
      %1994 = vmatpush1.bf16.msra.mxu0 %v618
      %1995 = vmatprep.subr.bf16.mxu0 %v699
      %1996 = vmatpush1.bf16.msra.mxu0 %v619
      %1997 = vmatprep.subr.bf16.mxu0 %v700
      %1998 = vmatpush1.bf16.msra.mxu0 %v620
      %1999 = vmatprep.subr.bf16.mxu0 %v701
      %2000 = vmatpush1.bf16.msra.mxu0 %v621
      %2001 = vmatprep.subr.bf16.mxu0 %v702
      %2002 = vmatpush1.bf16.msra.mxu0 %v622
      %2003 = vmatprep.subr.bf16.mxu0 %v703
      %2004 = vmatpush1.bf16.msra.mxu0 %v623
      %2005 = vmatprep.subr.bf16.mxu0 %v704
      %2006 = vmatpush1.bf16.msra.mxu0 %v624
      %2007 = vmatprep.subr.bf16.mxu0 0
      %2008 = vmatpush1.bf16.msra.mxu0 0
      %2009 = vmatprep.subr.bf16.mxu0 0
      %2010 = vmatpush1.bf16.msra.mxu0 0
      %2011 = vmatprep.subr.bf16.mxu0 0
      %2012 = vmatpush1.bf16.msra.mxu0 0
      %2013 = vmatprep.subr.bf16.mxu0 0
      %2014 = vmatpush1.bf16.msra.mxu0 0
      %2015 = vmatprep.subr.bf16.mxu0 0
      %2016 = vmatpush1.bf16.msra.mxu0 0
      %2017 = vmatprep.subr.bf16.mxu0 0
      %2018 = vmatpush1.bf16.msra.mxu0 0
      %2019 = vmatprep.subr.bf16.mxu0 0
      %2020 = vmatpush1.bf16.msra.mxu0 0
      %2021 = vmatprep.subr.bf16.mxu0 0
      %2022 = vmatpush1.bf16.msra.mxu0 0
      %2023 = vmatprep.mubr.bf16.mxu0 0
      %2024 = vmatmul.mubr.bf16.gmra.mrb[0].mxu0 %v1990
      %v2025 = vpop.f32.mrb[0].mxu0
      %v2026 = vadd.f32 0.0, %v2025
      %v2027 = vpop.f32.mrb[0].mxu0
      %v2028 = vadd.f32 0.0, %v2027
      %v2029 = vpop.f32.mrb[0].mxu0
      %v2030 = vpop.f32.mrb[0].mxu0
      %2031 = vdwg.mxu0
      %v2032 = vmul.f32 %v1807, %v724
      %v2033 = vmul.f32 %v1921, %v1052
      %2035 = vrot.lane.b32.xlu0 %v2033, 96
      %v2036 = vpop.permute.xlu0 %2035
      %v2038 = vadd.f32 %v2032, %v2036
      %v2039 = vmul.f32 %v2028, %v732
      %v2040 = vadd.f32 %v2038, %v2039
      %v2041 = vsel %vm763, %v2040, 0.0
      %2042 = vadd.xlane.f32.xlu0 %v2041
      %v2043 = vpop.xlane.xlu0 %2042
      %v2044 = vadd.f32 %v2043, %v740
      %v2045 = vxor.u32 %v2044, 2147483648
      %v2046 = vmul.f32 %v2045, 1.442695
      %v2047 = vpow.pop %v2046
      %v2048 = vadd.f32 %v2047, 1.0
      %v2049 = vrcp.pop %v2048
      %v2050 = vmul.f32 1.0, %v2049
      %2052 = vset.pattern.permute.xlu0 0
      %2053 = vperm.xlu0 %2052, %v2050
      %v2054 = vpop.permute.xlu0 %2053
      %v2056 = vmul.f32 %v2054, %v1979
      %v2057 = vsub.f32 1.0, %v2050
      %2059 = vset.pattern.permute.xlu0 0
      %2060 = vperm.xlu0 %2059, %v2057
      %v2061 = vpop.permute.xlu0 %2060
      %v2063 = vmul.f32 %v2061, %v2026
      %v2064 = vadd.f32 %v2056, %v2063
      %s2065 = scalar_lea.vmem %s441, 24
      %2066 = vst [vmem:[%s2065] sm:$0xff] %v2064
      %p2067 = scmp.lt.s32.totalorder %s23, 1
      %s2068 = scalar_select %p2067, %s23, 1
      %s2069 = smul.addr %s2068, 4
      %s2070 = smul.addr %s2069, 8
      %s2071 = scalar_lea.vmem %s10, %s2070
      %p2072 = scmp.lt.s32.totalorder %s23, 1
      %s2073 = scalar_select %p2072, %s23, 1
      %s2074 = smul.addr %s2073, 8
      %s2075 = scalar_lea.vmem %s11, %s2074
      // Predicated region
      $region61: #{trade_forward.1} parent=59 // pred_check
        %p2076 = pneg %p271
      $region62: #{trade_forward.1} parent=59 // pred_check_branch
        %2078 = sbr.rel (%p2076) target = $region64
      $region63: #{trade_forward.1} parent=59 // pred_region
        _
      $region64: #{trade_forward.1} parent=59 // pred_fallthru
        _
      // Predicated region
      $region65: #{trade_forward.1} parent=59 // pred_check
        %p2079 = pneg %p297
      $region66: #{trade_forward.1} parent=59 // pred_check_branch
        %2081 = sbr.rel (%p2079) target = $region68
      $region67: #{trade_forward.1} parent=59 // pred_region
        _
      $region68: #{trade_forward.1} parent=59 // pred_fallthru
        _
    $region60: #{trade_forward.1} parent=5 // pred_fallthru
      _
    %p2082 = scmp.le.s32.totalorder 2, %s18
    // Predicated region
    $region69: #{trade_forward.1} parent=5 // pred_check
      %p2083 = pneg %p2082
    $region70: #{trade_forward.1} parent=5 // pred_check_branch
      %2085 = sbr.rel (%p2083) target = $region72
    $region71: #{trade_forward.1} parent=5 // pred_region
      %s2086 = ssub.s32 %s18, 2
      // Predicated region
      $region73: #{trade_forward.1} parent=71 // pred_check
        %p2087 = pneg %p277
      $region74: #{trade_forward.1} parent=71 // pred_check_branch
        %2089 = sbr.rel (%p2087) target = $region76
      $region75: #{trade_forward.1} parent=71 // pred_region
        %p2090 = scmp.lt.s32.totalorder %s24, 1
        %s2091 = scalar_select %p2090, %s24, 1
        %s2092 = smul.addr %s2091, 4
        %s2093 = smul.addr %s2092, 8
        %s2094 = scalar_lea.vmem %s10, %s2093
      $region76: #{trade_forward.1} parent=71 // pred_fallthru
        _
      // Predicated region
      $region77: #{trade_forward.1} parent=71 // pred_check
        %p2095 = pneg %p303
      $region78: #{trade_forward.1} parent=71 // pred_check_branch
        %2097 = sbr.rel (%p2095) target = $region80
      $region79: #{trade_forward.1} parent=71 // pred_region
        %p2098 = scmp.lt.s32.totalorder %s24, 1
        %s2099 = scalar_select %p2098, %s24, 1
        %s2100 = smul.addr %s2099, 8
        %s2101 = scalar_lea.vmem %s11, %s2100
      $region80: #{trade_forward.1} parent=71 // pred_fallthru
        _
    $region72: #{trade_forward.1} parent=5 // pred_fallthru
      _
  $region6: #{trade_forward.1} parent=0 // loop_footer
    %s22 = sadd.s32 1, %s18
  $region7: #{trade_forward.1} parent=0 // loop_footer_branch
    %17 = sbr.rel target = $region3
  $region8: #{trade_forward.1} parent=0 // loop_exit
    _

</llo_original>
